<compile_context>
chip_gen: v5e
topology: v5e:2x2
jax: 0.10.0
libtpu: 0.0.40
codegen_flags: <defaults>
</compile_context>

<pallas_src>
import jax
import jax.numpy as jnp
from jax.experimental import pallas as pl
from jax.experimental.pallas import tpu as pltpu

NUM_CLASSES = 10
IN_FEATURES = 3 * 28 * 28          # 2352
H1, H2, H3 = 100, 100, 16          # logical hidden widths (as in the PyTorch module)
PAD = 128                          # lane-dense padded width for hidden/output dims
IN_PAD = 19 * 128                  # 2432: K of the dominant matmul, aligned to 128


def _round_up(n, m):
    return ((n + m - 1) // m) * m


def mlp_kernel(x_ref, w1_ref, b1_ref, w2_ref, b2_ref, w3_ref, b3_ref,
               w4_ref, b4_ref, o_ref):
    # x streams in as f32; cast the tile to bf16 in VMEM so every matmul is a
    # native-rate bf16 MXU op. Accumulation stays f32. The 1/255 scale is
    # already folded into w1.
    x = x_ref[...].astype(jnp.bfloat16)

    h = jnp.dot(x, w1_ref[...], preferred_element_type=jnp.float32) + b1_ref[...]
    h = jnp.maximum(h, 0.0)

    h = jnp.dot(h.astype(jnp.bfloat16), w2_ref[...],
                preferred_element_type=jnp.float32) + b2_ref[...]
    h = jnp.maximum(h, 0.0)

    h = jnp.dot(h.astype(jnp.bfloat16), w3_ref[...],
                preferred_element_type=jnp.float32) + b3_ref[...]
    h = jnp.maximum(h, 0.0)

    o_ref[...] = (jnp.dot(h.astype(jnp.bfloat16), w4_ref[...],
                          preferred_element_type=jnp.float32) + b4_ref[...])


def _choose_tile(batch, tile_b):
    """Pick (tile rows, padded batch) minimizing zero-row padding; force >= 2
    grid steps when the batch allows it so the 'parallel' axis can shard across
    v7x's two TensorCores."""
    n_steps = max(-(-batch // tile_b), 1)
    if n_steps == 1 and batch >= 16:
        n_steps = 2
    tb = _round_up(-(-batch // n_steps), 8)
    return tb, tb * n_steps


def mlp_forward(x_nchw, params, *, tile_b=1024, num_classes=NUM_CLASSES):
    """x_nchw: (B, 3, 28, 28) like the PyTorch module. Returns (B, num_classes) f32."""
    (w1, b1), (w2, b2), (w3, b3), (w4, b4) = params
    B = x_nchw.shape[0]

    # Row-major flatten == torch x.view(B, -1). Stream f32 straight into the
    # kernel (no extra wrapper-side cast pass over HBM); pad K to 2432 and the
    # batch to a multiple of the tile.
    x_flat = x_nchw.reshape(B, -1)
    tb, Bp = _choose_tile(B, tile_b)
    x_flat = jnp.pad(x_flat, ((0, Bp - B), (0, IN_PAD - IN_FEATURES)))
    grid = (Bp // tb,)

    flat_params = (w1, b1, w2, b2, w3, b3, w4, b4)
    weight_bytes = sum(int(a.size) * a.dtype.itemsize for a in flat_params)
    cost = pl.CostEstimate(
        flops=int(2 * Bp * (IN_PAD * PAD + 3 * PAD * PAD)),
        transcendentals=0,
        bytes_accessed=int(Bp * IN_PAD * 4 + weight_bytes + Bp * PAD * 4),
    )

    def run(single_buffer_weights):
        def resident(shape):
            # Whole array as one block, same block index every grid step ->
            # VMEM-resident across the batch loop. Single-buffer it so the
            # saved VMEM goes toward a larger streamed batch tile.
            if single_buffer_weights:
                return pl.BlockSpec(shape, lambda i: (0, 0),
                                    pipeline_mode=pl.Buffered(1))
            return pl.BlockSpec(shape, lambda i: (0, 0))

        in_specs = [pl.BlockSpec((tb, IN_PAD), lambda i: (i, 0))]  # streamed x
        in_specs += [resident(a.shape) for a in flat_params]

        return pl.pallas_call(
            mlp_kernel,
            out_shape=jax.ShapeDtypeStruct((Bp, PAD), jnp.float32),
            grid=grid,
            in_specs=in_specs,
            out_specs=pl.BlockSpec((tb, PAD), lambda i: (i, 0)),
            compiler_params=pltpu.CompilerParams(
                dimension_semantics=("parallel",),
                vmem_limit_bytes=48 * 1024 * 1024,
            ),
            cost_estimate=cost,
        )(x_flat, *flat_params)

    try:
        out = run(single_buffer_weights=True)
    except Exception:
        # Compatibility guard: fall back to default (double-buffered) specs if
        # pipeline_mode=pl.Buffered(1) is rejected by this JAX/Mosaic build.
        out = run(single_buffer_weights=False)

    return out[:B, :num_classes]


def init_params(key):
    """PyTorch nn.Linear-style init, stored transposed (in, out). The 1/255
    input scale is folded into w1; weights are bf16 (native MXU operands),
    biases stay f32. Hidden/output dims padded to 128, input dim to 2432."""
    dims = [(IN_FEATURES, H1), (H1, H2), (H2, H3), (H3, NUM_CLASSES)]
    pads = [(IN_PAD, PAD), (PAD, PAD), (PAD, PAD), (PAD, PAD)]
    params = []
    for i, ((fi, fo), (pi, po)) in enumerate(zip(dims, pads)):
        kw, kb = jax.random.split(jax.random.fold_in(key, i))
        bound = 1.0 / jnp.sqrt(jnp.float32(fi))
        w = jax.random.uniform(kw, (fi, fo), jnp.float32, -bound, bound)
        b = jax.random.uniform(kb, (1, fo), jnp.float32, -bound, bound)
        if i == 0:
            w = w / 255.0                       # fold the x/255 input scaling
        w_pad = jnp.zeros((pi, po), jnp.float32).at[:fi, :fo].set(w)
        b_pad = jnp.zeros((1, po), jnp.float32).at[:, :fo].set(b)
        params.append((w_pad.astype(jnp.bfloat16), b_pad))
    return params


def reference_forward(x_nchw, params, num_classes=NUM_CLASSES):
    """Pure-JAX reference mirroring the kernel numerics (bf16 matmul operands,
    f32 accumulation, 1/255 folded into w1)."""
    B = x_nchw.shape[0]
    (w1, b1), (w2, b2), (w3, b3), (w4, b4) = params
    x = x_nchw.reshape(B, -1)
    x = jnp.pad(x, ((0, 0), (0, IN_PAD - IN_FEATURES))).astype(jnp.bfloat16)
    h = jnp.maximum(jnp.dot(x, w1, preferred_element_type=jnp.float32) + b1, 0.0)
    h = jnp.maximum(jnp.dot(h.astype(jnp.bfloat16), w2,
                            preferred_element_type=jnp.float32) + b2, 0.0)
    h = jnp.maximum(jnp.dot(h.astype(jnp.bfloat16), w3,
                            preferred_element_type=jnp.float32) + b3, 0.0)
    out = jnp.dot(h.astype(jnp.bfloat16), w4,
                  preferred_element_type=jnp.float32) + b4
    return out[:, :num_classes]


if __name__ == "__main__":
    key = jax.random.PRNGKey(0)
    kx, kp = jax.random.split(key)

    # Small batch of "images", NCHW like the PyTorch module expects.
    x = jax.random.uniform(kx, (2, 3, 28, 28), jnp.float32, 0.0, 255.0)
    params = init_params(kp)

    out = jax.block_until_ready(mlp_forward(x, params))
    ref = reference_forward(x, params)

    assert out.shape == (2, NUM_CLASSES)
    assert jnp.allclose(out, ref, atol=5e-3, rtol=5e-3), (
        "max abs diff = %f" % float(jnp.max(jnp.abs(out - ref))))

    print("KERNEL_OK")
</pallas_src>

<mosaic_0001>
module attributes {stable_mosaic.version = 11 : i64} {
  func.func @mlp_kernel(%arg0: i32, %arg1: memref<8x2432xf32, #tpu.memory_space<vmem>>, %arg2: memref<2432x128xbf16, #tpu.memory_space<vmem>>, %arg3: memref<1x128xf32, #tpu.memory_space<vmem>>, %arg4: memref<128x128xbf16, #tpu.memory_space<vmem>>, %arg5: memref<1x128xf32, #tpu.memory_space<vmem>>, %arg6: memref<128x128xbf16, #tpu.memory_space<vmem>>, %arg7: memref<1x128xf32, #tpu.memory_space<vmem>>, %arg8: memref<128x128xbf16, #tpu.memory_space<vmem>>, %arg9: memref<1x128xf32, #tpu.memory_space<vmem>>, %arg10: memref<8x128xf32, #tpu.memory_space<vmem>>) attributes {dimension_semantics = [#tpu.dimension_semantics<parallel>], iteration_bounds = array<i64: 1>, scalar_prefetch = 0 : i64, scratch_operands = 0 : i64, tpu.core_type = #tpu.core_type<tc>, window_params = [{transform_indices = @transform_0, window_bounds = array<i64: 8, 2432>}, {pipeline_mode = #tpu.pipeline_mode<synchronous>, transform_indices = @transform_1, window_bounds = array<i64: 2432, 128>}, {pipeline_mode = #tpu.pipeline_mode<synchronous>, transform_indices = @transform_2, window_bounds = array<i64: 1, 128>}, {pipeline_mode = #tpu.pipeline_mode<synchronous>, transform_indices = @transform_3, window_bounds = array<i64: 128, 128>}, {pipeline_mode = #tpu.pipeline_mode<synchronous>, transform_indices = @transform_4, window_bounds = array<i64: 1, 128>}, {pipeline_mode = #tpu.pipeline_mode<synchronous>, transform_indices = @transform_5, window_bounds = array<i64: 128, 128>}, {pipeline_mode = #tpu.pipeline_mode<synchronous>, transform_indices = @transform_6, window_bounds = array<i64: 1, 128>}, {pipeline_mode = #tpu.pipeline_mode<synchronous>, transform_indices = @transform_7, window_bounds = array<i64: 128, 128>}, {pipeline_mode = #tpu.pipeline_mode<synchronous>, transform_indices = @transform_8, window_bounds = array<i64: 1, 128>}, {transform_indices = @transform_9, window_bounds = array<i64: 8, 128>}]} {
    %c0 = arith.constant 0 : index
    %c0_0 = arith.constant 0 : index
    %0 = vector.load %arg1[%c0, %c0_0] : memref<8x2432xf32, #tpu.memory_space<vmem>>, vector<8x2432xf32>
    %1 = arith.truncf %0 : vector<8x2432xf32> to vector<8x2432xbf16>
    %c0_1 = arith.constant 0 : index
    %c0_2 = arith.constant 0 : index
    %2 = vector.load %arg2[%c0_1, %c0_2] : memref<2432x128xbf16, #tpu.memory_space<vmem>>, vector<2432x128xbf16>
    %cst = arith.constant dense<0.000000e+00> : vector<8x128xf32>
    %3 = tpu.matmul %1, %2, %cst {dimension_numbers = #tpu.dot_dimension_numbers<[1], [0], [0], [1], [0, 0, 1, 1], [], []>} : vector<8x2432xbf16>, vector<2432x128xbf16>, vector<8x128xf32> -> vector<8x128xf32>
    %c0_3 = arith.constant 0 : index
    %c0_4 = arith.constant 0 : index
    %4 = vector.load %arg3[%c0_3, %c0_4] : memref<1x128xf32, #tpu.memory_space<vmem>>, vector<1x128xf32>
    %5 = vector.broadcast %4 : vector<1x128xf32> to vector<8x128xf32>
    %6 = arith.addf %3, %5 : vector<8x128xf32>
    %cst_5 = arith.constant 0.000000e+00 : f32
    %7 = vector.broadcast %cst_5 : f32 to vector<8x128xf32>
    %8 = arith.maximumf %6, %7 : vector<8x128xf32>
    %9 = arith.truncf %8 : vector<8x128xf32> to vector<8x128xbf16>
    %c0_6 = arith.constant 0 : index
    %c0_7 = arith.constant 0 : index
    %10 = vector.load %arg4[%c0_6, %c0_7] : memref<128x128xbf16, #tpu.memory_space<vmem>>, vector<128x128xbf16>
    %cst_8 = arith.constant dense<0.000000e+00> : vector<8x128xf32>
    %11 = tpu.matmul %9, %10, %cst_8 {dimension_numbers = #tpu.dot_dimension_numbers<[1], [0], [0], [1], [0, 0, 1, 1], [], []>} : vector<8x128xbf16>, vector<128x128xbf16>, vector<8x128xf32> -> vector<8x128xf32>
    %c0_9 = arith.constant 0 : index
    %c0_10 = arith.constant 0 : index
    %12 = vector.load %arg5[%c0_9, %c0_10] : memref<1x128xf32, #tpu.memory_space<vmem>>, vector<1x128xf32>
    %13 = vector.broadcast %12 : vector<1x128xf32> to vector<8x128xf32>
    %14 = arith.addf %11, %13 : vector<8x128xf32>
    %cst_11 = arith.constant 0.000000e+00 : f32
    %15 = vector.broadcast %cst_11 : f32 to vector<8x128xf32>
    %16 = arith.maximumf %14, %15 : vector<8x128xf32>
    %17 = arith.truncf %16 : vector<8x128xf32> to vector<8x128xbf16>
    %c0_12 = arith.constant 0 : index
    %c0_13 = arith.constant 0 : index
    %18 = vector.load %arg6[%c0_12, %c0_13] : memref<128x128xbf16, #tpu.memory_space<vmem>>, vector<128x128xbf16>
    %cst_14 = arith.constant dense<0.000000e+00> : vector<8x128xf32>
    %19 = tpu.matmul %17, %18, %cst_14 {dimension_numbers = #tpu.dot_dimension_numbers<[1], [0], [0], [1], [0, 0, 1, 1], [], []>} : vector<8x128xbf16>, vector<128x128xbf16>, vector<8x128xf32> -> vector<8x128xf32>
    %c0_15 = arith.constant 0 : index
    %c0_16 = arith.constant 0 : index
    %20 = vector.load %arg7[%c0_15, %c0_16] : memref<1x128xf32, #tpu.memory_space<vmem>>, vector<1x128xf32>
    %21 = vector.broadcast %20 : vector<1x128xf32> to vector<8x128xf32>
    %22 = arith.addf %19, %21 : vector<8x128xf32>
    %cst_17 = arith.constant 0.000000e+00 : f32
    %23 = vector.broadcast %cst_17 : f32 to vector<8x128xf32>
    %24 = arith.maximumf %22, %23 : vector<8x128xf32>
    %25 = arith.truncf %24 : vector<8x128xf32> to vector<8x128xbf16>
    %c0_18 = arith.constant 0 : index
    %c0_19 = arith.constant 0 : index
    %26 = vector.load %arg8[%c0_18, %c0_19] : memref<128x128xbf16, #tpu.memory_space<vmem>>, vector<128x128xbf16>
    %cst_20 = arith.constant dense<0.000000e+00> : vector<8x128xf32>
    %27 = tpu.matmul %25, %26, %cst_20 {dimension_numbers = #tpu.dot_dimension_numbers<[1], [0], [0], [1], [0, 0, 1, 1], [], []>} : vector<8x128xbf16>, vector<128x128xbf16>, vector<8x128xf32> -> vector<8x128xf32>
    %c0_21 = arith.constant 0 : index
    %c0_22 = arith.constant 0 : index
    %28 = vector.load %arg9[%c0_21, %c0_22] : memref<1x128xf32, #tpu.memory_space<vmem>>, vector<1x128xf32>
    %29 = vector.broadcast %28 : vector<1x128xf32> to vector<8x128xf32>
    %30 = arith.addf %27, %29 : vector<8x128xf32>
    %c0_23 = arith.constant 0 : index
    %c0_24 = arith.constant 0 : index
    %31 = vector.load %arg10[%c0_23, %c0_24] : memref<8x128xf32, #tpu.memory_space<vmem>>, vector<8x128xf32>
    tpu.vector_store %arg10[%c0_23, %c0_24], %30 {strides = array<i32>} : memref<8x128xf32, #tpu.memory_space<vmem>>, vector<8x128xf32>,
    return
  }
  func.func @transform_0(%arg0: i32) -> (i32, i32) {
    %c0_i32 = arith.constant 0 : i32
    %c0_i32_0 = arith.constant 0 : i32
    return %arg0, %c0_i32 : i32, i32
  }
  func.func @transform_1(%arg0: i32) -> (i32, i32) {
    %c0_i32 = arith.constant 0 : i32
    %c0_i32_0 = arith.constant 0 : i32
    %c0_i32_1 = arith.constant 0 : i32
    return %c0_i32, %c0_i32_0 : i32, i32
  }
  func.func @transform_2(%arg0: i32) -> (i32, i32) {
    %c0_i32 = arith.constant 0 : i32
    %c0_i32_0 = arith.constant 0 : i32
    %c0_i32_1 = arith.constant 0 : i32
    return %c0_i32, %c0_i32_0 : i32, i32
  }
  func.func @transform_3(%arg0: i32) -> (i32, i32) {
    %c0_i32 = arith.constant 0 : i32
    %c0_i32_0 = arith.constant 0 : i32
    %c0_i32_1 = arith.constant 0 : i32
    return %c0_i32, %c0_i32_0 : i32, i32
  }
  func.func @transform_4(%arg0: i32) -> (i32, i32) {
    %c0_i32 = arith.constant 0 : i32
    %c0_i32_0 = arith.constant 0 : i32
    %c0_i32_1 = arith.constant 0 : i32
    return %c0_i32, %c0_i32_0 : i32, i32
  }
  func.func @transform_5(%arg0: i32) -> (i32, i32) {
    %c0_i32 = arith.constant 0 : i32
    %c0_i32_0 = arith.constant 0 : i32
    %c0_i32_1 = arith.constant 0 : i32
    return %c0_i32, %c0_i32_0 : i32, i32
  }
  func.func @transform_6(%arg0: i32) -> (i32, i32) {
    %c0_i32 = arith.constant 0 : i32
    %c0_i32_0 = arith.constant 0 : i32
    %c0_i32_1 = arith.constant 0 : i32
    return %c0_i32, %c0_i32_0 : i32, i32
  }
  func.func @transform_7(%arg0: i32) -> (i32, i32) {
    %c0_i32 = arith.constant 0 : i32
    %c0_i32_0 = arith.constant 0 : i32
    %c0_i32_1 = arith.constant 0 : i32
    return %c0_i32, %c0_i32_0 : i32, i32
  }
  func.func @transform_8(%arg0: i32) -> (i32, i32) {
    %c0_i32 = arith.constant 0 : i32
    %c0_i32_0 = arith.constant 0 : i32
    %c0_i32_1 = arith.constant 0 : i32
    return %c0_i32, %c0_i32_0 : i32, i32
  }
  func.func @transform_9(%arg0: i32) -> (i32, i32) {
    %c0_i32 = arith.constant 0 : i32
    %c0_i32_0 = arith.constant 0 : i32
    return %arg0, %c0_i32 : i32, i32
  }
}

module attributes {stable_mosaic.version = 11 : i64} {
  func.func @mlp_kernel(%arg0: i32, %arg1: memref<8x2432xf32, #tpu.memory_space<vmem>>, %arg2: memref<2432x128xbf16, #tpu.memory_space<vmem>>, %arg3: memref<1x128xf32, #tpu.memory_space<vmem>>, %arg4: memref<128x128xbf16, #tpu.memory_space<vmem>>, %arg5: memref<1x128xf32, #tpu.memory_space<vmem>>, %arg6: memref<128x128xbf16, #tpu.memory_space<vmem>>, %arg7: memref<1x128xf32, #tpu.memory_space<vmem>>, %arg8: memref<128x128xbf16, #tpu.memory_space<vmem>>, %arg9: memref<1x128xf32, #tpu.memory_space<vmem>>, %arg10: memref<8x128xf32, #tpu.memory_space<vmem>>) attributes {dimension_semantics = [#tpu.dimension_semantics<parallel>], iteration_bounds = array<i64: 1>, scalar_prefetch = 0 : i64, scratch_operands = 0 : i64, tpu.core_type = #tpu.core_type<tc>, window_params = [{transform_indices = @transform_0, window_bounds = array<i64: 8, 2432>}, {pipeline_mode = #tpu.pipeline_mode<synchronous>, transform_indices = @transform_1, window_bounds = array<i64: 2432, 128>}, {pipeline_mode = #tpu.pipeline_mode<synchronous>, transform_indices = @transform_2, window_bounds = array<i64: 1, 128>}, {pipeline_mode = #tpu.pipeline_mode<synchronous>, transform_indices = @transform_3, window_bounds = array<i64: 128, 128>}, {pipeline_mode = #tpu.pipeline_mode<synchronous>, transform_indices = @transform_4, window_bounds = array<i64: 1, 128>}, {pipeline_mode = #tpu.pipeline_mode<synchronous>, transform_indices = @transform_5, window_bounds = array<i64: 128, 128>}, {pipeline_mode = #tpu.pipeline_mode<synchronous>, transform_indices = @transform_6, window_bounds = array<i64: 1, 128>}, {pipeline_mode = #tpu.pipeline_mode<synchronous>, transform_indices = @transform_7, window_bounds = array<i64: 128, 128>}, {pipeline_mode = #tpu.pipeline_mode<synchronous>, transform_indices = @transform_8, window_bounds = array<i64: 1, 128>}, {transform_indices = @transform_9, window_bounds = array<i64: 8, 128>}]} {
    %c0 = arith.constant 0 : index
    %c0_0 = arith.constant 0 : index
    %0 = vector.load %arg1[%c0, %c0_0] : memref<8x2432xf32, #tpu.memory_space<vmem>>, vector<8x2432xf32>
    %1 = arith.truncf %0 : vector<8x2432xf32> to vector<8x2432xbf16>
    %c0_1 = arith.constant 0 : index
    %c0_2 = arith.constant 0 : index
    %2 = vector.load %arg2[%c0_1, %c0_2] : memref<2432x128xbf16, #tpu.memory_space<vmem>>, vector<2432x128xbf16>
    %cst = arith.constant dense<0.000000e+00> : vector<8x128xf32>
    %3 = tpu.matmul %1, %2, %cst {dimension_numbers = #tpu.dot_dimension_numbers<[1], [0], [0], [1], [0, 0, 1, 1], [], []>} : vector<8x2432xbf16>, vector<2432x128xbf16>, vector<8x128xf32> -> vector<8x128xf32>
    %c0_3 = arith.constant 0 : index
    %c0_4 = arith.constant 0 : index
    %4 = vector.load %arg3[%c0_3, %c0_4] : memref<1x128xf32, #tpu.memory_space<vmem>>, vector<1x128xf32>
    %5 = vector.broadcast %4 : vector<1x128xf32> to vector<8x128xf32>
    %6 = arith.addf %3, %5 : vector<8x128xf32>
    %cst_5 = arith.constant 0.000000e+00 : f32
    %7 = vector.broadcast %cst_5 : f32 to vector<8x128xf32>
    %8 = arith.maximumf %6, %7 : vector<8x128xf32>
    %9 = arith.truncf %8 : vector<8x128xf32> to vector<8x128xbf16>
    %c0_6 = arith.constant 0 : index
    %c0_7 = arith.constant 0 : index
    %10 = vector.load %arg4[%c0_6, %c0_7] : memref<128x128xbf16, #tpu.memory_space<vmem>>, vector<128x128xbf16>
    %cst_8 = arith.constant dense<0.000000e+00> : vector<8x128xf32>
    %11 = tpu.matmul %9, %10, %cst_8 {dimension_numbers = #tpu.dot_dimension_numbers<[1], [0], [0], [1], [0, 0, 1, 1], [], []>} : vector<8x128xbf16>, vector<128x128xbf16>, vector<8x128xf32> -> vector<8x128xf32>
    %c0_9 = arith.constant 0 : index
    %c0_10 = arith.constant 0 : index
    %12 = vector.load %arg5[%c0_9, %c0_10] : memref<1x128xf32, #tpu.memory_space<vmem>>, vector<1x128xf32>
    %13 = vector.broadcast %12 : vector<1x128xf32> to vector<8x128xf32>
    %14 = arith.addf %11, %13 : vector<8x128xf32>
    %cst_11 = arith.constant 0.000000e+00 : f32
    %15 = vector.broadcast %cst_11 : f32 to vector<8x128xf32>
    %16 = arith.maximumf %14, %15 : vector<8x128xf32>
    %17 = arith.truncf %16 : vector<8x128xf32> to vector<8x128xbf16>
    %c0_12 = arith.constant 0 : index
    %c0_13 = arith.constant 0 : index
    %18 = vector.load %arg6[%c0_12, %c0_13] : memref<128x128xbf16, #tpu.memory_space<vmem>>, vector<128x128xbf16>
    %cst_14 = arith.constant dense<0.000000e+00> : vector<8x128xf32>
    %19 = tpu.matmul %17, %18, %cst_14 {dimension_numbers = #tpu.dot_dimension_numbers<[1], [0], [0], [1], [0, 0, 1, 1], [], []>} : vector<8x128xbf16>, vector<128x128xbf16>, vector<8x128xf32> -> vector<8x128xf32>
    %c0_15 = arith.constant 0 : index
    %c0_16 = arith.constant 0 : index
    %20 = vector.load %arg7[%c0_15, %c0_16] : memref<1x128xf32, #tpu.memory_space<vmem>>, vector<1x128xf32>
    %21 = vector.broadcast %20 : vector<1x128xf32> to vector<8x128xf32>
    %22 = arith.addf %19, %21 : vector<8x128xf32>
    %cst_17 = arith.constant 0.000000e+00 : f32
    %23 = vector.broadcast %cst_17 : f32 to vector<8x128xf32>
    %24 = arith.maximumf %22, %23 : vector<8x128xf32>
    %25 = arith.truncf %24 : vector<8x128xf32> to vector<8x128xbf16>
    %c0_18 = arith.constant 0 : index
    %c0_19 = arith.constant 0 : index
    %26 = vector.load %arg8[%c0_18, %c0_19] : memref<128x128xbf16, #tpu.memory_space<vmem>>, vector<128x128xbf16>
    %cst_20 = arith.constant dense<0.000000e+00> : vector<8x128xf32>
    %27 = tpu.matmul %25, %26, %cst_20 {dimension_numbers = #tpu.dot_dimension_numbers<[1], [0], [0], [1], [0, 0, 1, 1], [], []>} : vector<8x128xbf16>, vector<128x128xbf16>, vector<8x128xf32> -> vector<8x128xf32>
    %c0_21 = arith.constant 0 : index
    %c0_22 = arith.constant 0 : index
    %28 = vector.load %arg9[%c0_21, %c0_22] : memref<1x128xf32, #tpu.memory_space<vmem>>, vector<1x128xf32>
    %29 = vector.broadcast %28 : vector<1x128xf32> to vector<8x128xf32>
    %30 = arith.addf %27, %29 : vector<8x128xf32>
    %c0_23 = arith.constant 0 : index
    %c0_24 = arith.constant 0 : index
    %31 = vector.load %arg10[%c0_23, %c0_24] : memref<8x128xf32, #tpu.memory_space<vmem>>, vector<8x128xf32>
    tpu.vector_store %arg10[%c0_23, %c0_24], %30 {strides = array<i32>} : memref<8x128xf32, #tpu.memory_space<vmem>>, vector<8x128xf32>,
    return
  }
  func.func @transform_0(%arg0: i32) -> (i32, i32) {
    %c0_i32 = arith.constant 0 : i32
    %c0_i32_0 = arith.constant 0 : i32
    return %arg0, %c0_i32 : i32, i32
  }
  func.func @transform_1(%arg0: i32) -> (i32, i32) {
    %c0_i32 = arith.constant 0 : i32
    %c0_i32_0 = arith.constant 0 : i32
    %c0_i32_1 = arith.constant 0 : i32
    return %c0_i32, %c0_i32_0 : i32, i32
  }
  func.func @transform_2(%arg0: i32) -> (i32, i32) {
    %c0_i32 = arith.constant 0 : i32
    %c0_i32_0 = arith.constant 0 : i32
    %c0_i32_1 = arith.constant 0 : i32
    return %c0_i32, %c0_i32_0 : i32, i32
  }
  func.func @transform_3(%arg0: i32) -> (i32, i32) {
    %c0_i32 = arith.constant 0 : i32
    %c0_i32_0 = arith.constant 0 : i32
    %c0_i32_1 = arith.constant 0 : i32
    return %c0_i32, %c0_i32_0 : i32, i32
  }
  func.func @transform_4(%arg0: i32) -> (i32, i32) {
    %c0_i32 = arith.constant 0 : i32
    %c0_i32_0 = arith.constant 0 : i32
    %c0_i32_1 = arith.constant 0 : i32
    return %c0_i32, %c0_i32_0 : i32, i32
  }
  func.func @transform_5(%arg0: i32) -> (i32, i32) {
    %c0_i32 = arith.constant 0 : i32
    %c0_i32_0 = arith.constant 0 : i32
    %c0_i32_1 = arith.constant 0 : i32
    return %c0_i32, %c0_i32_0 : i32, i32
  }
  func.func @transform_6(%arg0: i32) -> (i32, i32) {
    %c0_i32 = arith.constant 0 : i32
    %c0_i32_0 = arith.constant 0 : i32
    %c0_i32_1 = arith.constant 0 : i32
    return %c0_i32, %c0_i32_0 : i32, i32
  }
  func.func @transform_7(%arg0: i32) -> (i32, i32) {
    %c0_i32 = arith.constant 0 : i32
    %c0_i32_0 = arith.constant 0 : i32
    %c0_i32_1 = arith.constant 0 : i32
    return %c0_i32, %c0_i32_0 : i32, i32
  }
  func.func @transform_8(%arg0: i32) -> (i32, i32) {
    %c0_i32 = arith.constant 0 : i32
    %c0_i32_0 = arith.constant 0 : i32
    %c0_i32_1 = arith.constant 0 : i32
    return %c0_i32, %c0_i32_0 : i32, i32
  }
  func.func @transform_9(%arg0: i32) -> (i32, i32) {
    %c0_i32 = arith.constant 0 : i32
    %c0_i32_0 = arith.constant 0 : i32
    return %arg0, %c0_i32 : i32, i32
  }
}

</mosaic_0001>

<llo_original>
// kernel: tpu_custom_call.1
$region0: #{tpu_custom_call.1}
  #allocation0 [shape = 'u32[]', space=smem, size = 0x4, offset = 0x4, fixed_abs, tag = 'smem constant byte address 0x4 - core index']
  #allocation1 [shape = 'u32[72,128]{1,0:T(1,128)}', space=vmem, size = 0x9000, scoped, tag = 'internal scratch']
  %s0 = inlined_call_operand.hbm [shape: f32[8,2432], index: 0, kind: input, shape index: {}]
  %s1 = inlined_call_operand.hbm [shape: bf16[2432,128], index: 1, kind: input, shape index: {}]
  %s2 = inlined_call_operand.vmem [shape: f32[1,128], index: 2, kind: input, shape index: {}]
  %s3 = inlined_call_operand.hbm [shape: bf16[128,128], index: 3, kind: input, shape index: {}]
  %s4 = inlined_call_operand.vmem [shape: f32[1,128], index: 4, kind: input, shape index: {}]
  %s5 = inlined_call_operand.hbm [shape: bf16[128,128], index: 5, kind: input, shape index: {}]
  %s6 = inlined_call_operand.vmem [shape: f32[1,128], index: 6, kind: input, shape index: {}]
  %s7 = inlined_call_operand.hbm [shape: bf16[128,128], index: 7, kind: input, shape index: {}]
  %s8 = inlined_call_operand.vmem [shape: f32[1,128], index: 8, kind: input, shape index: {}]
  %s9 = inlined_call_operand.hbm [shape: f32[8,128], index: 9, kind: output, shape index: {}]
  %s10 = sld [smem:[#allocation0]]
  $region66: #{tpu_custom_call.1} parent=0
    _
  %s12 = ssub.s32 1, %s10
  %s13 = scalar_select 0, %s12, %s10
  $region1: #{tpu_custom_call.1} parent=0
    #allocation2 [shape = 'u8[77824]{0}', space=vmem, size = 0x13000, scoped, tag = 'input window, operand 0, single buffered']
    #allocation3 [shape = 's32[1]{0}', space=sflag, size = 0x4, scoped, tag = 'scoped memory for tpu_custom_call.1']
    #allocation4 [shape = 's32[1]{0}', space=sflag, size = 0x4, scoped, tag = 'scoped memory for tpu_custom_call.1']
    #allocation5 [shape = 'u8[622592]{0}', space=vmem, size = 0x98000, scoped, tag = 'input window, operand 1, single buffered']
    #allocation6 [shape = 's32[1]{0}', space=sflag, size = 0x4, scoped, tag = 'scoped memory for tpu_custom_call.1']
    #allocation7 [shape = 'u8[32768]{0}', space=vmem, size = 0x8000, scoped, tag = 'input window, operand 3, single buffered']
    #allocation8 [shape = 'u8[32768]{0}', space=vmem, size = 0x8000, scoped, tag = 'input window, operand 5, single buffered']
    #allocation9 [shape = 's32[1]{0}', space=sflag, size = 0x4, scoped, tag = 'scoped memory for tpu_custom_call.1']
    #allocation10 [shape = 'u8[32768]{0}', space=vmem, size = 0x8000, scoped, tag = 'input window, operand 7, single buffered']
    #allocation11 [shape = 'u8[4096]{0}', space=vmem, size = 0x1000, scoped, tag = 'output window, operand 0, single buffered']
    %14 = vsyncpa [#allocation3], 0
    %15 = vsyncpa [#allocation6], 0
    %16 = vsyncpa [#allocation9], 0
    %17 = vsyncpa [#allocation4], 0
    // Predicated region
    $region2: #{tpu_custom_call.1} parent=1 // pred_check
      _
    $region3: #{tpu_custom_call.1} parent=1 // pred_check_branch
      %19 = sbr.rel (0) target = $region5
    $region4: #{tpu_custom_call.1} parent=1 // pred_region
      %21 = vsyncadd [#allocation3], 0
      %s23 = sshll.u32 %s0, 4
      %s24 = int_to_ptr.hbm [resolvable:$true] %s23
      %s25 = sshll.u32 [#allocation2], 4
      %s26 = int_to_ptr.vmem [resolvable:$true] %s25
      %28 = dma.hbm_to_vmem [thread:$0]  %s24, 2432, %s26, [#allocation3]
    $region5: #{tpu_custom_call.1} parent=1 // pred_fallthru
      _
    // Predicated region
    $region6: #{tpu_custom_call.1} parent=1 // pred_check
      _
    $region7: #{tpu_custom_call.1} parent=1 // pred_check_branch
      %30 = sbr.rel (0) target = $region9
    $region8: #{tpu_custom_call.1} parent=1 // pred_region
      %32 = vsyncadd [#allocation6], 0
      %s33 = sshll.u32 %s1, 4
      %s34 = int_to_ptr.hbm [resolvable:$true] %s33
      %s35 = sshll.u32 [#allocation5], 4
      %s36 = int_to_ptr.vmem [resolvable:$true] %s35
      %41 = dma.hbm_to_vmem [thread:$0]  %s34, 19456, %s36, [#allocation6], 64, 64, 4
    $region9: #{tpu_custom_call.1} parent=1 // pred_fallthru
      _
    // Predicated region
    $region10: #{tpu_custom_call.1} parent=1 // pred_check
      _
    $region11: #{tpu_custom_call.1} parent=1 // pred_check_branch
      %43 = sbr.rel (0) target = $region13
    $region12: #{tpu_custom_call.1} parent=1 // pred_region
      _
    $region13: #{tpu_custom_call.1} parent=1 // pred_fallthru
      _
    // Predicated region
    $region14: #{tpu_custom_call.1} parent=1 // pred_check
      _
    $region15: #{tpu_custom_call.1} parent=1 // pred_check_branch
      %45 = sbr.rel (0) target = $region17
    $region16: #{tpu_custom_call.1} parent=1 // pred_region
      %47 = vsyncadd [#allocation6], 0
      %s48 = sshll.u32 %s3, 4
      %s49 = int_to_ptr.hbm [resolvable:$true] %s48
      %s50 = sshll.u32 [#allocation7], 4
      %s51 = int_to_ptr.vmem [resolvable:$true] %s50
      %56 = dma.hbm_to_vmem [thread:$0]  %s49, 1024, %s51, [#allocation6], 64, 64, 4
    $region17: #{tpu_custom_call.1} parent=1 // pred_fallthru
      _
    // Predicated region
    $region18: #{tpu_custom_call.1} parent=1 // pred_check
      _
    $region19: #{tpu_custom_call.1} parent=1 // pred_check_branch
      %58 = sbr.rel (0) target = $region21
    $region20: #{tpu_custom_call.1} parent=1 // pred_region
      _
    $region21: #{tpu_custom_call.1} parent=1 // pred_fallthru
      _
    // Predicated region
    $region22: #{tpu_custom_call.1} parent=1 // pred_check
      _
    $region23: #{tpu_custom_call.1} parent=1 // pred_check_branch
      %60 = sbr.rel (0) target = $region25
    $region24: #{tpu_custom_call.1} parent=1 // pred_region
      %62 = vsyncadd [#allocation9], 0
      %s63 = sshll.u32 %s5, 4
      %s64 = int_to_ptr.hbm [resolvable:$true] %s63
      %s65 = sshll.u32 [#allocation8], 4
      %s66 = int_to_ptr.vmem [resolvable:$true] %s65
      %71 = dma.hbm_to_vmem [thread:$0]  %s64, 1024, %s66, [#allocation9], 64, 64, 4
    $region25: #{tpu_custom_call.1} parent=1 // pred_fallthru
      _
    // Predicated region
    $region26: #{tpu_custom_call.1} parent=1 // pred_check
      _
    $region27: #{tpu_custom_call.1} parent=1 // pred_check_branch
      %73 = sbr.rel (0) target = $region29
    $region28: #{tpu_custom_call.1} parent=1 // pred_region
      _
    $region29: #{tpu_custom_call.1} parent=1 // pred_fallthru
      _
    // Predicated region
    $region30: #{tpu_custom_call.1} parent=1 // pred_check
      _
    $region31: #{tpu_custom_call.1} parent=1 // pred_check_branch
      %75 = sbr.rel (0) target = $region33
    $region32: #{tpu_custom_call.1} parent=1 // pred_region
      %77 = vsyncadd [#allocation9], 0
      %s78 = sshll.u32 %s7, 4
      %s79 = int_to_ptr.hbm [resolvable:$true] %s78
      %s80 = sshll.u32 [#allocation10], 4
      %s81 = int_to_ptr.vmem [resolvable:$true] %s80
      %86 = dma.hbm_to_vmem [thread:$0]  %s79, 1024, %s81, [#allocation9], 64, 64, 4
    $region33: #{tpu_custom_call.1} parent=1 // pred_fallthru
      _
    // Predicated region
    $region34: #{tpu_custom_call.1} parent=1 // pred_check
      _
    $region35: #{tpu_custom_call.1} parent=1 // pred_check_branch
      %88 = sbr.rel (0) target = $region37
    $region36: #{tpu_custom_call.1} parent=1 // pred_region
      _
    $region37: #{tpu_custom_call.1} parent=1 // pred_fallthru
      _
    // Predicated region
    $region38: #{tpu_custom_call.1} parent=1 // pred_check
      _
    $region39: #{tpu_custom_call.1} parent=1 // pred_check_branch
      %90 = sbr.rel (0) target = $region41
    $region40: #{tpu_custom_call.1} parent=1 // pred_region
      %92 = dma.done [#allocation3], 2432
    $region41: #{tpu_custom_call.1} parent=1 // pred_fallthru
      _
    // Predicated region
    $region42: #{tpu_custom_call.1} parent=1 // pred_check
      _
    $region43: #{tpu_custom_call.1} parent=1 // pred_check_branch
      %94 = sbr.rel (0) target = $region45
    $region44: #{tpu_custom_call.1} parent=1 // pred_region
      %96 = dma.done [#allocation6], 19456
    $region45: #{tpu_custom_call.1} parent=1 // pred_fallthru
      _
    // Predicated region
    $region46: #{tpu_custom_call.1} parent=1 // pred_check
      _
    $region47: #{tpu_custom_call.1} parent=1 // pred_check_branch
      %98 = sbr.rel (0) target = $region49
    $region48: #{tpu_custom_call.1} parent=1 // pred_region
      %100 = dma.done [#allocation6], 1024
    $region49: #{tpu_custom_call.1} parent=1 // pred_fallthru
      _
    // Predicated region
    $region50: #{tpu_custom_call.1} parent=1 // pred_check
      _
    $region51: #{tpu_custom_call.1} parent=1 // pred_check_branch
      %102 = sbr.rel (0) target = $region53
    $region52: #{tpu_custom_call.1} parent=1 // pred_region
      %104 = dma.done [#allocation9], 1024
    $region53: #{tpu_custom_call.1} parent=1 // pred_fallthru
      _
    // Predicated region
    $region54: #{tpu_custom_call.1} parent=1 // pred_check
      _
    $region55: #{tpu_custom_call.1} parent=1 // pred_check_branch
      %106 = sbr.rel (0) target = $region57
    $region56: #{tpu_custom_call.1} parent=1 // pred_region
      %108 = dma.done [#allocation9], 1024
    $region57: #{tpu_custom_call.1} parent=1 // pred_fallthru
      _
    %v109 = vld [vmem:[#allocation2] sm:$0xff]
    %v110 = vld [vmem:[#allocation2 + $0x8] sm:$0xff]
    %v111 = vld [vmem:[#allocation2 + $0x10] sm:$0xff]
    %v112 = vld [vmem:[#allocation2 + $0x18] sm:$0xff]
    %v113 = vld [vmem:[#allocation2 + $0x20] sm:$0xff]
    %v114 = vld [vmem:[#allocation2 + $0x28] sm:$0xff]
    %v115 = vld [vmem:[#allocation2 + $0x30] sm:$0xff]
    %v116 = vld [vmem:[#allocation2 + $0x38] sm:$0xff]
    %v117 = vld [vmem:[#allocation2 + $0x40] sm:$0xff]
    %v118 = vld [vmem:[#allocation2 + $0x48] sm:$0xff]
    %v119 = vld [vmem:[#allocation2 + $0x50] sm:$0xff]
    %v120 = vld [vmem:[#allocation2 + $0x58] sm:$0xff]
    %v121 = vld [vmem:[#allocation2 + $0x60] sm:$0xff]
    %v122 = vld [vmem:[#allocation2 + $0x68] sm:$0xff]
    %v123 = vld [vmem:[#allocation2 + $0x70] sm:$0xff]
    %v124 = vld [vmem:[#allocation2 + $0x78] sm:$0xff]
    %v125 = vld [vmem:[#allocation2 + $0x80] sm:$0xff]
    %v126 = vld [vmem:[#allocation2 + $0x88] sm:$0xff]
    %v127 = vld [vmem:[#allocation2 + $0x90] sm:$0xff]
    %v128 = vpack.c.bf16 %v109, %v109
    %v129 = vpack.c.bf16 %v110, %v110
    %v130 = vpack.c.bf16 %v111, %v111
    %v131 = vpack.c.bf16 %v112, %v112
    %v132 = vpack.c.bf16 %v113, %v113
    %v133 = vpack.c.bf16 %v114, %v114
    %v134 = vpack.c.bf16 %v115, %v115
    %v135 = vpack.c.bf16 %v116, %v116
    %v136 = vpack.c.bf16 %v117, %v117
    %v137 = vpack.c.bf16 %v118, %v118
    %v138 = vpack.c.bf16 %v119, %v119
    %v139 = vpack.c.bf16 %v120, %v120
    %v140 = vpack.c.bf16 %v121, %v121
    %v141 = vpack.c.bf16 %v122, %v122
    %v142 = vpack.c.bf16 %v123, %v123
    %v143 = vpack.c.bf16 %v124, %v124
    %v144 = vpack.c.bf16 %v125, %v125
    %v145 = vpack.c.bf16 %v126, %v126
    %v146 = vpack.c.bf16 %v127, %v127
    %v147 = vld [vmem:[#allocation5] sm:$0xf]
    %v148 = vld [vmem:[#allocation5 + $0x4] sm:$0xf]
    %v149 = vld [vmem:[#allocation5 + $0x8] sm:$0xf]
    %v150 = vld [vmem:[#allocation5 + $0xc] sm:$0xf]
    %v151 = vld [vmem:[#allocation5 + $0x10] sm:$0xf]
    %v152 = vld [vmem:[#allocation5 + $0x14] sm:$0xf]
    %v153 = vld [vmem:[#allocation5 + $0x18] sm:$0xf]
    %v154 = vld [vmem:[#allocation5 + $0x1c] sm:$0xf]
    %v155 = vld [vmem:[#allocation5 + $0x20] sm:$0xf]
    %v156 = vld [vmem:[#allocation5 + $0x24] sm:$0xf]
    %v157 = vld [vmem:[#allocation5 + $0x28] sm:$0xf]
    %v158 = vld [vmem:[#allocation5 + $0x2c] sm:$0xf]
    %v159 = vld [vmem:[#allocation5 + $0x30] sm:$0xf]
    %v160 = vld [vmem:[#allocation5 + $0x34] sm:$0xf]
    %v161 = vld [vmem:[#allocation5 + $0x38] sm:$0xf]
    %v162 = vld [vmem:[#allocation5 + $0x3c] sm:$0xf]
    %v163 = vld [vmem:[#allocation5 + $0x40] sm:$0xf]
    %v164 = vld [vmem:[#allocation5 + $0x44] sm:$0xf]
    %v165 = vld [vmem:[#allocation5 + $0x48] sm:$0xf]
    %v166 = vld [vmem:[#allocation5 + $0x4c] sm:$0xf]
    %v167 = vld [vmem:[#allocation5 + $0x50] sm:$0xf]
    %v168 = vld [vmem:[#allocation5 + $0x54] sm:$0xf]
    %v169 = vld [vmem:[#allocation5 + $0x58] sm:$0xf]
    %v170 = vld [vmem:[#allocation5 + $0x5c] sm:$0xf]
    %v171 = vld [vmem:[#allocation5 + $0x60] sm:$0xf]
    %v172 = vld [vmem:[#allocation5 + $0x64] sm:$0xf]
    %v173 = vld [vmem:[#allocation5 + $0x68] sm:$0xf]
    %v174 = vld [vmem:[#allocation5 + $0x6c] sm:$0xf]
    %v175 = vld [vmem:[#allocation5 + $0x70] sm:$0xf]
    %v176 = vld [vmem:[#allocation5 + $0x74] sm:$0xf]
    %v177 = vld [vmem:[#allocation5 + $0x78] sm:$0xf]
    %v178 = vld [vmem:[#allocation5 + $0x7c] sm:$0xf]
    %v179 = vld [vmem:[#allocation5 + $0x80] sm:$0xf]
    %v180 = vld [vmem:[#allocation5 + $0x84] sm:$0xf]
    %v181 = vld [vmem:[#allocation5 + $0x88] sm:$0xf]
    %v182 = vld [vmem:[#allocation5 + $0x8c] sm:$0xf]
    %v183 = vld [vmem:[#allocation5 + $0x90] sm:$0xf]
    %v184 = vld [vmem:[#allocation5 + $0x94] sm:$0xf]
    %v185 = vld [vmem:[#allocation5 + $0x98] sm:$0xf]
    %v186 = vld [vmem:[#allocation5 + $0x9c] sm:$0xf]
    %v187 = vld [vmem:[#allocation5 + $0xa0] sm:$0xf]
    %v188 = vld [vmem:[#allocation5 + $0xa4] sm:$0xf]
    %v189 = vld [vmem:[#allocation5 + $0xa8] sm:$0xf]
    %v190 = vld [vmem:[#allocation5 + $0xac] sm:$0xf]
    %v191 = vld [vmem:[#allocation5 + $0xb0] sm:$0xf]
    %v192 = vld [vmem:[#allocation5 + $0xb4] sm:$0xf]
    %v193 = vld [vmem:[#allocation5 + $0xb8] sm:$0xf]
    %v194 = vld [vmem:[#allocation5 + $0xbc] sm:$0xf]
    %v195 = vld [vmem:[#allocation5 + $0xc0] sm:$0xf]
    %v196 = vld [vmem:[#allocation5 + $0xc4] sm:$0xf]
    %v197 = vld [vmem:[#allocation5 + $0xc8] sm:$0xf]
    %v198 = vld [vmem:[#allocation5 + $0xcc] sm:$0xf]
    %v199 = vld [vmem:[#allocation5 + $0xd0] sm:$0xf]
    %v200 = vld [vmem:[#allocation5 + $0xd4] sm:$0xf]
    %v201 = vld [vmem:[#allocation5 + $0xd8] sm:$0xf]
    %v202 = vld [vmem:[#allocation5 + $0xdc] sm:$0xf]
    %v203 = vld [vmem:[#allocation5 + $0xe0] sm:$0xf]
    %v204 = vld [vmem:[#allocation5 + $0xe4] sm:$0xf]
    %v205 = vld [vmem:[#allocation5 + $0xe8] sm:$0xf]
    %v206 = vld [vmem:[#allocation5 + $0xec] sm:$0xf]
    %v207 = vld [vmem:[#allocation5 + $0xf0] sm:$0xf]
    %v208 = vld [vmem:[#allocation5 + $0xf4] sm:$0xf]
    %v209 = vld [vmem:[#allocation5 + $0xf8] sm:$0xf]
    %v210 = vld [vmem:[#allocation5 + $0xfc] sm:$0xf]
    %v211 = vld [vmem:[#allocation5 + $0x100] sm:$0xf]
    %v212 = vld [vmem:[#allocation5 + $0x104] sm:$0xf]
    %v213 = vld [vmem:[#allocation5 + $0x108] sm:$0xf]
    %v214 = vld [vmem:[#allocation5 + $0x10c] sm:$0xf]
    %v215 = vld [vmem:[#allocation5 + $0x110] sm:$0xf]
    %v216 = vld [vmem:[#allocation5 + $0x114] sm:$0xf]
    %v217 = vld [vmem:[#allocation5 + $0x118] sm:$0xf]
    %v218 = vld [vmem:[#allocation5 + $0x11c] sm:$0xf]
    %v219 = vld [vmem:[#allocation5 + $0x120] sm:$0xf]
    %v220 = vld [vmem:[#allocation5 + $0x124] sm:$0xf]
    %v221 = vld [vmem:[#allocation5 + $0x128] sm:$0xf]
    %v222 = vld [vmem:[#allocation5 + $0x12c] sm:$0xf]
    %v223 = vld [vmem:[#allocation5 + $0x130] sm:$0xf]
    %v224 = vld [vmem:[#allocation5 + $0x134] sm:$0xf]
    %v225 = vld [vmem:[#allocation5 + $0x138] sm:$0xf]
    %v226 = vld [vmem:[#allocation5 + $0x13c] sm:$0xf]
    %v227 = vld [vmem:[#allocation5 + $0x140] sm:$0xf]
    %v228 = vld [vmem:[#allocation5 + $0x144] sm:$0xf]
    %v229 = vld [vmem:[#allocation5 + $0x148] sm:$0xf]
    %v230 = vld [vmem:[#allocation5 + $0x14c] sm:$0xf]
    %v231 = vld [vmem:[#allocation5 + $0x150] sm:$0xf]
    %v232 = vld [vmem:[#allocation5 + $0x154] sm:$0xf]
    %v233 = vld [vmem:[#allocation5 + $0x158] sm:$0xf]
    %v234 = vld [vmem:[#allocation5 + $0x15c] sm:$0xf]
    %v235 = vld [vmem:[#allocation5 + $0x160] sm:$0xf]
    %v236 = vld [vmem:[#allocation5 + $0x164] sm:$0xf]
    %v237 = vld [vmem:[#allocation5 + $0x168] sm:$0xf]
    %v238 = vld [vmem:[#allocation5 + $0x16c] sm:$0xf]
    %v239 = vld [vmem:[#allocation5 + $0x170] sm:$0xf]
    %v240 = vld [vmem:[#allocation5 + $0x174] sm:$0xf]
    %v241 = vld [vmem:[#allocation5 + $0x178] sm:$0xf]
    %v242 = vld [vmem:[#allocation5 + $0x17c] sm:$0xf]
    %v243 = vld [vmem:[#allocation5 + $0x180] sm:$0xf]
    %v244 = vld [vmem:[#allocation5 + $0x184] sm:$0xf]
    %v245 = vld [vmem:[#allocation5 + $0x188] sm:$0xf]
    %v246 = vld [vmem:[#allocation5 + $0x18c] sm:$0xf]
    %v247 = vld [vmem:[#allocation5 + $0x190] sm:$0xf]
    %v248 = vld [vmem:[#allocation5 + $0x194] sm:$0xf]
    %v249 = vld [vmem:[#allocation5 + $0x198] sm:$0xf]
    %v250 = vld [vmem:[#allocation5 + $0x19c] sm:$0xf]
    %v251 = vld [vmem:[#allocation5 + $0x1a0] sm:$0xf]
    %v252 = vld [vmem:[#allocation5 + $0x1a4] sm:$0xf]
    %v253 = vld [vmem:[#allocation5 + $0x1a8] sm:$0xf]
    %v254 = vld [vmem:[#allocation5 + $0x1ac] sm:$0xf]
    %v255 = vld [vmem:[#allocation5 + $0x1b0] sm:$0xf]
    %v256 = vld [vmem:[#allocation5 + $0x1b4] sm:$0xf]
    %v257 = vld [vmem:[#allocation5 + $0x1b8] sm:$0xf]
    %v258 = vld [vmem:[#allocation5 + $0x1bc] sm:$0xf]
    %v259 = vld [vmem:[#allocation5 + $0x1c0] sm:$0xf]
    %v260 = vld [vmem:[#allocation5 + $0x1c4] sm:$0xf]
    %v261 = vld [vmem:[#allocation5 + $0x1c8] sm:$0xf]
    %v262 = vld [vmem:[#allocation5 + $0x1cc] sm:$0xf]
    %v263 = vld [vmem:[#allocation5 + $0x1d0] sm:$0xf]
    %v264 = vld [vmem:[#allocation5 + $0x1d4] sm:$0xf]
    %v265 = vld [vmem:[#allocation5 + $0x1d8] sm:$0xf]
    %v266 = vld [vmem:[#allocation5 + $0x1dc] sm:$0xf]
    %v267 = vld [vmem:[#allocation5 + $0x1e0] sm:$0xf]
    %v268 = vld [vmem:[#allocation5 + $0x1e4] sm:$0xf]
    %v269 = vld [vmem:[#allocation5 + $0x1e8] sm:$0xf]
    %v270 = vld [vmem:[#allocation5 + $0x1ec] sm:$0xf]
    %v271 = vld [vmem:[#allocation5 + $0x1f0] sm:$0xf]
    %v272 = vld [vmem:[#allocation5 + $0x1f4] sm:$0xf]
    %v273 = vld [vmem:[#allocation5 + $0x1f8] sm:$0xf]
    %v274 = vld [vmem:[#allocation5 + $0x1fc] sm:$0xf]
    %v275 = vld [vmem:[#allocation5 + $0x200] sm:$0xf]
    %v276 = vld [vmem:[#allocation5 + $0x204] sm:$0xf]
    %v277 = vld [vmem:[#allocation5 + $0x208] sm:$0xf]
    %v278 = vld [vmem:[#allocation5 + $0x20c] sm:$0xf]
    %v279 = vld [vmem:[#allocation5 + $0x210] sm:$0xf]
    %v280 = vld [vmem:[#allocation5 + $0x214] sm:$0xf]
    %v281 = vld [vmem:[#allocation5 + $0x218] sm:$0xf]
    %v282 = vld [vmem:[#allocation5 + $0x21c] sm:$0xf]
    %v283 = vld [vmem:[#allocation5 + $0x220] sm:$0xf]
    %v284 = vld [vmem:[#allocation5 + $0x224] sm:$0xf]
    %v285 = vld [vmem:[#allocation5 + $0x228] sm:$0xf]
    %v286 = vld [vmem:[#allocation5 + $0x22c] sm:$0xf]
    %v287 = vld [vmem:[#allocation5 + $0x230] sm:$0xf]
    %v288 = vld [vmem:[#allocation5 + $0x234] sm:$0xf]
    %v289 = vld [vmem:[#allocation5 + $0x238] sm:$0xf]
    %v290 = vld [vmem:[#allocation5 + $0x23c] sm:$0xf]
    %v291 = vld [vmem:[#allocation5 + $0x240] sm:$0xf]
    %v292 = vld [vmem:[#allocation5 + $0x244] sm:$0xf]
    %v293 = vld [vmem:[#allocation5 + $0x248] sm:$0xf]
    %v294 = vld [vmem:[#allocation5 + $0x24c] sm:$0xf]
    %v295 = vld [vmem:[#allocation5 + $0x250] sm:$0xf]
    %v296 = vld [vmem:[#allocation5 + $0x254] sm:$0xf]
    %v297 = vld [vmem:[#allocation5 + $0x258] sm:$0xf]
    %v298 = vld [vmem:[#allocation5 + $0x25c] sm:$0xf]
    %v299 = vld [vmem:[#allocation5 + $0x260] sm:$0xf]
    %v300 = vld [vmem:[#allocation5 + $0x264] sm:$0xf]
    %v301 = vld [vmem:[#allocation5 + $0x268] sm:$0xf]
    %v302 = vld [vmem:[#allocation5 + $0x26c] sm:$0xf]
    %v303 = vld [vmem:[#allocation5 + $0x270] sm:$0xf]
    %v304 = vld [vmem:[#allocation5 + $0x274] sm:$0xf]
    %v305 = vld [vmem:[#allocation5 + $0x278] sm:$0xf]
    %v306 = vld [vmem:[#allocation5 + $0x27c] sm:$0xf]
    %v307 = vld [vmem:[#allocation5 + $0x280] sm:$0xf]
    %v308 = vld [vmem:[#allocation5 + $0x284] sm:$0xf]
    %v309 = vld [vmem:[#allocation5 + $0x288] sm:$0xf]
    %v310 = vld [vmem:[#allocation5 + $0x28c] sm:$0xf]
    %v311 = vld [vmem:[#allocation5 + $0x290] sm:$0xf]
    %v312 = vld [vmem:[#allocation5 + $0x294] sm:$0xf]
    %v313 = vld [vmem:[#allocation5 + $0x298] sm:$0xf]
    %v314 = vld [vmem:[#allocation5 + $0x29c] sm:$0xf]
    %v315 = vld [vmem:[#allocation5 + $0x2a0] sm:$0xf]
    %v316 = vld [vmem:[#allocation5 + $0x2a4] sm:$0xf]
    %v317 = vld [vmem:[#allocation5 + $0x2a8] sm:$0xf]
    %v318 = vld [vmem:[#allocation5 + $0x2ac] sm:$0xf]
    %v319 = vld [vmem:[#allocation5 + $0x2b0] sm:$0xf]
    %v320 = vld [vmem:[#allocation5 + $0x2b4] sm:$0xf]
    %v321 = vld [vmem:[#allocation5 + $0x2b8] sm:$0xf]
    %v322 = vld [vmem:[#allocation5 + $0x2bc] sm:$0xf]
    %v323 = vld [vmem:[#allocation5 + $0x2c0] sm:$0xf]
    %v324 = vld [vmem:[#allocation5 + $0x2c4] sm:$0xf]
    %v325 = vld [vmem:[#allocation5 + $0x2c8] sm:$0xf]
    %v326 = vld [vmem:[#allocation5 + $0x2cc] sm:$0xf]
    %v327 = vld [vmem:[#allocation5 + $0x2d0] sm:$0xf]
    %v328 = vld [vmem:[#allocation5 + $0x2d4] sm:$0xf]
    %v329 = vld [vmem:[#allocation5 + $0x2d8] sm:$0xf]
    %v330 = vld [vmem:[#allocation5 + $0x2dc] sm:$0xf]
    %v331 = vld [vmem:[#allocation5 + $0x2e0] sm:$0xf]
    %v332 = vld [vmem:[#allocation5 + $0x2e4] sm:$0xf]
    %v333 = vld [vmem:[#allocation5 + $0x2e8] sm:$0xf]
    %v334 = vld [vmem:[#allocation5 + $0x2ec] sm:$0xf]
    %v335 = vld [vmem:[#allocation5 + $0x2f0] sm:$0xf]
    %v336 = vld [vmem:[#allocation5 + $0x2f4] sm:$0xf]
    %v337 = vld [vmem:[#allocation5 + $0x2f8] sm:$0xf]
    %v338 = vld [vmem:[#allocation5 + $0x2fc] sm:$0xf]
    %v339 = vld [vmem:[#allocation5 + $0x300] sm:$0xf]
    %v340 = vld [vmem:[#allocation5 + $0x304] sm:$0xf]
    %v341 = vld [vmem:[#allocation5 + $0x308] sm:$0xf]
    %v342 = vld [vmem:[#allocation5 + $0x30c] sm:$0xf]
    %v343 = vld [vmem:[#allocation5 + $0x310] sm:$0xf]
    %v344 = vld [vmem:[#allocation5 + $0x314] sm:$0xf]
    %v345 = vld [vmem:[#allocation5 + $0x318] sm:$0xf]
    %v346 = vld [vmem:[#allocation5 + $0x31c] sm:$0xf]
    %v347 = vld [vmem:[#allocation5 + $0x320] sm:$0xf]
    %v348 = vld [vmem:[#allocation5 + $0x324] sm:$0xf]
    %v349 = vld [vmem:[#allocation5 + $0x328] sm:$0xf]
    %v350 = vld [vmem:[#allocation5 + $0x32c] sm:$0xf]
    %v351 = vld [vmem:[#allocation5 + $0x330] sm:$0xf]
    %v352 = vld [vmem:[#allocation5 + $0x334] sm:$0xf]
    %v353 = vld [vmem:[#allocation5 + $0x338] sm:$0xf]
    %v354 = vld [vmem:[#allocation5 + $0x33c] sm:$0xf]
    %v355 = vld [vmem:[#allocation5 + $0x340] sm:$0xf]
    %v356 = vld [vmem:[#allocation5 + $0x344] sm:$0xf]
    %v357 = vld [vmem:[#allocation5 + $0x348] sm:$0xf]
    %v358 = vld [vmem:[#allocation5 + $0x34c] sm:$0xf]
    %v359 = vld [vmem:[#allocation5 + $0x350] sm:$0xf]
    %v360 = vld [vmem:[#allocation5 + $0x354] sm:$0xf]
    %v361 = vld [vmem:[#allocation5 + $0x358] sm:$0xf]
    %v362 = vld [vmem:[#allocation5 + $0x35c] sm:$0xf]
    %v363 = vld [vmem:[#allocation5 + $0x360] sm:$0xf]
    %v364 = vld [vmem:[#allocation5 + $0x364] sm:$0xf]
    %v365 = vld [vmem:[#allocation5 + $0x368] sm:$0xf]
    %v366 = vld [vmem:[#allocation5 + $0x36c] sm:$0xf]
    %v367 = vld [vmem:[#allocation5 + $0x370] sm:$0xf]
    %v368 = vld [vmem:[#allocation5 + $0x374] sm:$0xf]
    %v369 = vld [vmem:[#allocation5 + $0x378] sm:$0xf]
    %v370 = vld [vmem:[#allocation5 + $0x37c] sm:$0xf]
    %v371 = vld [vmem:[#allocation5 + $0x380] sm:$0xf]
    %v372 = vld [vmem:[#allocation5 + $0x384] sm:$0xf]
    %v373 = vld [vmem:[#allocation5 + $0x388] sm:$0xf]
    %v374 = vld [vmem:[#allocation5 + $0x38c] sm:$0xf]
    %v375 = vld [vmem:[#allocation5 + $0x390] sm:$0xf]
    %v376 = vld [vmem:[#allocation5 + $0x394] sm:$0xf]
    %v377 = vld [vmem:[#allocation5 + $0x398] sm:$0xf]
    %v378 = vld [vmem:[#allocation5 + $0x39c] sm:$0xf]
    %v379 = vld [vmem:[#allocation5 + $0x3a0] sm:$0xf]
    %v380 = vld [vmem:[#allocation5 + $0x3a4] sm:$0xf]
    %v381 = vld [vmem:[#allocation5 + $0x3a8] sm:$0xf]
    %v382 = vld [vmem:[#allocation5 + $0x3ac] sm:$0xf]
    %v383 = vld [vmem:[#allocation5 + $0x3b0] sm:$0xf]
    %v384 = vld [vmem:[#allocation5 + $0x3b4] sm:$0xf]
    %v385 = vld [vmem:[#allocation5 + $0x3b8] sm:$0xf]
    %v386 = vld [vmem:[#allocation5 + $0x3bc] sm:$0xf]
    %v387 = vld [vmem:[#allocation5 + $0x3c0] sm:$0xf]
    %v388 = vld [vmem:[#allocation5 + $0x3c4] sm:$0xf]
    %v389 = vld [vmem:[#allocation5 + $0x3c8] sm:$0xf]
    %v390 = vld [vmem:[#allocation5 + $0x3cc] sm:$0xf]
    %v391 = vld [vmem:[#allocation5 + $0x3d0] sm:$0xf]
    %v392 = vld [vmem:[#allocation5 + $0x3d4] sm:$0xf]
    %v393 = vld [vmem:[#allocation5 + $0x3d8] sm:$0xf]
    %v394 = vld [vmem:[#allocation5 + $0x3dc] sm:$0xf]
    %v395 = vld [vmem:[#allocation5 + $0x3e0] sm:$0xf]
    %v396 = vld [vmem:[#allocation5 + $0x3e4] sm:$0xf]
    %v397 = vld [vmem:[#allocation5 + $0x3e8] sm:$0xf]
    %v398 = vld [vmem:[#allocation5 + $0x3ec] sm:$0xf]
    %v399 = vld [vmem:[#allocation5 + $0x3f0] sm:$0xf]
    %v400 = vld [vmem:[#allocation5 + $0x3f4] sm:$0xf]
    %v401 = vld [vmem:[#allocation5 + $0x3f8] sm:$0xf]
    %v402 = vld [vmem:[#allocation5 + $0x3fc] sm:$0xf]
    %v403 = vld [vmem:[#allocation5 + $0x400] sm:$0xf]
    %v404 = vld [vmem:[#allocation5 + $0x404] sm:$0xf]
    %v405 = vld [vmem:[#allocation5 + $0x408] sm:$0xf]
    %v406 = vld [vmem:[#allocation5 + $0x40c] sm:$0xf]
    %v407 = vld [vmem:[#allocation5 + $0x410] sm:$0xf]
    %v408 = vld [vmem:[#allocation5 + $0x414] sm:$0xf]
    %v409 = vld [vmem:[#allocation5 + $0x418] sm:$0xf]
    %v410 = vld [vmem:[#allocation5 + $0x41c] sm:$0xf]
    %v411 = vld [vmem:[#allocation5 + $0x420] sm:$0xf]
    %v412 = vld [vmem:[#allocation5 + $0x424] sm:$0xf]
    %v413 = vld [vmem:[#allocation5 + $0x428] sm:$0xf]
    %v414 = vld [vmem:[#allocation5 + $0x42c] sm:$0xf]
    %v415 = vld [vmem:[#allocation5 + $0x430] sm:$0xf]
    %v416 = vld [vmem:[#allocation5 + $0x434] sm:$0xf]
    %v417 = vld [vmem:[#allocation5 + $0x438] sm:$0xf]
    %v418 = vld [vmem:[#allocation5 + $0x43c] sm:$0xf]
    %v419 = vld [vmem:[#allocation5 + $0x440] sm:$0xf]
    %v420 = vld [vmem:[#allocation5 + $0x444] sm:$0xf]
    %v421 = vld [vmem:[#allocation5 + $0x448] sm:$0xf]
    %v422 = vld [vmem:[#allocation5 + $0x44c] sm:$0xf]
    %v423 = vld [vmem:[#allocation5 + $0x450] sm:$0xf]
    %v424 = vld [vmem:[#allocation5 + $0x454] sm:$0xf]
    %v425 = vld [vmem:[#allocation5 + $0x458] sm:$0xf]
    %v426 = vld [vmem:[#allocation5 + $0x45c] sm:$0xf]
    %v427 = vld [vmem:[#allocation5 + $0x460] sm:$0xf]
    %v428 = vld [vmem:[#allocation5 + $0x464] sm:$0xf]
    %v429 = vld [vmem:[#allocation5 + $0x468] sm:$0xf]
    %v430 = vld [vmem:[#allocation5 + $0x46c] sm:$0xf]
    %v431 = vld [vmem:[#allocation5 + $0x470] sm:$0xf]
    %v432 = vld [vmem:[#allocation5 + $0x474] sm:$0xf]
    %v433 = vld [vmem:[#allocation5 + $0x478] sm:$0xf]
    %v434 = vld [vmem:[#allocation5 + $0x47c] sm:$0xf]
    %v435 = vld [vmem:[#allocation5 + $0x480] sm:$0xf]
    %v436 = vld [vmem:[#allocation5 + $0x484] sm:$0xf]
    %v437 = vld [vmem:[#allocation5 + $0x488] sm:$0xf]
    %v438 = vld [vmem:[#allocation5 + $0x48c] sm:$0xf]
    %v439 = vld [vmem:[#allocation5 + $0x490] sm:$0xf]
    %v440 = vld [vmem:[#allocation5 + $0x494] sm:$0xf]
    %v441 = vld [vmem:[#allocation5 + $0x498] sm:$0xf]
    %v442 = vld [vmem:[#allocation5 + $0x49c] sm:$0xf]
    %v443 = vld [vmem:[#allocation5 + $0x4a0] sm:$0xf]
    %v444 = vld [vmem:[#allocation5 + $0x4a4] sm:$0xf]
    %v445 = vld [vmem:[#allocation5 + $0x4a8] sm:$0xf]
    %v446 = vld [vmem:[#allocation5 + $0x4ac] sm:$0xf]
    %v447 = vld [vmem:[#allocation5 + $0x4b0] sm:$0xf]
    %v448 = vld [vmem:[#allocation5 + $0x4b4] sm:$0xf]
    %v449 = vld [vmem:[#allocation5 + $0x4b8] sm:$0xf]
    %v450 = vld [vmem:[#allocation5 + $0x4bc] sm:$0xf]
    %v451 = vld [vmem:[%s2] sm:$0x1]
    %v453 = vperm.slane %v451, 0
    %v759 = vunpack.c.l.b16 %v147
    %v760 = vunpack.c.l.b16 %v148
    %v761 = vunpack.c.l.b16 %v149
    %v762 = vunpack.c.l.b16 %v150
    %v763 = vunpack.c.l.b16 %v151
    %v764 = vunpack.c.l.b16 %v152
    %v765 = vunpack.c.l.b16 %v153
    %v766 = vunpack.c.l.b16 %v154
    %v767 = vunpack.c.l.b16 %v155
    %v768 = vunpack.c.l.b16 %v156
    %v769 = vunpack.c.l.b16 %v157
    %v770 = vunpack.c.l.b16 %v158
    %v771 = vunpack.c.l.b16 %v159
    %v772 = vunpack.c.l.b16 %v160
    %v773 = vunpack.c.l.b16 %v161
    %v774 = vunpack.c.l.b16 %v162
    %v775 = vunpack.c.l.b16 %v163
    %v776 = vunpack.c.l.b16 %v164
    %v777 = vunpack.c.l.b16 %v165
    %v778 = vunpack.c.l.b16 %v166
    %v779 = vunpack.c.l.b16 %v167
    %v780 = vunpack.c.l.b16 %v168
    %v781 = vunpack.c.l.b16 %v169
    %v782 = vunpack.c.l.b16 %v170
    %v783 = vunpack.c.l.b16 %v171
    %v784 = vunpack.c.l.b16 %v172
    %v785 = vunpack.c.l.b16 %v173
    %v786 = vunpack.c.l.b16 %v174
    %v787 = vunpack.c.l.b16 %v175
    %v788 = vunpack.c.l.b16 %v176
    %v789 = vunpack.c.l.b16 %v177
    %v790 = vunpack.c.l.b16 %v178
    %v791 = vunpack.c.l.b16 %v179
    %v792 = vunpack.c.l.b16 %v180
    %v793 = vunpack.c.l.b16 %v181
    %v794 = vunpack.c.l.b16 %v182
    %v795 = vunpack.c.l.b16 %v183
    %v796 = vunpack.c.l.b16 %v184
    %v797 = vunpack.c.l.b16 %v185
    %v798 = vunpack.c.l.b16 %v186
    %v799 = vunpack.c.l.b16 %v187
    %v800 = vunpack.c.l.b16 %v188
    %v801 = vunpack.c.l.b16 %v189
    %v802 = vunpack.c.l.b16 %v190
    %v803 = vunpack.c.l.b16 %v191
    %v804 = vunpack.c.l.b16 %v192
    %v805 = vunpack.c.l.b16 %v193
    %v806 = vunpack.c.l.b16 %v194
    %v807 = vunpack.c.l.b16 %v195
    %v808 = vunpack.c.l.b16 %v196
    %v809 = vunpack.c.l.b16 %v197
    %v810 = vunpack.c.l.b16 %v198
    %v811 = vunpack.c.l.b16 %v199
    %v812 = vunpack.c.l.b16 %v200
    %v813 = vunpack.c.l.b16 %v201
    %v814 = vunpack.c.l.b16 %v202
    %v815 = vunpack.c.l.b16 %v203
    %v816 = vunpack.c.l.b16 %v204
    %v817 = vunpack.c.l.b16 %v205
    %v818 = vunpack.c.l.b16 %v206
    %v819 = vunpack.c.l.b16 %v207
    %v820 = vunpack.c.l.b16 %v208
    %v821 = vunpack.c.l.b16 %v209
    %v822 = vunpack.c.l.b16 %v210
    %v823 = vunpack.c.l.b16 %v211
    %v824 = vunpack.c.l.b16 %v212
    %v825 = vunpack.c.l.b16 %v213
    %v826 = vunpack.c.l.b16 %v214
    %v827 = vunpack.c.l.b16 %v215
    %v828 = vunpack.c.l.b16 %v216
    %v829 = vunpack.c.l.b16 %v217
    %v830 = vunpack.c.l.b16 %v218
    %v831 = vunpack.c.l.b16 %v219
    %v832 = vunpack.c.l.b16 %v220
    %v833 = vunpack.c.l.b16 %v221
    %v834 = vunpack.c.l.b16 %v222
    %v835 = vunpack.c.l.b16 %v223
    %v836 = vunpack.c.l.b16 %v224
    %v837 = vunpack.c.l.b16 %v225
    %v838 = vunpack.c.l.b16 %v226
    %v839 = vunpack.c.l.b16 %v227
    %v840 = vunpack.c.l.b16 %v228
    %v841 = vunpack.c.l.b16 %v229
    %v842 = vunpack.c.l.b16 %v230
    %v843 = vunpack.c.l.b16 %v231
    %v844 = vunpack.c.l.b16 %v232
    %v845 = vunpack.c.l.b16 %v233
    %v846 = vunpack.c.l.b16 %v234
    %v847 = vunpack.c.l.b16 %v235
    %v848 = vunpack.c.l.b16 %v236
    %v849 = vunpack.c.l.b16 %v237
    %v850 = vunpack.c.l.b16 %v238
    %v851 = vunpack.c.l.b16 %v239
    %v852 = vunpack.c.l.b16 %v240
    %v853 = vunpack.c.l.b16 %v241
    %v854 = vunpack.c.l.b16 %v242
    %v855 = vunpack.c.l.b16 %v243
    %v856 = vunpack.c.l.b16 %v244
    %v857 = vunpack.c.l.b16 %v245
    %v858 = vunpack.c.l.b16 %v246
    %v859 = vunpack.c.l.b16 %v247
    %v860 = vunpack.c.l.b16 %v248
    %v861 = vunpack.c.l.b16 %v249
    %v862 = vunpack.c.l.b16 %v250
    %v863 = vunpack.c.l.b16 %v251
    %v864 = vunpack.c.l.b16 %v252
    %v865 = vunpack.c.l.b16 %v253
    %v866 = vunpack.c.l.b16 %v254
    %v867 = vunpack.c.l.b16 %v255
    %v868 = vunpack.c.l.b16 %v256
    %v869 = vunpack.c.l.b16 %v257
    %v870 = vunpack.c.l.b16 %v258
    %v871 = vunpack.c.l.b16 %v259
    %v872 = vunpack.c.l.b16 %v260
    %v873 = vunpack.c.l.b16 %v261
    %v874 = vunpack.c.l.b16 %v262
    %v875 = vunpack.c.l.b16 %v263
    %v876 = vunpack.c.l.b16 %v264
    %v877 = vunpack.c.l.b16 %v265
    %v878 = vunpack.c.l.b16 %v266
    %v879 = vunpack.c.l.b16 %v267
    %v880 = vunpack.c.l.b16 %v268
    %v881 = vunpack.c.l.b16 %v269
    %v882 = vunpack.c.l.b16 %v270
    %v883 = vunpack.c.l.b16 %v271
    %v884 = vunpack.c.l.b16 %v272
    %v885 = vunpack.c.l.b16 %v273
    %v886 = vunpack.c.l.b16 %v274
    %v887 = vunpack.c.l.b16 %v275
    %v888 = vunpack.c.l.b16 %v276
    %v889 = vunpack.c.l.b16 %v277
    %v890 = vunpack.c.l.b16 %v278
    %v891 = vunpack.c.l.b16 %v279
    %v892 = vunpack.c.l.b16 %v280
    %v893 = vunpack.c.l.b16 %v281
    %v894 = vunpack.c.l.b16 %v282
    %v895 = vunpack.c.l.b16 %v283
    %v896 = vunpack.c.l.b16 %v284
    %v897 = vunpack.c.l.b16 %v285
    %v898 = vunpack.c.l.b16 %v286
    %v899 = vunpack.c.l.b16 %v287
    %v900 = vunpack.c.l.b16 %v288
    %v901 = vunpack.c.l.b16 %v289
    %v902 = vunpack.c.l.b16 %v290
    %v903 = vunpack.c.l.b16 %v291
    %v904 = vunpack.c.l.b16 %v292
    %v905 = vunpack.c.l.b16 %v293
    %v906 = vunpack.c.l.b16 %v294
    %v907 = vunpack.c.l.b16 %v295
    %v908 = vunpack.c.l.b16 %v296
    %v909 = vunpack.c.l.b16 %v297
    %v910 = vunpack.c.l.b16 %v298
    %v911 = vunpack.c.l.b16 %v299
    %v912 = vunpack.c.l.b16 %v300
    %v913 = vunpack.c.l.b16 %v301
    %v914 = vunpack.c.l.b16 %v302
    %v915 = vunpack.c.l.b16 %v303
    %v916 = vunpack.c.l.b16 %v304
    %v917 = vunpack.c.l.b16 %v305
    %v918 = vunpack.c.l.b16 %v306
    %v919 = vunpack.c.l.b16 %v307
    %v920 = vunpack.c.l.b16 %v308
    %v921 = vunpack.c.l.b16 %v309
    %v922 = vunpack.c.l.b16 %v310
    %v923 = vunpack.c.l.b16 %v311
    %v924 = vunpack.c.l.b16 %v312
    %v925 = vunpack.c.l.b16 %v313
    %v926 = vunpack.c.l.b16 %v314
    %v927 = vunpack.c.l.b16 %v315
    %v928 = vunpack.c.l.b16 %v316
    %v929 = vunpack.c.l.b16 %v317
    %v930 = vunpack.c.l.b16 %v318
    %v931 = vunpack.c.l.b16 %v319
    %v932 = vunpack.c.l.b16 %v320
    %v933 = vunpack.c.l.b16 %v321
    %v934 = vunpack.c.l.b16 %v322
    %v935 = vunpack.c.l.b16 %v323
    %v936 = vunpack.c.l.b16 %v324
    %v937 = vunpack.c.l.b16 %v325
    %v938 = vunpack.c.l.b16 %v326
    %v939 = vunpack.c.l.b16 %v327
    %v940 = vunpack.c.l.b16 %v328
    %v941 = vunpack.c.l.b16 %v329
    %v942 = vunpack.c.l.b16 %v330
    %v943 = vunpack.c.l.b16 %v331
    %v944 = vunpack.c.l.b16 %v332
    %v945 = vunpack.c.l.b16 %v333
    %v946 = vunpack.c.l.b16 %v334
    %v947 = vunpack.c.l.b16 %v335
    %v948 = vunpack.c.l.b16 %v336
    %v949 = vunpack.c.l.b16 %v337
    %v950 = vunpack.c.l.b16 %v338
    %v951 = vunpack.c.l.b16 %v339
    %v952 = vunpack.c.l.b16 %v340
    %v953 = vunpack.c.l.b16 %v341
    %v954 = vunpack.c.l.b16 %v342
    %v955 = vunpack.c.l.b16 %v343
    %v956 = vunpack.c.l.b16 %v344
    %v957 = vunpack.c.l.b16 %v345
    %v958 = vunpack.c.l.b16 %v346
    %v959 = vunpack.c.l.b16 %v347
    %v960 = vunpack.c.l.b16 %v348
    %v961 = vunpack.c.l.b16 %v349
    %v962 = vunpack.c.l.b16 %v350
    %v963 = vunpack.c.l.b16 %v351
    %v964 = vunpack.c.l.b16 %v352
    %v965 = vunpack.c.l.b16 %v353
    %v966 = vunpack.c.l.b16 %v354
    %v967 = vunpack.c.l.b16 %v355
    %v968 = vunpack.c.l.b16 %v356
    %v969 = vunpack.c.l.b16 %v357
    %v970 = vunpack.c.l.b16 %v358
    %v971 = vunpack.c.l.b16 %v359
    %v972 = vunpack.c.l.b16 %v360
    %v973 = vunpack.c.l.b16 %v361
    %v974 = vunpack.c.l.b16 %v362
    %v975 = vunpack.c.l.b16 %v363
    %v976 = vunpack.c.l.b16 %v364
    %v977 = vunpack.c.l.b16 %v365
    %v978 = vunpack.c.l.b16 %v366
    %v979 = vunpack.c.l.b16 %v367
    %v980 = vunpack.c.l.b16 %v368
    %v981 = vunpack.c.l.b16 %v369
    %v982 = vunpack.c.l.b16 %v370
    %v983 = vunpack.c.l.b16 %v371
    %v984 = vunpack.c.l.b16 %v372
    %v985 = vunpack.c.l.b16 %v373
    %v986 = vunpack.c.l.b16 %v374
    %v987 = vunpack.c.l.b16 %v375
    %v988 = vunpack.c.l.b16 %v376
    %v989 = vunpack.c.l.b16 %v377
    %v990 = vunpack.c.l.b16 %v378
    %v991 = vunpack.c.l.b16 %v379
    %v992 = vunpack.c.l.b16 %v380
    %v993 = vunpack.c.l.b16 %v381
    %v994 = vunpack.c.l.b16 %v382
    %v995 = vunpack.c.l.b16 %v383
    %v996 = vunpack.c.l.b16 %v384
    %v997 = vunpack.c.l.b16 %v385
    %v998 = vunpack.c.l.b16 %v386
    %v999 = vunpack.c.l.b16 %v387
    %v1000 = vunpack.c.l.b16 %v388
    %v1001 = vunpack.c.l.b16 %v389
    %v1002 = vunpack.c.l.b16 %v390
    %v1003 = vunpack.c.l.b16 %v391
    %v1004 = vunpack.c.l.b16 %v392
    %v1005 = vunpack.c.l.b16 %v393
    %v1006 = vunpack.c.l.b16 %v394
    %v1007 = vunpack.c.l.b16 %v395
    %v1008 = vunpack.c.l.b16 %v396
    %v1009 = vunpack.c.l.b16 %v397
    %v1010 = vunpack.c.l.b16 %v398
    %v1011 = vunpack.c.l.b16 %v399
    %v1012 = vunpack.c.l.b16 %v400
    %v1013 = vunpack.c.l.b16 %v401
    %v1014 = vunpack.c.l.b16 %v402
    %v1015 = vunpack.c.l.b16 %v403
    %v1016 = vunpack.c.l.b16 %v404
    %v1017 = vunpack.c.l.b16 %v405
    %v1018 = vunpack.c.l.b16 %v406
    %v1019 = vunpack.c.l.b16 %v407
    %v1020 = vunpack.c.l.b16 %v408
    %v1021 = vunpack.c.l.b16 %v409
    %v1022 = vunpack.c.l.b16 %v410
    %v1023 = vunpack.c.l.b16 %v411
    %v1024 = vunpack.c.l.b16 %v412
    %v1025 = vunpack.c.l.b16 %v413
    %v1026 = vunpack.c.l.b16 %v414
    %v1027 = vunpack.c.l.b16 %v415
    %v1028 = vunpack.c.l.b16 %v416
    %v1029 = vunpack.c.l.b16 %v417
    %v1030 = vunpack.c.l.b16 %v418
    %v1031 = vunpack.c.l.b16 %v419
    %v1032 = vunpack.c.l.b16 %v420
    %v1033 = vunpack.c.l.b16 %v421
    %v1034 = vunpack.c.l.b16 %v422
    %v1035 = vunpack.c.l.b16 %v423
    %v1036 = vunpack.c.l.b16 %v424
    %v1037 = vunpack.c.l.b16 %v425
    %v1038 = vunpack.c.l.b16 %v426
    %v1039 = vunpack.c.l.b16 %v427
    %v1040 = vunpack.c.l.b16 %v428
    %v1041 = vunpack.c.l.b16 %v429
    %v1042 = vunpack.c.l.b16 %v430
    %v1043 = vunpack.c.l.b16 %v431
    %v1044 = vunpack.c.l.b16 %v432
    %v1045 = vunpack.c.l.b16 %v433
    %v1046 = vunpack.c.l.b16 %v434
    %v1047 = vunpack.c.l.b16 %v435
    %v1048 = vunpack.c.l.b16 %v436
    %v1049 = vunpack.c.l.b16 %v437
    %v1050 = vunpack.c.l.b16 %v438
    %v1051 = vunpack.c.l.b16 %v439
    %v1052 = vunpack.c.l.b16 %v440
    %v1053 = vunpack.c.l.b16 %v441
    %v1054 = vunpack.c.l.b16 %v442
    %v1055 = vunpack.c.l.b16 %v443
    %v1056 = vunpack.c.l.b16 %v444
    %v1057 = vunpack.c.l.b16 %v445
    %v1058 = vunpack.c.l.b16 %v446
    %v1059 = vunpack.c.l.b16 %v447
    %v1060 = vunpack.c.l.b16 %v448
    %v1061 = vunpack.c.l.b16 %v449
    %v1062 = vunpack.c.l.b16 %v450
    %v1063 = vpack.c.b16 %v760, %v759
    %v1064 = vpack.c.b16 %v762, %v761
    %v1065 = vpack.c.b16 %v764, %v763
    %v1066 = vpack.c.b16 %v766, %v765
    %v1067 = vpack.c.b16 %v768, %v767
    %v1068 = vpack.c.b16 %v770, %v769
    %v1069 = vpack.c.b16 %v772, %v771
    %v1070 = vpack.c.b16 %v774, %v773
    %v1071 = vpack.c.b16 %v776, %v775
    %v1072 = vpack.c.b16 %v778, %v777
    %v1073 = vpack.c.b16 %v780, %v779
    %v1074 = vpack.c.b16 %v782, %v781
    %v1075 = vpack.c.b16 %v784, %v783
    %v1076 = vpack.c.b16 %v786, %v785
    %v1077 = vpack.c.b16 %v788, %v787
    %v1078 = vpack.c.b16 %v790, %v789
    %v1079 = vpack.c.b16 %v792, %v791
    %v1080 = vpack.c.b16 %v794, %v793
    %v1081 = vpack.c.b16 %v796, %v795
    %v1082 = vpack.c.b16 %v798, %v797
    %v1083 = vpack.c.b16 %v800, %v799
    %v1084 = vpack.c.b16 %v802, %v801
    %v1085 = vpack.c.b16 %v804, %v803
    %v1086 = vpack.c.b16 %v806, %v805
    %v1087 = vpack.c.b16 %v808, %v807
    %v1088 = vpack.c.b16 %v810, %v809
    %v1089 = vpack.c.b16 %v812, %v811
    %v1090 = vpack.c.b16 %v814, %v813
    %v1091 = vpack.c.b16 %v816, %v815
    %v1092 = vpack.c.b16 %v818, %v817
    %v1093 = vpack.c.b16 %v820, %v819
    %v1094 = vpack.c.b16 %v822, %v821
    %v1095 = vpack.c.b16 %v824, %v823
    %v1096 = vpack.c.b16 %v826, %v825
    %v1097 = vpack.c.b16 %v828, %v827
    %v1098 = vpack.c.b16 %v830, %v829
    %v1099 = vpack.c.b16 %v832, %v831
    %v1100 = vpack.c.b16 %v834, %v833
    %v1101 = vpack.c.b16 %v836, %v835
    %v1102 = vpack.c.b16 %v838, %v837
    %v1103 = vpack.c.b16 %v840, %v839
    %v1104 = vpack.c.b16 %v842, %v841
    %v1105 = vpack.c.b16 %v844, %v843
    %v1106 = vpack.c.b16 %v846, %v845
    %v1107 = vpack.c.b16 %v848, %v847
    %v1108 = vpack.c.b16 %v850, %v849
    %v1109 = vpack.c.b16 %v852, %v851
    %v1110 = vpack.c.b16 %v854, %v853
    %v1111 = vpack.c.b16 %v856, %v855
    %v1112 = vpack.c.b16 %v858, %v857
    %v1113 = vpack.c.b16 %v860, %v859
    %v1114 = vpack.c.b16 %v862, %v861
    %v1115 = vpack.c.b16 %v864, %v863
    %v1116 = vpack.c.b16 %v866, %v865
    %v1117 = vpack.c.b16 %v868, %v867
    %v1118 = vpack.c.b16 %v870, %v869
    %v1119 = vpack.c.b16 %v872, %v871
    %v1120 = vpack.c.b16 %v874, %v873
    %v1121 = vpack.c.b16 %v876, %v875
    %v1122 = vpack.c.b16 %v878, %v877
    %v1123 = vpack.c.b16 %v880, %v879
    %v1124 = vpack.c.b16 %v882, %v881
    %v1125 = vpack.c.b16 %v884, %v883
    %v1126 = vpack.c.b16 %v886, %v885
    %v1127 = vpack.c.b16 %v888, %v887
    %v1128 = vpack.c.b16 %v890, %v889
    %v1129 = vpack.c.b16 %v892, %v891
    %v1130 = vpack.c.b16 %v894, %v893
    %v1131 = vpack.c.b16 %v896, %v895
    %v1132 = vpack.c.b16 %v898, %v897
    %v1133 = vpack.c.b16 %v900, %v899
    %v1134 = vpack.c.b16 %v902, %v901
    %v1135 = vpack.c.b16 %v904, %v903
    %v1136 = vpack.c.b16 %v906, %v905
    %v1137 = vpack.c.b16 %v908, %v907
    %v1138 = vpack.c.b16 %v910, %v909
    %v1139 = vpack.c.b16 %v912, %v911
    %v1140 = vpack.c.b16 %v914, %v913
    %v1141 = vpack.c.b16 %v916, %v915
    %v1142 = vpack.c.b16 %v918, %v917
    %v1143 = vpack.c.b16 %v920, %v919
    %v1144 = vpack.c.b16 %v922, %v921
    %v1145 = vpack.c.b16 %v924, %v923
    %v1146 = vpack.c.b16 %v926, %v925
    %v1147 = vpack.c.b16 %v928, %v927
    %v1148 = vpack.c.b16 %v930, %v929
    %v1149 = vpack.c.b16 %v932, %v931
    %v1150 = vpack.c.b16 %v934, %v933
    %v1151 = vpack.c.b16 %v936, %v935
    %v1152 = vpack.c.b16 %v938, %v937
    %v1153 = vpack.c.b16 %v940, %v939
    %v1154 = vpack.c.b16 %v942, %v941
    %v1155 = vpack.c.b16 %v944, %v943
    %v1156 = vpack.c.b16 %v946, %v945
    %v1157 = vpack.c.b16 %v948, %v947
    %v1158 = vpack.c.b16 %v950, %v949
    %v1159 = vpack.c.b16 %v952, %v951
    %v1160 = vpack.c.b16 %v954, %v953
    %v1161 = vpack.c.b16 %v956, %v955
    %v1162 = vpack.c.b16 %v958, %v957
    %v1163 = vpack.c.b16 %v960, %v959
    %v1164 = vpack.c.b16 %v962, %v961
    %v1165 = vpack.c.b16 %v964, %v963
    %v1166 = vpack.c.b16 %v966, %v965
    %v1167 = vpack.c.b16 %v968, %v967
    %v1168 = vpack.c.b16 %v970, %v969
    %v1169 = vpack.c.b16 %v972, %v971
    %v1170 = vpack.c.b16 %v974, %v973
    %v1171 = vpack.c.b16 %v976, %v975
    %v1172 = vpack.c.b16 %v978, %v977
    %v1173 = vpack.c.b16 %v980, %v979
    %v1174 = vpack.c.b16 %v982, %v981
    %v1175 = vpack.c.b16 %v984, %v983
    %v1176 = vpack.c.b16 %v986, %v985
    %v1177 = vpack.c.b16 %v988, %v987
    %v1178 = vpack.c.b16 %v990, %v989
    %v1179 = vpack.c.b16 %v992, %v991
    %v1180 = vpack.c.b16 %v994, %v993
    %v1181 = vpack.c.b16 %v996, %v995
    %v1182 = vpack.c.b16 %v998, %v997
    %v1183 = vpack.c.b16 %v1000, %v999
    %v1184 = vpack.c.b16 %v1002, %v1001
    %v1185 = vpack.c.b16 %v1004, %v1003
    %v1186 = vpack.c.b16 %v1006, %v1005
    %v1187 = vpack.c.b16 %v1008, %v1007
    %v1188 = vpack.c.b16 %v1010, %v1009
    %v1189 = vpack.c.b16 %v1012, %v1011
    %v1190 = vpack.c.b16 %v1014, %v1013
    %v1191 = vpack.c.b16 %v1016, %v1015
    %v1192 = vpack.c.b16 %v1018, %v1017
    %v1193 = vpack.c.b16 %v1020, %v1019
    %v1194 = vpack.c.b16 %v1022, %v1021
    %v1195 = vpack.c.b16 %v1024, %v1023
    %v1196 = vpack.c.b16 %v1026, %v1025
    %v1197 = vpack.c.b16 %v1028, %v1027
    %v1198 = vpack.c.b16 %v1030, %v1029
    %v1199 = vpack.c.b16 %v1032, %v1031
    %v1200 = vpack.c.b16 %v1034, %v1033
    %v1201 = vpack.c.b16 %v1036, %v1035
    %v1202 = vpack.c.b16 %v1038, %v1037
    %v1203 = vpack.c.b16 %v1040, %v1039
    %v1204 = vpack.c.b16 %v1042, %v1041
    %v1205 = vpack.c.b16 %v1044, %v1043
    %v1206 = vpack.c.b16 %v1046, %v1045
    %v1207 = vpack.c.b16 %v1048, %v1047
    %v1208 = vpack.c.b16 %v1050, %v1049
    %v1209 = vpack.c.b16 %v1052, %v1051
    %v1210 = vpack.c.b16 %v1054, %v1053
    %v1211 = vpack.c.b16 %v1056, %v1055
    %v1212 = vpack.c.b16 %v1058, %v1057
    %v1213 = vpack.c.b16 %v1060, %v1059
    %v1214 = vpack.c.b16 %v1062, %v1061
    %1367 = vmatpush.bf16.msra.mxu0 %v1070
    %1368 = vmatpush.bf16.msra.mxu0 %v1069
    %1369 = vmatpush.bf16.msra.mxu0 %v1068
    %1370 = vmatpush.bf16.msra.mxu0 %v1067
    %1371 = vmatpush.bf16.msra.mxu0 %v1066
    %1372 = vmatpush.bf16.msra.mxu0 %v1065
    %1373 = vmatpush.bf16.msra.mxu0 %v1064
    %1374 = vmatpush.bf16.msra.mxu0 %v1063
    %1375 = vmatmul.bf16.gmra.mxu0 %v128
    %v1376 = vpop.f32.mrf.mxu0
    %v1377 = vadd.f32 %v453, %v1376
    %v1378 = vpop.f32.mrf.mxu0
    %1379 = vdwg.mxu0
    %1380 = vmatpush.bf16.msra.mxu0 %v1078
    %1381 = vmatpush.bf16.msra.mxu0 %v1077
    %1382 = vmatpush.bf16.msra.mxu0 %v1076
    %1383 = vmatpush.bf16.msra.mxu0 %v1075
    %1384 = vmatpush.bf16.msra.mxu0 %v1074
    %1385 = vmatpush.bf16.msra.mxu0 %v1073
    %1386 = vmatpush.bf16.msra.mxu0 %v1072
    %1387 = vmatpush.bf16.msra.mxu0 %v1071
    %1388 = vmatmul.bf16.gmra.mxu0 %v129
    %v1389 = vpop.f32.mrf.mxu0
    %v1390 = vadd.f32 %v1377, %v1389
    %v1391 = vpop.f32.mrf.mxu0
    %1392 = vdwg.mxu0
    %1393 = vmatpush.bf16.msra.mxu0 %v1086
    %1394 = vmatpush.bf16.msra.mxu0 %v1085
    %1395 = vmatpush.bf16.msra.mxu0 %v1084
    %1396 = vmatpush.bf16.msra.mxu0 %v1083
    %1397 = vmatpush.bf16.msra.mxu0 %v1082
    %1398 = vmatpush.bf16.msra.mxu0 %v1081
    %1399 = vmatpush.bf16.msra.mxu0 %v1080
    %1400 = vmatpush.bf16.msra.mxu0 %v1079
    %1401 = vmatmul.bf16.gmra.mxu0 %v130
    %v1402 = vpop.f32.mrf.mxu0
    %v1403 = vadd.f32 %v1390, %v1402
    %v1404 = vpop.f32.mrf.mxu0
    %1405 = vdwg.mxu0
    %1406 = vmatpush.bf16.msra.mxu0 %v1094
    %1407 = vmatpush.bf16.msra.mxu0 %v1093
    %1408 = vmatpush.bf16.msra.mxu0 %v1092
    %1409 = vmatpush.bf16.msra.mxu0 %v1091
    %1410 = vmatpush.bf16.msra.mxu0 %v1090
    %1411 = vmatpush.bf16.msra.mxu0 %v1089
    %1412 = vmatpush.bf16.msra.mxu0 %v1088
    %1413 = vmatpush.bf16.msra.mxu0 %v1087
    %1414 = vmatmul.bf16.gmra.mxu0 %v131
    %v1415 = vpop.f32.mrf.mxu0
    %v1416 = vadd.f32 %v1403, %v1415
    %v1417 = vpop.f32.mrf.mxu0
    %1418 = vdwg.mxu0
    %1419 = vmatpush.bf16.msra.mxu0 %v1102
    %1420 = vmatpush.bf16.msra.mxu0 %v1101
    %1421 = vmatpush.bf16.msra.mxu0 %v1100
    %1422 = vmatpush.bf16.msra.mxu0 %v1099
    %1423 = vmatpush.bf16.msra.mxu0 %v1098
    %1424 = vmatpush.bf16.msra.mxu0 %v1097
    %1425 = vmatpush.bf16.msra.mxu0 %v1096
    %1426 = vmatpush.bf16.msra.mxu0 %v1095
    %1427 = vmatmul.bf16.gmra.mxu0 %v132
    %v1428 = vpop.f32.mrf.mxu0
    %v1429 = vadd.f32 %v1416, %v1428
    %v1430 = vpop.f32.mrf.mxu0
    %1431 = vdwg.mxu0
    %1432 = vmatpush.bf16.msra.mxu0 %v1110
    %1433 = vmatpush.bf16.msra.mxu0 %v1109
    %1434 = vmatpush.bf16.msra.mxu0 %v1108
    %1435 = vmatpush.bf16.msra.mxu0 %v1107
    %1436 = vmatpush.bf16.msra.mxu0 %v1106
    %1437 = vmatpush.bf16.msra.mxu0 %v1105
    %1438 = vmatpush.bf16.msra.mxu0 %v1104
    %1439 = vmatpush.bf16.msra.mxu0 %v1103
    %1440 = vmatmul.bf16.gmra.mxu0 %v133
    %v1441 = vpop.f32.mrf.mxu0
    %v1442 = vadd.f32 %v1429, %v1441
    %v1443 = vpop.f32.mrf.mxu0
    %1444 = vdwg.mxu0
    %1445 = vmatpush.bf16.msra.mxu0 %v1118
    %1446 = vmatpush.bf16.msra.mxu0 %v1117
    %1447 = vmatpush.bf16.msra.mxu0 %v1116
    %1448 = vmatpush.bf16.msra.mxu0 %v1115
    %1449 = vmatpush.bf16.msra.mxu0 %v1114
    %1450 = vmatpush.bf16.msra.mxu0 %v1113
    %1451 = vmatpush.bf16.msra.mxu0 %v1112
    %1452 = vmatpush.bf16.msra.mxu0 %v1111
    %1453 = vmatmul.bf16.gmra.mxu0 %v134
    %v1454 = vpop.f32.mrf.mxu0
    %v1455 = vadd.f32 %v1442, %v1454
    %v1456 = vpop.f32.mrf.mxu0
    %1457 = vdwg.mxu0
    %1458 = vmatpush.bf16.msra.mxu0 %v1126
    %1459 = vmatpush.bf16.msra.mxu0 %v1125
    %1460 = vmatpush.bf16.msra.mxu0 %v1124
    %1461 = vmatpush.bf16.msra.mxu0 %v1123
    %1462 = vmatpush.bf16.msra.mxu0 %v1122
    %1463 = vmatpush.bf16.msra.mxu0 %v1121
    %1464 = vmatpush.bf16.msra.mxu0 %v1120
    %1465 = vmatpush.bf16.msra.mxu0 %v1119
    %1466 = vmatmul.bf16.gmra.mxu0 %v135
    %v1467 = vpop.f32.mrf.mxu0
    %v1468 = vadd.f32 %v1455, %v1467
    %v1469 = vpop.f32.mrf.mxu0
    %1470 = vdwg.mxu0
    %1471 = vmatpush.bf16.msra.mxu0 %v1134
    %1472 = vmatpush.bf16.msra.mxu0 %v1133
    %1473 = vmatpush.bf16.msra.mxu0 %v1132
    %1474 = vmatpush.bf16.msra.mxu0 %v1131
    %1475 = vmatpush.bf16.msra.mxu0 %v1130
    %1476 = vmatpush.bf16.msra.mxu0 %v1129
    %1477 = vmatpush.bf16.msra.mxu0 %v1128
    %1478 = vmatpush.bf16.msra.mxu0 %v1127
    %1479 = vmatmul.bf16.gmra.mxu0 %v136
    %v1480 = vpop.f32.mrf.mxu0
    %v1481 = vadd.f32 %v1468, %v1480
    %v1482 = vpop.f32.mrf.mxu0
    %1483 = vdwg.mxu0
    %1484 = vmatpush.bf16.msra.mxu0 %v1142
    %1485 = vmatpush.bf16.msra.mxu0 %v1141
    %1486 = vmatpush.bf16.msra.mxu0 %v1140
    %1487 = vmatpush.bf16.msra.mxu0 %v1139
    %1488 = vmatpush.bf16.msra.mxu0 %v1138
    %1489 = vmatpush.bf16.msra.mxu0 %v1137
    %1490 = vmatpush.bf16.msra.mxu0 %v1136
    %1491 = vmatpush.bf16.msra.mxu0 %v1135
    %1492 = vmatmul.bf16.gmra.mxu0 %v137
    %v1493 = vpop.f32.mrf.mxu0
    %v1494 = vadd.f32 %v1481, %v1493
    %v1495 = vpop.f32.mrf.mxu0
    %1496 = vdwg.mxu0
    %1497 = vmatpush.bf16.msra.mxu0 %v1150
    %1498 = vmatpush.bf16.msra.mxu0 %v1149
    %1499 = vmatpush.bf16.msra.mxu0 %v1148
    %1500 = vmatpush.bf16.msra.mxu0 %v1147
    %1501 = vmatpush.bf16.msra.mxu0 %v1146
    %1502 = vmatpush.bf16.msra.mxu0 %v1145
    %1503 = vmatpush.bf16.msra.mxu0 %v1144
    %1504 = vmatpush.bf16.msra.mxu0 %v1143
    %1505 = vmatmul.bf16.gmra.mxu0 %v138
    %v1506 = vpop.f32.mrf.mxu0
    %v1507 = vadd.f32 %v1494, %v1506
    %v1508 = vpop.f32.mrf.mxu0
    %1509 = vdwg.mxu0
    %1510 = vmatpush.bf16.msra.mxu0 %v1158
    %1511 = vmatpush.bf16.msra.mxu0 %v1157
    %1512 = vmatpush.bf16.msra.mxu0 %v1156
    %1513 = vmatpush.bf16.msra.mxu0 %v1155
    %1514 = vmatpush.bf16.msra.mxu0 %v1154
    %1515 = vmatpush.bf16.msra.mxu0 %v1153
    %1516 = vmatpush.bf16.msra.mxu0 %v1152
    %1517 = vmatpush.bf16.msra.mxu0 %v1151
    %1518 = vmatmul.bf16.gmra.mxu0 %v139
    %v1519 = vpop.f32.mrf.mxu0
    %v1520 = vadd.f32 %v1507, %v1519
    %v1521 = vpop.f32.mrf.mxu0
    %1522 = vdwg.mxu0
    %1523 = vmatpush.bf16.msra.mxu0 %v1166
    %1524 = vmatpush.bf16.msra.mxu0 %v1165
    %1525 = vmatpush.bf16.msra.mxu0 %v1164
    %1526 = vmatpush.bf16.msra.mxu0 %v1163
    %1527 = vmatpush.bf16.msra.mxu0 %v1162
    %1528 = vmatpush.bf16.msra.mxu0 %v1161
    %1529 = vmatpush.bf16.msra.mxu0 %v1160
    %1530 = vmatpush.bf16.msra.mxu0 %v1159
    %1531 = vmatmul.bf16.gmra.mxu0 %v140
    %v1532 = vpop.f32.mrf.mxu0
    %v1533 = vadd.f32 %v1520, %v1532
    %v1534 = vpop.f32.mrf.mxu0
    %1535 = vdwg.mxu0
    %1536 = vmatpush.bf16.msra.mxu0 %v1174
    %1537 = vmatpush.bf16.msra.mxu0 %v1173
    %1538 = vmatpush.bf16.msra.mxu0 %v1172
    %1539 = vmatpush.bf16.msra.mxu0 %v1171
    %1540 = vmatpush.bf16.msra.mxu0 %v1170
    %1541 = vmatpush.bf16.msra.mxu0 %v1169
    %1542 = vmatpush.bf16.msra.mxu0 %v1168
    %1543 = vmatpush.bf16.msra.mxu0 %v1167
    %1544 = vmatmul.bf16.gmra.mxu0 %v141
    %v1545 = vpop.f32.mrf.mxu0
    %v1546 = vadd.f32 %v1533, %v1545
    %v1547 = vpop.f32.mrf.mxu0
    %1548 = vdwg.mxu0
    %1549 = vmatpush.bf16.msra.mxu0 %v1182
    %1550 = vmatpush.bf16.msra.mxu0 %v1181
    %1551 = vmatpush.bf16.msra.mxu0 %v1180
    %1552 = vmatpush.bf16.msra.mxu0 %v1179
    %1553 = vmatpush.bf16.msra.mxu0 %v1178
    %1554 = vmatpush.bf16.msra.mxu0 %v1177
    %1555 = vmatpush.bf16.msra.mxu0 %v1176
    %1556 = vmatpush.bf16.msra.mxu0 %v1175
    %1557 = vmatmul.bf16.gmra.mxu0 %v142
    %v1558 = vpop.f32.mrf.mxu0
    %v1559 = vadd.f32 %v1546, %v1558
    %v1560 = vpop.f32.mrf.mxu0
    %1561 = vdwg.mxu0
    %1562 = vmatpush.bf16.msra.mxu0 %v1190
    %1563 = vmatpush.bf16.msra.mxu0 %v1189
    %1564 = vmatpush.bf16.msra.mxu0 %v1188
    %1565 = vmatpush.bf16.msra.mxu0 %v1187
    %1566 = vmatpush.bf16.msra.mxu0 %v1186
    %1567 = vmatpush.bf16.msra.mxu0 %v1185
    %1568 = vmatpush.bf16.msra.mxu0 %v1184
    %1569 = vmatpush.bf16.msra.mxu0 %v1183
    %1570 = vmatmul.bf16.gmra.mxu0 %v143
    %v1571 = vpop.f32.mrf.mxu0
    %v1572 = vadd.f32 %v1559, %v1571
    %v1573 = vpop.f32.mrf.mxu0
    %1574 = vdwg.mxu0
    %1575 = vmatpush.bf16.msra.mxu0 %v1198
    %1576 = vmatpush.bf16.msra.mxu0 %v1197
    %1577 = vmatpush.bf16.msra.mxu0 %v1196
    %1578 = vmatpush.bf16.msra.mxu0 %v1195
    %1579 = vmatpush.bf16.msra.mxu0 %v1194
    %1580 = vmatpush.bf16.msra.mxu0 %v1193
    %1581 = vmatpush.bf16.msra.mxu0 %v1192
    %1582 = vmatpush.bf16.msra.mxu0 %v1191
    %1583 = vmatmul.bf16.gmra.mxu0 %v144
    %v1584 = vpop.f32.mrf.mxu0
    %v1585 = vadd.f32 %v1572, %v1584
    %v1586 = vpop.f32.mrf.mxu0
    %1587 = vdwg.mxu0
    %1588 = vmatpush.bf16.msra.mxu0 %v1206
    %1589 = vmatpush.bf16.msra.mxu0 %v1205
    %1590 = vmatpush.bf16.msra.mxu0 %v1204
    %1591 = vmatpush.bf16.msra.mxu0 %v1203
    %1592 = vmatpush.bf16.msra.mxu0 %v1202
    %1593 = vmatpush.bf16.msra.mxu0 %v1201
    %1594 = vmatpush.bf16.msra.mxu0 %v1200
    %1595 = vmatpush.bf16.msra.mxu0 %v1199
    %1596 = vmatmul.bf16.gmra.mxu0 %v145
    %v1597 = vpop.f32.mrf.mxu0
    %v1598 = vadd.f32 %v1585, %v1597
    %v1599 = vpop.f32.mrf.mxu0
    %1600 = vdwg.mxu0
    %1601 = vmatpush.bf16.msra.mxu0 %v1214
    %1602 = vmatpush.bf16.msra.mxu0 %v1213
    %1603 = vmatpush.bf16.msra.mxu0 %v1212
    %1604 = vmatpush.bf16.msra.mxu0 %v1211
    %1605 = vmatpush.bf16.msra.mxu0 %v1210
    %1606 = vmatpush.bf16.msra.mxu0 %v1209
    %1607 = vmatpush.bf16.msra.mxu0 %v1208
    %1608 = vmatpush.bf16.msra.mxu0 %v1207
    %1609 = vmatmul.bf16.gmra.mxu0 %v146
    %v1610 = vpop.f32.mrf.mxu0
    %v1611 = vadd.f32 %v1598, %v1610
    %v1612 = vpop.f32.mrf.mxu0
    %1613 = vdwg.mxu0
    %v1614 = vmax.f32 %v1611, 0.0
    %v1615 = vpack.c.bf16 %v1614, %v1614
    %v1616 = vld [vmem:[#allocation7] sm:$0xf]
    %v1617 = vld [vmem:[#allocation7 + $0x4] sm:$0xf]
    %v1618 = vld [vmem:[#allocation7 + $0x8] sm:$0xf]
    %v1619 = vld [vmem:[#allocation7 + $0xc] sm:$0xf]
    %v1620 = vld [vmem:[#allocation7 + $0x10] sm:$0xf]
    %v1621 = vld [vmem:[#allocation7 + $0x14] sm:$0xf]
    %v1622 = vld [vmem:[#allocation7 + $0x18] sm:$0xf]
    %v1623 = vld [vmem:[#allocation7 + $0x1c] sm:$0xf]
    %v1624 = vld [vmem:[#allocation7 + $0x20] sm:$0xf]
    %v1625 = vld [vmem:[#allocation7 + $0x24] sm:$0xf]
    %v1626 = vld [vmem:[#allocation7 + $0x28] sm:$0xf]
    %v1627 = vld [vmem:[#allocation7 + $0x2c] sm:$0xf]
    %v1628 = vld [vmem:[#allocation7 + $0x30] sm:$0xf]
    %v1629 = vld [vmem:[#allocation7 + $0x34] sm:$0xf]
    %v1630 = vld [vmem:[#allocation7 + $0x38] sm:$0xf]
    %v1631 = vld [vmem:[#allocation7 + $0x3c] sm:$0xf]
    %v1632 = vld [vmem:[%s4] sm:$0x1]
    %v1634 = vperm.slane %v1632, 0
    %v1652 = vunpack.c.l.b16 %v1616
    %v1653 = vunpack.c.l.b16 %v1617
    %v1654 = vunpack.c.l.b16 %v1618
    %v1655 = vunpack.c.l.b16 %v1619
    %v1656 = vunpack.c.l.b16 %v1620
    %v1657 = vunpack.c.l.b16 %v1621
    %v1658 = vunpack.c.l.b16 %v1622
    %v1659 = vunpack.c.l.b16 %v1623
    %v1660 = vunpack.c.l.b16 %v1624
    %v1661 = vunpack.c.l.b16 %v1625
    %v1662 = vunpack.c.l.b16 %v1626
    %v1663 = vunpack.c.l.b16 %v1627
    %v1664 = vunpack.c.l.b16 %v1628
    %v1665 = vunpack.c.l.b16 %v1629
    %v1666 = vunpack.c.l.b16 %v1630
    %v1667 = vunpack.c.l.b16 %v1631
    %v1668 = vpack.c.b16 %v1653, %v1652
    %v1669 = vpack.c.b16 %v1655, %v1654
    %v1670 = vpack.c.b16 %v1657, %v1656
    %v1671 = vpack.c.b16 %v1659, %v1658
    %v1672 = vpack.c.b16 %v1661, %v1660
    %v1673 = vpack.c.b16 %v1663, %v1662
    %v1674 = vpack.c.b16 %v1665, %v1664
    %v1675 = vpack.c.b16 %v1667, %v1666
    %1684 = vmatpush.bf16.msra.mxu0 %v1675
    %1685 = vmatpush.bf16.msra.mxu0 %v1674
    %1686 = vmatpush.bf16.msra.mxu0 %v1673
    %1687 = vmatpush.bf16.msra.mxu0 %v1672
    %1688 = vmatpush.bf16.msra.mxu0 %v1671
    %1689 = vmatpush.bf16.msra.mxu0 %v1670
    %1690 = vmatpush.bf16.msra.mxu0 %v1669
    %1691 = vmatpush.bf16.msra.mxu0 %v1668
    %1692 = vmatmul.bf16.gmra.mxu0 %v1615
    %v1693 = vpop.f32.mrf.mxu0
    %v1694 = vadd.f32 %v1634, %v1693
    %v1695 = vpop.f32.mrf.mxu0
    %1696 = vdwg.mxu0
    %v1697 = vmax.f32 %v1694, 0.0
    %v1698 = vpack.c.bf16 %v1697, %v1697
    %v1699 = vld [vmem:[#allocation8] sm:$0xf]
    %v1700 = vld [vmem:[#allocation8 + $0x4] sm:$0xf]
    %v1701 = vld [vmem:[#allocation8 + $0x8] sm:$0xf]
    %v1702 = vld [vmem:[#allocation8 + $0xc] sm:$0xf]
    %v1703 = vld [vmem:[#allocation8 + $0x10] sm:$0xf]
    %v1704 = vld [vmem:[#allocation8 + $0x14] sm:$0xf]
    %v1705 = vld [vmem:[#allocation8 + $0x18] sm:$0xf]
    %v1706 = vld [vmem:[#allocation8 + $0x1c] sm:$0xf]
    %v1707 = vld [vmem:[#allocation8 + $0x20] sm:$0xf]
    %v1708 = vld [vmem:[#allocation8 + $0x24] sm:$0xf]
    %v1709 = vld [vmem:[#allocation8 + $0x28] sm:$0xf]
    %v1710 = vld [vmem:[#allocation8 + $0x2c] sm:$0xf]
    %v1711 = vld [vmem:[#allocation8 + $0x30] sm:$0xf]
    %v1712 = vld [vmem:[#allocation8 + $0x34] sm:$0xf]
    %v1713 = vld [vmem:[#allocation8 + $0x38] sm:$0xf]
    %v1714 = vld [vmem:[#allocation8 + $0x3c] sm:$0xf]
    %v1715 = vld [vmem:[%s6] sm:$0x1]
    %v1717 = vperm.slane %v1715, 0
    %v1735 = vunpack.c.l.b16 %v1699
    %v1736 = vunpack.c.l.b16 %v1700
    %v1737 = vunpack.c.l.b16 %v1701
    %v1738 = vunpack.c.l.b16 %v1702
    %v1739 = vunpack.c.l.b16 %v1703
    %v1740 = vunpack.c.l.b16 %v1704
    %v1741 = vunpack.c.l.b16 %v1705
    %v1742 = vunpack.c.l.b16 %v1706
    %v1743 = vunpack.c.l.b16 %v1707
    %v1744 = vunpack.c.l.b16 %v1708
    %v1745 = vunpack.c.l.b16 %v1709
    %v1746 = vunpack.c.l.b16 %v1710
    %v1747 = vunpack.c.l.b16 %v1711
    %v1748 = vunpack.c.l.b16 %v1712
    %v1749 = vunpack.c.l.b16 %v1713
    %v1750 = vunpack.c.l.b16 %v1714
    %v1751 = vpack.c.b16 %v1736, %v1735
    %v1752 = vpack.c.b16 %v1738, %v1737
    %v1753 = vpack.c.b16 %v1740, %v1739
    %v1754 = vpack.c.b16 %v1742, %v1741
    %v1755 = vpack.c.b16 %v1744, %v1743
    %v1756 = vpack.c.b16 %v1746, %v1745
    %v1757 = vpack.c.b16 %v1748, %v1747
    %v1758 = vpack.c.b16 %v1750, %v1749
    %1767 = vmatpush.bf16.msra.mxu0 %v1758
    %1768 = vmatpush.bf16.msra.mxu0 %v1757
    %1769 = vmatpush.bf16.msra.mxu0 %v1756
    %1770 = vmatpush.bf16.msra.mxu0 %v1755
    %1771 = vmatpush.bf16.msra.mxu0 %v1754
    %1772 = vmatpush.bf16.msra.mxu0 %v1753
    %1773 = vmatpush.bf16.msra.mxu0 %v1752
    %1774 = vmatpush.bf16.msra.mxu0 %v1751
    %1775 = vmatmul.bf16.gmra.mxu0 %v1698
    %v1776 = vpop.f32.mrf.mxu0
    %v1777 = vadd.f32 %v1717, %v1776
    %v1778 = vpop.f32.mrf.mxu0
    %1779 = vdwg.mxu0
    %v1780 = vmax.f32 %v1777, 0.0
    %v1781 = vpack.c.bf16 %v1780, %v1780
    %v1782 = vld [vmem:[#allocation10] sm:$0xf]
    %v1783 = vld [vmem:[#allocation10 + $0x4] sm:$0xf]
    %v1784 = vld [vmem:[#allocation10 + $0x8] sm:$0xf]
    %v1785 = vld [vmem:[#allocation10 + $0xc] sm:$0xf]
    %v1786 = vld [vmem:[#allocation10 + $0x10] sm:$0xf]
    %v1787 = vld [vmem:[#allocation10 + $0x14] sm:$0xf]
    %v1788 = vld [vmem:[#allocation10 + $0x18] sm:$0xf]
    %v1789 = vld [vmem:[#allocation10 + $0x1c] sm:$0xf]
    %v1790 = vld [vmem:[#allocation10 + $0x20] sm:$0xf]
    %v1791 = vld [vmem:[#allocation10 + $0x24] sm:$0xf]
    %v1792 = vld [vmem:[#allocation10 + $0x28] sm:$0xf]
    %v1793 = vld [vmem:[#allocation10 + $0x2c] sm:$0xf]
    %v1794 = vld [vmem:[#allocation10 + $0x30] sm:$0xf]
    %v1795 = vld [vmem:[#allocation10 + $0x34] sm:$0xf]
    %v1796 = vld [vmem:[#allocation10 + $0x38] sm:$0xf]
    %v1797 = vld [vmem:[#allocation10 + $0x3c] sm:$0xf]
    %v1798 = vld [vmem:[%s8] sm:$0x1]
    %v1800 = vperm.slane %v1798, 0
    %v1818 = vunpack.c.l.b16 %v1782
    %v1819 = vunpack.c.l.b16 %v1783
    %v1820 = vunpack.c.l.b16 %v1784
    %v1821 = vunpack.c.l.b16 %v1785
    %v1822 = vunpack.c.l.b16 %v1786
    %v1823 = vunpack.c.l.b16 %v1787
    %v1824 = vunpack.c.l.b16 %v1788
    %v1825 = vunpack.c.l.b16 %v1789
    %v1826 = vunpack.c.l.b16 %v1790
    %v1827 = vunpack.c.l.b16 %v1791
    %v1828 = vunpack.c.l.b16 %v1792
    %v1829 = vunpack.c.l.b16 %v1793
    %v1830 = vunpack.c.l.b16 %v1794
    %v1831 = vunpack.c.l.b16 %v1795
    %v1832 = vunpack.c.l.b16 %v1796
    %v1833 = vunpack.c.l.b16 %v1797
    %v1834 = vpack.c.b16 %v1819, %v1818
    %v1835 = vpack.c.b16 %v1821, %v1820
    %v1836 = vpack.c.b16 %v1823, %v1822
    %v1837 = vpack.c.b16 %v1825, %v1824
    %v1838 = vpack.c.b16 %v1827, %v1826
    %v1839 = vpack.c.b16 %v1829, %v1828
    %v1840 = vpack.c.b16 %v1831, %v1830
    %v1841 = vpack.c.b16 %v1833, %v1832
    %1850 = vmatpush.bf16.msra.mxu0 %v1841
    %1851 = vmatpush.bf16.msra.mxu0 %v1840
    %1852 = vmatpush.bf16.msra.mxu0 %v1839
    %1853 = vmatpush.bf16.msra.mxu0 %v1838
    %1854 = vmatpush.bf16.msra.mxu0 %v1837
    %1855 = vmatpush.bf16.msra.mxu0 %v1836
    %1856 = vmatpush.bf16.msra.mxu0 %v1835
    %1857 = vmatpush.bf16.msra.mxu0 %v1834
    %1858 = vmatmul.bf16.gmra.mxu0 %v1781
    %v1859 = vpop.f32.mrf.mxu0
    %v1860 = vadd.f32 %v1800, %v1859
    %v1861 = vpop.f32.mrf.mxu0
    %1862 = vdwg.mxu0
    %1863 = vst [vmem:[#allocation11] sm:$0xff] %v1860
    // Predicated region
    $region58: #{tpu_custom_call.1} parent=1 // pred_check
      _
    $region59: #{tpu_custom_call.1} parent=1 // pred_check_branch
      %1865 = sbr.rel (0) target = $region61
    $region60: #{tpu_custom_call.1} parent=1 // pred_region
      %1867 = vsyncadd [#allocation4], 0
      %s1869 = sshll.u32 [#allocation11], 4
      %s1870 = int_to_ptr.vmem [resolvable:$true] %s1869
      %s1871 = sshll.u32 %s9, 4
      %s1872 = int_to_ptr.hbm [resolvable:$true] %s1871
      %1874 = dma.vmem_to_hbm [thread:$0]  %s1870, 128, %s1872, [#allocation4]
    $region61: #{tpu_custom_call.1} parent=1 // pred_fallthru
      _
    // Predicated region
    $region62: #{tpu_custom_call.1} parent=1 // pred_check
      _
    $region63: #{tpu_custom_call.1} parent=1 // pred_check_branch
      %1876 = sbr.rel (0) target = $region65
    $region64: #{tpu_custom_call.1} parent=1 // pred_region
      %1878 = dma.done [#allocation4], 128
    $region65: #{tpu_custom_call.1} parent=1 // pred_fallthru
      _
    %1879 = vsyncpa [#allocation3], 1
    %1880 = vsyncpa [#allocation6], 1
    %1881 = vsyncpa [#allocation9], 1
    %1882 = vsyncpa [#allocation4], 1

// kernel: tpu_custom_call.1
$region0: #{tpu_custom_call.1}
  #allocation0 [shape = 'u32[]', space=smem, size = 0x4, offset = 0x4, fixed_abs, tag = 'smem constant byte address 0x4 - core index']
  #allocation1 [shape = 'u32[72,128]{1,0:T(1,128)}', space=vmem, size = 0x9000, scoped, tag = 'internal scratch']
  %s0 = inlined_call_operand.hbm [shape: f32[8,2432], index: 0, kind: input, shape index: {}]
  %s1 = inlined_call_operand.hbm [shape: bf16[2432,128], index: 1, kind: input, shape index: {}]
  %s2 = inlined_call_operand.vmem [shape: f32[1,128], index: 2, kind: input, shape index: {}]
  %s3 = inlined_call_operand.hbm [shape: bf16[128,128], index: 3, kind: input, shape index: {}]
  %s4 = inlined_call_operand.vmem [shape: f32[1,128], index: 4, kind: input, shape index: {}]
  %s5 = inlined_call_operand.hbm [shape: bf16[128,128], index: 5, kind: input, shape index: {}]
  %s6 = inlined_call_operand.vmem [shape: f32[1,128], index: 6, kind: input, shape index: {}]
  %s7 = inlined_call_operand.hbm [shape: bf16[128,128], index: 7, kind: input, shape index: {}]
  %s8 = inlined_call_operand.vmem [shape: f32[1,128], index: 8, kind: input, shape index: {}]
  %s9 = inlined_call_operand.hbm [shape: f32[8,128], index: 9, kind: output, shape index: {}]
  %s10 = sld [smem:[#allocation0]]
  $region66: #{tpu_custom_call.1} parent=0
    _
  %s12 = ssub.s32 1, %s10
  %s13 = scalar_select 0, %s12, %s10
  $region1: #{tpu_custom_call.1} parent=0
    #allocation2 [shape = 'u8[77824]{0}', space=vmem, size = 0x13000, scoped, tag = 'input window, operand 0, single buffered']
    #allocation3 [shape = 's32[1]{0}', space=sflag, size = 0x4, scoped, tag = 'scoped memory for tpu_custom_call.1']
    #allocation4 [shape = 's32[1]{0}', space=sflag, size = 0x4, scoped, tag = 'scoped memory for tpu_custom_call.1']
    #allocation5 [shape = 'u8[622592]{0}', space=vmem, size = 0x98000, scoped, tag = 'input window, operand 1, single buffered']
    #allocation6 [shape = 's32[1]{0}', space=sflag, size = 0x4, scoped, tag = 'scoped memory for tpu_custom_call.1']
    #allocation7 [shape = 'u8[32768]{0}', space=vmem, size = 0x8000, scoped, tag = 'input window, operand 3, single buffered']
    #allocation8 [shape = 'u8[32768]{0}', space=vmem, size = 0x8000, scoped, tag = 'input window, operand 5, single buffered']
    #allocation9 [shape = 's32[1]{0}', space=sflag, size = 0x4, scoped, tag = 'scoped memory for tpu_custom_call.1']
    #allocation10 [shape = 'u8[32768]{0}', space=vmem, size = 0x8000, scoped, tag = 'input window, operand 7, single buffered']
    #allocation11 [shape = 'u8[4096]{0}', space=vmem, size = 0x1000, scoped, tag = 'output window, operand 0, single buffered']
    %14 = vsyncpa [#allocation3], 0
    %15 = vsyncpa [#allocation6], 0
    %16 = vsyncpa [#allocation9], 0
    %17 = vsyncpa [#allocation4], 0
    // Predicated region
    $region2: #{tpu_custom_call.1} parent=1 // pred_check
      _
    $region3: #{tpu_custom_call.1} parent=1 // pred_check_branch
      %19 = sbr.rel (0) target = $region5
    $region4: #{tpu_custom_call.1} parent=1 // pred_region
      %21 = vsyncadd [#allocation3], 0
      %s23 = sshll.u32 %s0, 4
      %s24 = int_to_ptr.hbm [resolvable:$true] %s23
      %s25 = sshll.u32 [#allocation2], 4
      %s26 = int_to_ptr.vmem [resolvable:$true] %s25
      %28 = dma.hbm_to_vmem [thread:$0]  %s24, 2432, %s26, [#allocation3]
    $region5: #{tpu_custom_call.1} parent=1 // pred_fallthru
      _
    // Predicated region
    $region6: #{tpu_custom_call.1} parent=1 // pred_check
      _
    $region7: #{tpu_custom_call.1} parent=1 // pred_check_branch
      %30 = sbr.rel (0) target = $region9
    $region8: #{tpu_custom_call.1} parent=1 // pred_region
      %32 = vsyncadd [#allocation6], 0
      %s33 = sshll.u32 %s1, 4
      %s34 = int_to_ptr.hbm [resolvable:$true] %s33
      %s35 = sshll.u32 [#allocation5], 4
      %s36 = int_to_ptr.vmem [resolvable:$true] %s35
      %41 = dma.hbm_to_vmem [thread:$0]  %s34, 19456, %s36, [#allocation6], 64, 64, 4
    $region9: #{tpu_custom_call.1} parent=1 // pred_fallthru
      _
    // Predicated region
    $region10: #{tpu_custom_call.1} parent=1 // pred_check
      _
    $region11: #{tpu_custom_call.1} parent=1 // pred_check_branch
      %43 = sbr.rel (0) target = $region13
    $region12: #{tpu_custom_call.1} parent=1 // pred_region
      _
    $region13: #{tpu_custom_call.1} parent=1 // pred_fallthru
      _
    // Predicated region
    $region14: #{tpu_custom_call.1} parent=1 // pred_check
      _
    $region15: #{tpu_custom_call.1} parent=1 // pred_check_branch
      %45 = sbr.rel (0) target = $region17
    $region16: #{tpu_custom_call.1} parent=1 // pred_region
      %47 = vsyncadd [#allocation6], 0
      %s48 = sshll.u32 %s3, 4
      %s49 = int_to_ptr.hbm [resolvable:$true] %s48
      %s50 = sshll.u32 [#allocation7], 4
      %s51 = int_to_ptr.vmem [resolvable:$true] %s50
      %56 = dma.hbm_to_vmem [thread:$0]  %s49, 1024, %s51, [#allocation6], 64, 64, 4
    $region17: #{tpu_custom_call.1} parent=1 // pred_fallthru
      _
    // Predicated region
    $region18: #{tpu_custom_call.1} parent=1 // pred_check
      _
    $region19: #{tpu_custom_call.1} parent=1 // pred_check_branch
      %58 = sbr.rel (0) target = $region21
    $region20: #{tpu_custom_call.1} parent=1 // pred_region
      _
    $region21: #{tpu_custom_call.1} parent=1 // pred_fallthru
      _
    // Predicated region
    $region22: #{tpu_custom_call.1} parent=1 // pred_check
      _
    $region23: #{tpu_custom_call.1} parent=1 // pred_check_branch
      %60 = sbr.rel (0) target = $region25
    $region24: #{tpu_custom_call.1} parent=1 // pred_region
      %62 = vsyncadd [#allocation9], 0
      %s63 = sshll.u32 %s5, 4
      %s64 = int_to_ptr.hbm [resolvable:$true] %s63
      %s65 = sshll.u32 [#allocation8], 4
      %s66 = int_to_ptr.vmem [resolvable:$true] %s65
      %71 = dma.hbm_to_vmem [thread:$0]  %s64, 1024, %s66, [#allocation9], 64, 64, 4
    $region25: #{tpu_custom_call.1} parent=1 // pred_fallthru
      _
    // Predicated region
    $region26: #{tpu_custom_call.1} parent=1 // pred_check
      _
    $region27: #{tpu_custom_call.1} parent=1 // pred_check_branch
      %73 = sbr.rel (0) target = $region29
    $region28: #{tpu_custom_call.1} parent=1 // pred_region
      _
    $region29: #{tpu_custom_call.1} parent=1 // pred_fallthru
      _
    // Predicated region
    $region30: #{tpu_custom_call.1} parent=1 // pred_check
      _
    $region31: #{tpu_custom_call.1} parent=1 // pred_check_branch
      %75 = sbr.rel (0) target = $region33
    $region32: #{tpu_custom_call.1} parent=1 // pred_region
      %77 = vsyncadd [#allocation9], 0
      %s78 = sshll.u32 %s7, 4
      %s79 = int_to_ptr.hbm [resolvable:$true] %s78
      %s80 = sshll.u32 [#allocation10], 4
      %s81 = int_to_ptr.vmem [resolvable:$true] %s80
      %86 = dma.hbm_to_vmem [thread:$0]  %s79, 1024, %s81, [#allocation9], 64, 64, 4
    $region33: #{tpu_custom_call.1} parent=1 // pred_fallthru
      _
    // Predicated region
    $region34: #{tpu_custom_call.1} parent=1 // pred_check
      _
    $region35: #{tpu_custom_call.1} parent=1 // pred_check_branch
      %88 = sbr.rel (0) target = $region37
    $region36: #{tpu_custom_call.1} parent=1 // pred_region
      _
    $region37: #{tpu_custom_call.1} parent=1 // pred_fallthru
      _
    // Predicated region
    $region38: #{tpu_custom_call.1} parent=1 // pred_check
      _
    $region39: #{tpu_custom_call.1} parent=1 // pred_check_branch
      %90 = sbr.rel (0) target = $region41
    $region40: #{tpu_custom_call.1} parent=1 // pred_region
      %92 = dma.done [#allocation3], 2432
    $region41: #{tpu_custom_call.1} parent=1 // pred_fallthru
      _
    // Predicated region
    $region42: #{tpu_custom_call.1} parent=1 // pred_check
      _
    $region43: #{tpu_custom_call.1} parent=1 // pred_check_branch
      %94 = sbr.rel (0) target = $region45
    $region44: #{tpu_custom_call.1} parent=1 // pred_region
      %96 = dma.done [#allocation6], 19456
    $region45: #{tpu_custom_call.1} parent=1 // pred_fallthru
      _
    // Predicated region
    $region46: #{tpu_custom_call.1} parent=1 // pred_check
      _
    $region47: #{tpu_custom_call.1} parent=1 // pred_check_branch
      %98 = sbr.rel (0) target = $region49
    $region48: #{tpu_custom_call.1} parent=1 // pred_region
      %100 = dma.done [#allocation6], 1024
    $region49: #{tpu_custom_call.1} parent=1 // pred_fallthru
      _
    // Predicated region
    $region50: #{tpu_custom_call.1} parent=1 // pred_check
      _
    $region51: #{tpu_custom_call.1} parent=1 // pred_check_branch
      %102 = sbr.rel (0) target = $region53
    $region52: #{tpu_custom_call.1} parent=1 // pred_region
      %104 = dma.done [#allocation9], 1024
    $region53: #{tpu_custom_call.1} parent=1 // pred_fallthru
      _
    // Predicated region
    $region54: #{tpu_custom_call.1} parent=1 // pred_check
      _
    $region55: #{tpu_custom_call.1} parent=1 // pred_check_branch
      %106 = sbr.rel (0) target = $region57
    $region56: #{tpu_custom_call.1} parent=1 // pred_region
      %108 = dma.done [#allocation9], 1024
    $region57: #{tpu_custom_call.1} parent=1 // pred_fallthru
      _
    %v109 = vld [vmem:[#allocation2] sm:$0xff]
    %v110 = vld [vmem:[#allocation2 + $0x8] sm:$0xff]
    %v111 = vld [vmem:[#allocation2 + $0x10] sm:$0xff]
    %v112 = vld [vmem:[#allocation2 + $0x18] sm:$0xff]
    %v113 = vld [vmem:[#allocation2 + $0x20] sm:$0xff]
    %v114 = vld [vmem:[#allocation2 + $0x28] sm:$0xff]
    %v115 = vld [vmem:[#allocation2 + $0x30] sm:$0xff]
    %v116 = vld [vmem:[#allocation2 + $0x38] sm:$0xff]
    %v117 = vld [vmem:[#allocation2 + $0x40] sm:$0xff]
    %v118 = vld [vmem:[#allocation2 + $0x48] sm:$0xff]
    %v119 = vld [vmem:[#allocation2 + $0x50] sm:$0xff]
    %v120 = vld [vmem:[#allocation2 + $0x58] sm:$0xff]
    %v121 = vld [vmem:[#allocation2 + $0x60] sm:$0xff]
    %v122 = vld [vmem:[#allocation2 + $0x68] sm:$0xff]
    %v123 = vld [vmem:[#allocation2 + $0x70] sm:$0xff]
    %v124 = vld [vmem:[#allocation2 + $0x78] sm:$0xff]
    %v125 = vld [vmem:[#allocation2 + $0x80] sm:$0xff]
    %v126 = vld [vmem:[#allocation2 + $0x88] sm:$0xff]
    %v127 = vld [vmem:[#allocation2 + $0x90] sm:$0xff]
    %v128 = vpack.c.bf16 %v109, %v109
    %v129 = vpack.c.bf16 %v110, %v110
    %v130 = vpack.c.bf16 %v111, %v111
    %v131 = vpack.c.bf16 %v112, %v112
    %v132 = vpack.c.bf16 %v113, %v113
    %v133 = vpack.c.bf16 %v114, %v114
    %v134 = vpack.c.bf16 %v115, %v115
    %v135 = vpack.c.bf16 %v116, %v116
    %v136 = vpack.c.bf16 %v117, %v117
    %v137 = vpack.c.bf16 %v118, %v118
    %v138 = vpack.c.bf16 %v119, %v119
    %v139 = vpack.c.bf16 %v120, %v120
    %v140 = vpack.c.bf16 %v121, %v121
    %v141 = vpack.c.bf16 %v122, %v122
    %v142 = vpack.c.bf16 %v123, %v123
    %v143 = vpack.c.bf16 %v124, %v124
    %v144 = vpack.c.bf16 %v125, %v125
    %v145 = vpack.c.bf16 %v126, %v126
    %v146 = vpack.c.bf16 %v127, %v127
    %v147 = vld [vmem:[#allocation5] sm:$0xf]
    %v148 = vld [vmem:[#allocation5 + $0x4] sm:$0xf]
    %v149 = vld [vmem:[#allocation5 + $0x8] sm:$0xf]
    %v150 = vld [vmem:[#allocation5 + $0xc] sm:$0xf]
    %v151 = vld [vmem:[#allocation5 + $0x10] sm:$0xf]
    %v152 = vld [vmem:[#allocation5 + $0x14] sm:$0xf]
    %v153 = vld [vmem:[#allocation5 + $0x18] sm:$0xf]
    %v154 = vld [vmem:[#allocation5 + $0x1c] sm:$0xf]
    %v155 = vld [vmem:[#allocation5 + $0x20] sm:$0xf]
    %v156 = vld [vmem:[#allocation5 + $0x24] sm:$0xf]
    %v157 = vld [vmem:[#allocation5 + $0x28] sm:$0xf]
    %v158 = vld [vmem:[#allocation5 + $0x2c] sm:$0xf]
    %v159 = vld [vmem:[#allocation5 + $0x30] sm:$0xf]
    %v160 = vld [vmem:[#allocation5 + $0x34] sm:$0xf]
    %v161 = vld [vmem:[#allocation5 + $0x38] sm:$0xf]
    %v162 = vld [vmem:[#allocation5 + $0x3c] sm:$0xf]
    %v163 = vld [vmem:[#allocation5 + $0x40] sm:$0xf]
    %v164 = vld [vmem:[#allocation5 + $0x44] sm:$0xf]
    %v165 = vld [vmem:[#allocation5 + $0x48] sm:$0xf]
    %v166 = vld [vmem:[#allocation5 + $0x4c] sm:$0xf]
    %v167 = vld [vmem:[#allocation5 + $0x50] sm:$0xf]
    %v168 = vld [vmem:[#allocation5 + $0x54] sm:$0xf]
    %v169 = vld [vmem:[#allocation5 + $0x58] sm:$0xf]
    %v170 = vld [vmem:[#allocation5 + $0x5c] sm:$0xf]
    %v171 = vld [vmem:[#allocation5 + $0x60] sm:$0xf]
    %v172 = vld [vmem:[#allocation5 + $0x64] sm:$0xf]
    %v173 = vld [vmem:[#allocation5 + $0x68] sm:$0xf]
    %v174 = vld [vmem:[#allocation5 + $0x6c] sm:$0xf]
    %v175 = vld [vmem:[#allocation5 + $0x70] sm:$0xf]
    %v176 = vld [vmem:[#allocation5 + $0x74] sm:$0xf]
    %v177 = vld [vmem:[#allocation5 + $0x78] sm:$0xf]
    %v178 = vld [vmem:[#allocation5 + $0x7c] sm:$0xf]
    %v179 = vld [vmem:[#allocation5 + $0x80] sm:$0xf]
    %v180 = vld [vmem:[#allocation5 + $0x84] sm:$0xf]
    %v181 = vld [vmem:[#allocation5 + $0x88] sm:$0xf]
    %v182 = vld [vmem:[#allocation5 + $0x8c] sm:$0xf]
    %v183 = vld [vmem:[#allocation5 + $0x90] sm:$0xf]
    %v184 = vld [vmem:[#allocation5 + $0x94] sm:$0xf]
    %v185 = vld [vmem:[#allocation5 + $0x98] sm:$0xf]
    %v186 = vld [vmem:[#allocation5 + $0x9c] sm:$0xf]
    %v187 = vld [vmem:[#allocation5 + $0xa0] sm:$0xf]
    %v188 = vld [vmem:[#allocation5 + $0xa4] sm:$0xf]
    %v189 = vld [vmem:[#allocation5 + $0xa8] sm:$0xf]
    %v190 = vld [vmem:[#allocation5 + $0xac] sm:$0xf]
    %v191 = vld [vmem:[#allocation5 + $0xb0] sm:$0xf]
    %v192 = vld [vmem:[#allocation5 + $0xb4] sm:$0xf]
    %v193 = vld [vmem:[#allocation5 + $0xb8] sm:$0xf]
    %v194 = vld [vmem:[#allocation5 + $0xbc] sm:$0xf]
    %v195 = vld [vmem:[#allocation5 + $0xc0] sm:$0xf]
    %v196 = vld [vmem:[#allocation5 + $0xc4] sm:$0xf]
    %v197 = vld [vmem:[#allocation5 + $0xc8] sm:$0xf]
    %v198 = vld [vmem:[#allocation5 + $0xcc] sm:$0xf]
    %v199 = vld [vmem:[#allocation5 + $0xd0] sm:$0xf]
    %v200 = vld [vmem:[#allocation5 + $0xd4] sm:$0xf]
    %v201 = vld [vmem:[#allocation5 + $0xd8] sm:$0xf]
    %v202 = vld [vmem:[#allocation5 + $0xdc] sm:$0xf]
    %v203 = vld [vmem:[#allocation5 + $0xe0] sm:$0xf]
    %v204 = vld [vmem:[#allocation5 + $0xe4] sm:$0xf]
    %v205 = vld [vmem:[#allocation5 + $0xe8] sm:$0xf]
    %v206 = vld [vmem:[#allocation5 + $0xec] sm:$0xf]
    %v207 = vld [vmem:[#allocation5 + $0xf0] sm:$0xf]
    %v208 = vld [vmem:[#allocation5 + $0xf4] sm:$0xf]
    %v209 = vld [vmem:[#allocation5 + $0xf8] sm:$0xf]
    %v210 = vld [vmem:[#allocation5 + $0xfc] sm:$0xf]
    %v211 = vld [vmem:[#allocation5 + $0x100] sm:$0xf]
    %v212 = vld [vmem:[#allocation5 + $0x104] sm:$0xf]
    %v213 = vld [vmem:[#allocation5 + $0x108] sm:$0xf]
    %v214 = vld [vmem:[#allocation5 + $0x10c] sm:$0xf]
    %v215 = vld [vmem:[#allocation5 + $0x110] sm:$0xf]
    %v216 = vld [vmem:[#allocation5 + $0x114] sm:$0xf]
    %v217 = vld [vmem:[#allocation5 + $0x118] sm:$0xf]
    %v218 = vld [vmem:[#allocation5 + $0x11c] sm:$0xf]
    %v219 = vld [vmem:[#allocation5 + $0x120] sm:$0xf]
    %v220 = vld [vmem:[#allocation5 + $0x124] sm:$0xf]
    %v221 = vld [vmem:[#allocation5 + $0x128] sm:$0xf]
    %v222 = vld [vmem:[#allocation5 + $0x12c] sm:$0xf]
    %v223 = vld [vmem:[#allocation5 + $0x130] sm:$0xf]
    %v224 = vld [vmem:[#allocation5 + $0x134] sm:$0xf]
    %v225 = vld [vmem:[#allocation5 + $0x138] sm:$0xf]
    %v226 = vld [vmem:[#allocation5 + $0x13c] sm:$0xf]
    %v227 = vld [vmem:[#allocation5 + $0x140] sm:$0xf]
    %v228 = vld [vmem:[#allocation5 + $0x144] sm:$0xf]
    %v229 = vld [vmem:[#allocation5 + $0x148] sm:$0xf]
    %v230 = vld [vmem:[#allocation5 + $0x14c] sm:$0xf]
    %v231 = vld [vmem:[#allocation5 + $0x150] sm:$0xf]
    %v232 = vld [vmem:[#allocation5 + $0x154] sm:$0xf]
    %v233 = vld [vmem:[#allocation5 + $0x158] sm:$0xf]
    %v234 = vld [vmem:[#allocation5 + $0x15c] sm:$0xf]
    %v235 = vld [vmem:[#allocation5 + $0x160] sm:$0xf]
    %v236 = vld [vmem:[#allocation5 + $0x164] sm:$0xf]
    %v237 = vld [vmem:[#allocation5 + $0x168] sm:$0xf]
    %v238 = vld [vmem:[#allocation5 + $0x16c] sm:$0xf]
    %v239 = vld [vmem:[#allocation5 + $0x170] sm:$0xf]
    %v240 = vld [vmem:[#allocation5 + $0x174] sm:$0xf]
    %v241 = vld [vmem:[#allocation5 + $0x178] sm:$0xf]
    %v242 = vld [vmem:[#allocation5 + $0x17c] sm:$0xf]
    %v243 = vld [vmem:[#allocation5 + $0x180] sm:$0xf]
    %v244 = vld [vmem:[#allocation5 + $0x184] sm:$0xf]
    %v245 = vld [vmem:[#allocation5 + $0x188] sm:$0xf]
    %v246 = vld [vmem:[#allocation5 + $0x18c] sm:$0xf]
    %v247 = vld [vmem:[#allocation5 + $0x190] sm:$0xf]
    %v248 = vld [vmem:[#allocation5 + $0x194] sm:$0xf]
    %v249 = vld [vmem:[#allocation5 + $0x198] sm:$0xf]
    %v250 = vld [vmem:[#allocation5 + $0x19c] sm:$0xf]
    %v251 = vld [vmem:[#allocation5 + $0x1a0] sm:$0xf]
    %v252 = vld [vmem:[#allocation5 + $0x1a4] sm:$0xf]
    %v253 = vld [vmem:[#allocation5 + $0x1a8] sm:$0xf]
    %v254 = vld [vmem:[#allocation5 + $0x1ac] sm:$0xf]
    %v255 = vld [vmem:[#allocation5 + $0x1b0] sm:$0xf]
    %v256 = vld [vmem:[#allocation5 + $0x1b4] sm:$0xf]
    %v257 = vld [vmem:[#allocation5 + $0x1b8] sm:$0xf]
    %v258 = vld [vmem:[#allocation5 + $0x1bc] sm:$0xf]
    %v259 = vld [vmem:[#allocation5 + $0x1c0] sm:$0xf]
    %v260 = vld [vmem:[#allocation5 + $0x1c4] sm:$0xf]
    %v261 = vld [vmem:[#allocation5 + $0x1c8] sm:$0xf]
    %v262 = vld [vmem:[#allocation5 + $0x1cc] sm:$0xf]
    %v263 = vld [vmem:[#allocation5 + $0x1d0] sm:$0xf]
    %v264 = vld [vmem:[#allocation5 + $0x1d4] sm:$0xf]
    %v265 = vld [vmem:[#allocation5 + $0x1d8] sm:$0xf]
    %v266 = vld [vmem:[#allocation5 + $0x1dc] sm:$0xf]
    %v267 = vld [vmem:[#allocation5 + $0x1e0] sm:$0xf]
    %v268 = vld [vmem:[#allocation5 + $0x1e4] sm:$0xf]
    %v269 = vld [vmem:[#allocation5 + $0x1e8] sm:$0xf]
    %v270 = vld [vmem:[#allocation5 + $0x1ec] sm:$0xf]
    %v271 = vld [vmem:[#allocation5 + $0x1f0] sm:$0xf]
    %v272 = vld [vmem:[#allocation5 + $0x1f4] sm:$0xf]
    %v273 = vld [vmem:[#allocation5 + $0x1f8] sm:$0xf]
    %v274 = vld [vmem:[#allocation5 + $0x1fc] sm:$0xf]
    %v275 = vld [vmem:[#allocation5 + $0x200] sm:$0xf]
    %v276 = vld [vmem:[#allocation5 + $0x204] sm:$0xf]
    %v277 = vld [vmem:[#allocation5 + $0x208] sm:$0xf]
    %v278 = vld [vmem:[#allocation5 + $0x20c] sm:$0xf]
    %v279 = vld [vmem:[#allocation5 + $0x210] sm:$0xf]
    %v280 = vld [vmem:[#allocation5 + $0x214] sm:$0xf]
    %v281 = vld [vmem:[#allocation5 + $0x218] sm:$0xf]
    %v282 = vld [vmem:[#allocation5 + $0x21c] sm:$0xf]
    %v283 = vld [vmem:[#allocation5 + $0x220] sm:$0xf]
    %v284 = vld [vmem:[#allocation5 + $0x224] sm:$0xf]
    %v285 = vld [vmem:[#allocation5 + $0x228] sm:$0xf]
    %v286 = vld [vmem:[#allocation5 + $0x22c] sm:$0xf]
    %v287 = vld [vmem:[#allocation5 + $0x230] sm:$0xf]
    %v288 = vld [vmem:[#allocation5 + $0x234] sm:$0xf]
    %v289 = vld [vmem:[#allocation5 + $0x238] sm:$0xf]
    %v290 = vld [vmem:[#allocation5 + $0x23c] sm:$0xf]
    %v291 = vld [vmem:[#allocation5 + $0x240] sm:$0xf]
    %v292 = vld [vmem:[#allocation5 + $0x244] sm:$0xf]
    %v293 = vld [vmem:[#allocation5 + $0x248] sm:$0xf]
    %v294 = vld [vmem:[#allocation5 + $0x24c] sm:$0xf]
    %v295 = vld [vmem:[#allocation5 + $0x250] sm:$0xf]
    %v296 = vld [vmem:[#allocation5 + $0x254] sm:$0xf]
    %v297 = vld [vmem:[#allocation5 + $0x258] sm:$0xf]
    %v298 = vld [vmem:[#allocation5 + $0x25c] sm:$0xf]
    %v299 = vld [vmem:[#allocation5 + $0x260] sm:$0xf]
    %v300 = vld [vmem:[#allocation5 + $0x264] sm:$0xf]
    %v301 = vld [vmem:[#allocation5 + $0x268] sm:$0xf]
    %v302 = vld [vmem:[#allocation5 + $0x26c] sm:$0xf]
    %v303 = vld [vmem:[#allocation5 + $0x270] sm:$0xf]
    %v304 = vld [vmem:[#allocation5 + $0x274] sm:$0xf]
    %v305 = vld [vmem:[#allocation5 + $0x278] sm:$0xf]
    %v306 = vld [vmem:[#allocation5 + $0x27c] sm:$0xf]
    %v307 = vld [vmem:[#allocation5 + $0x280] sm:$0xf]
    %v308 = vld [vmem:[#allocation5 + $0x284] sm:$0xf]
    %v309 = vld [vmem:[#allocation5 + $0x288] sm:$0xf]
    %v310 = vld [vmem:[#allocation5 + $0x28c] sm:$0xf]
    %v311 = vld [vmem:[#allocation5 + $0x290] sm:$0xf]
    %v312 = vld [vmem:[#allocation5 + $0x294] sm:$0xf]
    %v313 = vld [vmem:[#allocation5 + $0x298] sm:$0xf]
    %v314 = vld [vmem:[#allocation5 + $0x29c] sm:$0xf]
    %v315 = vld [vmem:[#allocation5 + $0x2a0] sm:$0xf]
    %v316 = vld [vmem:[#allocation5 + $0x2a4] sm:$0xf]
    %v317 = vld [vmem:[#allocation5 + $0x2a8] sm:$0xf]
    %v318 = vld [vmem:[#allocation5 + $0x2ac] sm:$0xf]
    %v319 = vld [vmem:[#allocation5 + $0x2b0] sm:$0xf]
    %v320 = vld [vmem:[#allocation5 + $0x2b4] sm:$0xf]
    %v321 = vld [vmem:[#allocation5 + $0x2b8] sm:$0xf]
    %v322 = vld [vmem:[#allocation5 + $0x2bc] sm:$0xf]
    %v323 = vld [vmem:[#allocation5 + $0x2c0] sm:$0xf]
    %v324 = vld [vmem:[#allocation5 + $0x2c4] sm:$0xf]
    %v325 = vld [vmem:[#allocation5 + $0x2c8] sm:$0xf]
    %v326 = vld [vmem:[#allocation5 + $0x2cc] sm:$0xf]
    %v327 = vld [vmem:[#allocation5 + $0x2d0] sm:$0xf]
    %v328 = vld [vmem:[#allocation5 + $0x2d4] sm:$0xf]
    %v329 = vld [vmem:[#allocation5 + $0x2d8] sm:$0xf]
    %v330 = vld [vmem:[#allocation5 + $0x2dc] sm:$0xf]
    %v331 = vld [vmem:[#allocation5 + $0x2e0] sm:$0xf]
    %v332 = vld [vmem:[#allocation5 + $0x2e4] sm:$0xf]
    %v333 = vld [vmem:[#allocation5 + $0x2e8] sm:$0xf]
    %v334 = vld [vmem:[#allocation5 + $0x2ec] sm:$0xf]
    %v335 = vld [vmem:[#allocation5 + $0x2f0] sm:$0xf]
    %v336 = vld [vmem:[#allocation5 + $0x2f4] sm:$0xf]
    %v337 = vld [vmem:[#allocation5 + $0x2f8] sm:$0xf]
    %v338 = vld [vmem:[#allocation5 + $0x2fc] sm:$0xf]
    %v339 = vld [vmem:[#allocation5 + $0x300] sm:$0xf]
    %v340 = vld [vmem:[#allocation5 + $0x304] sm:$0xf]
    %v341 = vld [vmem:[#allocation5 + $0x308] sm:$0xf]
    %v342 = vld [vmem:[#allocation5 + $0x30c] sm:$0xf]
    %v343 = vld [vmem:[#allocation5 + $0x310] sm:$0xf]
    %v344 = vld [vmem:[#allocation5 + $0x314] sm:$0xf]
    %v345 = vld [vmem:[#allocation5 + $0x318] sm:$0xf]
    %v346 = vld [vmem:[#allocation5 + $0x31c] sm:$0xf]
    %v347 = vld [vmem:[#allocation5 + $0x320] sm:$0xf]
    %v348 = vld [vmem:[#allocation5 + $0x324] sm:$0xf]
    %v349 = vld [vmem:[#allocation5 + $0x328] sm:$0xf]
    %v350 = vld [vmem:[#allocation5 + $0x32c] sm:$0xf]
    %v351 = vld [vmem:[#allocation5 + $0x330] sm:$0xf]
    %v352 = vld [vmem:[#allocation5 + $0x334] sm:$0xf]
    %v353 = vld [vmem:[#allocation5 + $0x338] sm:$0xf]
    %v354 = vld [vmem:[#allocation5 + $0x33c] sm:$0xf]
    %v355 = vld [vmem:[#allocation5 + $0x340] sm:$0xf]
    %v356 = vld [vmem:[#allocation5 + $0x344] sm:$0xf]
    %v357 = vld [vmem:[#allocation5 + $0x348] sm:$0xf]
    %v358 = vld [vmem:[#allocation5 + $0x34c] sm:$0xf]
    %v359 = vld [vmem:[#allocation5 + $0x350] sm:$0xf]
    %v360 = vld [vmem:[#allocation5 + $0x354] sm:$0xf]
    %v361 = vld [vmem:[#allocation5 + $0x358] sm:$0xf]
    %v362 = vld [vmem:[#allocation5 + $0x35c] sm:$0xf]
    %v363 = vld [vmem:[#allocation5 + $0x360] sm:$0xf]
    %v364 = vld [vmem:[#allocation5 + $0x364] sm:$0xf]
    %v365 = vld [vmem:[#allocation5 + $0x368] sm:$0xf]
    %v366 = vld [vmem:[#allocation5 + $0x36c] sm:$0xf]
    %v367 = vld [vmem:[#allocation5 + $0x370] sm:$0xf]
    %v368 = vld [vmem:[#allocation5 + $0x374] sm:$0xf]
    %v369 = vld [vmem:[#allocation5 + $0x378] sm:$0xf]
    %v370 = vld [vmem:[#allocation5 + $0x37c] sm:$0xf]
    %v371 = vld [vmem:[#allocation5 + $0x380] sm:$0xf]
    %v372 = vld [vmem:[#allocation5 + $0x384] sm:$0xf]
    %v373 = vld [vmem:[#allocation5 + $0x388] sm:$0xf]
    %v374 = vld [vmem:[#allocation5 + $0x38c] sm:$0xf]
    %v375 = vld [vmem:[#allocation5 + $0x390] sm:$0xf]
    %v376 = vld [vmem:[#allocation5 + $0x394] sm:$0xf]
    %v377 = vld [vmem:[#allocation5 + $0x398] sm:$0xf]
    %v378 = vld [vmem:[#allocation5 + $0x39c] sm:$0xf]
    %v379 = vld [vmem:[#allocation5 + $0x3a0] sm:$0xf]
    %v380 = vld [vmem:[#allocation5 + $0x3a4] sm:$0xf]
    %v381 = vld [vmem:[#allocation5 + $0x3a8] sm:$0xf]
    %v382 = vld [vmem:[#allocation5 + $0x3ac] sm:$0xf]
    %v383 = vld [vmem:[#allocation5 + $0x3b0] sm:$0xf]
    %v384 = vld [vmem:[#allocation5 + $0x3b4] sm:$0xf]
    %v385 = vld [vmem:[#allocation5 + $0x3b8] sm:$0xf]
    %v386 = vld [vmem:[#allocation5 + $0x3bc] sm:$0xf]
    %v387 = vld [vmem:[#allocation5 + $0x3c0] sm:$0xf]
    %v388 = vld [vmem:[#allocation5 + $0x3c4] sm:$0xf]
    %v389 = vld [vmem:[#allocation5 + $0x3c8] sm:$0xf]
    %v390 = vld [vmem:[#allocation5 + $0x3cc] sm:$0xf]
    %v391 = vld [vmem:[#allocation5 + $0x3d0] sm:$0xf]
    %v392 = vld [vmem:[#allocation5 + $0x3d4] sm:$0xf]
    %v393 = vld [vmem:[#allocation5 + $0x3d8] sm:$0xf]
    %v394 = vld [vmem:[#allocation5 + $0x3dc] sm:$0xf]
    %v395 = vld [vmem:[#allocation5 + $0x3e0] sm:$0xf]
    %v396 = vld [vmem:[#allocation5 + $0x3e4] sm:$0xf]
    %v397 = vld [vmem:[#allocation5 + $0x3e8] sm:$0xf]
    %v398 = vld [vmem:[#allocation5 + $0x3ec] sm:$0xf]
    %v399 = vld [vmem:[#allocation5 + $0x3f0] sm:$0xf]
    %v400 = vld [vmem:[#allocation5 + $0x3f4] sm:$0xf]
    %v401 = vld [vmem:[#allocation5 + $0x3f8] sm:$0xf]
    %v402 = vld [vmem:[#allocation5 + $0x3fc] sm:$0xf]
    %v403 = vld [vmem:[#allocation5 + $0x400] sm:$0xf]
    %v404 = vld [vmem:[#allocation5 + $0x404] sm:$0xf]
    %v405 = vld [vmem:[#allocation5 + $0x408] sm:$0xf]
    %v406 = vld [vmem:[#allocation5 + $0x40c] sm:$0xf]
    %v407 = vld [vmem:[#allocation5 + $0x410] sm:$0xf]
    %v408 = vld [vmem:[#allocation5 + $0x414] sm:$0xf]
    %v409 = vld [vmem:[#allocation5 + $0x418] sm:$0xf]
    %v410 = vld [vmem:[#allocation5 + $0x41c] sm:$0xf]
    %v411 = vld [vmem:[#allocation5 + $0x420] sm:$0xf]
    %v412 = vld [vmem:[#allocation5 + $0x424] sm:$0xf]
    %v413 = vld [vmem:[#allocation5 + $0x428] sm:$0xf]
    %v414 = vld [vmem:[#allocation5 + $0x42c] sm:$0xf]
    %v415 = vld [vmem:[#allocation5 + $0x430] sm:$0xf]
    %v416 = vld [vmem:[#allocation5 + $0x434] sm:$0xf]
    %v417 = vld [vmem:[#allocation5 + $0x438] sm:$0xf]
    %v418 = vld [vmem:[#allocation5 + $0x43c] sm:$0xf]
    %v419 = vld [vmem:[#allocation5 + $0x440] sm:$0xf]
    %v420 = vld [vmem:[#allocation5 + $0x444] sm:$0xf]
    %v421 = vld [vmem:[#allocation5 + $0x448] sm:$0xf]
    %v422 = vld [vmem:[#allocation5 + $0x44c] sm:$0xf]
    %v423 = vld [vmem:[#allocation5 + $0x450] sm:$0xf]
    %v424 = vld [vmem:[#allocation5 + $0x454] sm:$0xf]
    %v425 = vld [vmem:[#allocation5 + $0x458] sm:$0xf]
    %v426 = vld [vmem:[#allocation5 + $0x45c] sm:$0xf]
    %v427 = vld [vmem:[#allocation5 + $0x460] sm:$0xf]
    %v428 = vld [vmem:[#allocation5 + $0x464] sm:$0xf]
    %v429 = vld [vmem:[#allocation5 + $0x468] sm:$0xf]
    %v430 = vld [vmem:[#allocation5 + $0x46c] sm:$0xf]
    %v431 = vld [vmem:[#allocation5 + $0x470] sm:$0xf]
    %v432 = vld [vmem:[#allocation5 + $0x474] sm:$0xf]
    %v433 = vld [vmem:[#allocation5 + $0x478] sm:$0xf]
    %v434 = vld [vmem:[#allocation5 + $0x47c] sm:$0xf]
    %v435 = vld [vmem:[#allocation5 + $0x480] sm:$0xf]
    %v436 = vld [vmem:[#allocation5 + $0x484] sm:$0xf]
    %v437 = vld [vmem:[#allocation5 + $0x488] sm:$0xf]
    %v438 = vld [vmem:[#allocation5 + $0x48c] sm:$0xf]
    %v439 = vld [vmem:[#allocation5 + $0x490] sm:$0xf]
    %v440 = vld [vmem:[#allocation5 + $0x494] sm:$0xf]
    %v441 = vld [vmem:[#allocation5 + $0x498] sm:$0xf]
    %v442 = vld [vmem:[#allocation5 + $0x49c] sm:$0xf]
    %v443 = vld [vmem:[#allocation5 + $0x4a0] sm:$0xf]
    %v444 = vld [vmem:[#allocation5 + $0x4a4] sm:$0xf]
    %v445 = vld [vmem:[#allocation5 + $0x4a8] sm:$0xf]
    %v446 = vld [vmem:[#allocation5 + $0x4ac] sm:$0xf]
    %v447 = vld [vmem:[#allocation5 + $0x4b0] sm:$0xf]
    %v448 = vld [vmem:[#allocation5 + $0x4b4] sm:$0xf]
    %v449 = vld [vmem:[#allocation5 + $0x4b8] sm:$0xf]
    %v450 = vld [vmem:[#allocation5 + $0x4bc] sm:$0xf]
    %v451 = vld [vmem:[%s2] sm:$0x1]
    %v453 = vperm.slane %v451, 0
    %v759 = vunpack.c.l.b16 %v147
    %v760 = vunpack.c.l.b16 %v148
    %v761 = vunpack.c.l.b16 %v149
    %v762 = vunpack.c.l.b16 %v150
    %v763 = vunpack.c.l.b16 %v151
    %v764 = vunpack.c.l.b16 %v152
    %v765 = vunpack.c.l.b16 %v153
    %v766 = vunpack.c.l.b16 %v154
    %v767 = vunpack.c.l.b16 %v155
    %v768 = vunpack.c.l.b16 %v156
    %v769 = vunpack.c.l.b16 %v157
    %v770 = vunpack.c.l.b16 %v158
    %v771 = vunpack.c.l.b16 %v159
    %v772 = vunpack.c.l.b16 %v160
    %v773 = vunpack.c.l.b16 %v161
    %v774 = vunpack.c.l.b16 %v162
    %v775 = vunpack.c.l.b16 %v163
    %v776 = vunpack.c.l.b16 %v164
    %v777 = vunpack.c.l.b16 %v165
    %v778 = vunpack.c.l.b16 %v166
    %v779 = vunpack.c.l.b16 %v167
    %v780 = vunpack.c.l.b16 %v168
    %v781 = vunpack.c.l.b16 %v169
    %v782 = vunpack.c.l.b16 %v170
    %v783 = vunpack.c.l.b16 %v171
    %v784 = vunpack.c.l.b16 %v172
    %v785 = vunpack.c.l.b16 %v173
    %v786 = vunpack.c.l.b16 %v174
    %v787 = vunpack.c.l.b16 %v175
    %v788 = vunpack.c.l.b16 %v176
    %v789 = vunpack.c.l.b16 %v177
    %v790 = vunpack.c.l.b16 %v178
    %v791 = vunpack.c.l.b16 %v179
    %v792 = vunpack.c.l.b16 %v180
    %v793 = vunpack.c.l.b16 %v181
    %v794 = vunpack.c.l.b16 %v182
    %v795 = vunpack.c.l.b16 %v183
    %v796 = vunpack.c.l.b16 %v184
    %v797 = vunpack.c.l.b16 %v185
    %v798 = vunpack.c.l.b16 %v186
    %v799 = vunpack.c.l.b16 %v187
    %v800 = vunpack.c.l.b16 %v188
    %v801 = vunpack.c.l.b16 %v189
    %v802 = vunpack.c.l.b16 %v190
    %v803 = vunpack.c.l.b16 %v191
    %v804 = vunpack.c.l.b16 %v192
    %v805 = vunpack.c.l.b16 %v193
    %v806 = vunpack.c.l.b16 %v194
    %v807 = vunpack.c.l.b16 %v195
    %v808 = vunpack.c.l.b16 %v196
    %v809 = vunpack.c.l.b16 %v197
    %v810 = vunpack.c.l.b16 %v198
    %v811 = vunpack.c.l.b16 %v199
    %v812 = vunpack.c.l.b16 %v200
    %v813 = vunpack.c.l.b16 %v201
    %v814 = vunpack.c.l.b16 %v202
    %v815 = vunpack.c.l.b16 %v203
    %v816 = vunpack.c.l.b16 %v204
    %v817 = vunpack.c.l.b16 %v205
    %v818 = vunpack.c.l.b16 %v206
    %v819 = vunpack.c.l.b16 %v207
    %v820 = vunpack.c.l.b16 %v208
    %v821 = vunpack.c.l.b16 %v209
    %v822 = vunpack.c.l.b16 %v210
    %v823 = vunpack.c.l.b16 %v211
    %v824 = vunpack.c.l.b16 %v212
    %v825 = vunpack.c.l.b16 %v213
    %v826 = vunpack.c.l.b16 %v214
    %v827 = vunpack.c.l.b16 %v215
    %v828 = vunpack.c.l.b16 %v216
    %v829 = vunpack.c.l.b16 %v217
    %v830 = vunpack.c.l.b16 %v218
    %v831 = vunpack.c.l.b16 %v219
    %v832 = vunpack.c.l.b16 %v220
    %v833 = vunpack.c.l.b16 %v221
    %v834 = vunpack.c.l.b16 %v222
    %v835 = vunpack.c.l.b16 %v223
    %v836 = vunpack.c.l.b16 %v224
    %v837 = vunpack.c.l.b16 %v225
    %v838 = vunpack.c.l.b16 %v226
    %v839 = vunpack.c.l.b16 %v227
    %v840 = vunpack.c.l.b16 %v228
    %v841 = vunpack.c.l.b16 %v229
    %v842 = vunpack.c.l.b16 %v230
    %v843 = vunpack.c.l.b16 %v231
    %v844 = vunpack.c.l.b16 %v232
    %v845 = vunpack.c.l.b16 %v233
    %v846 = vunpack.c.l.b16 %v234
    %v847 = vunpack.c.l.b16 %v235
    %v848 = vunpack.c.l.b16 %v236
    %v849 = vunpack.c.l.b16 %v237
    %v850 = vunpack.c.l.b16 %v238
    %v851 = vunpack.c.l.b16 %v239
    %v852 = vunpack.c.l.b16 %v240
    %v853 = vunpack.c.l.b16 %v241
    %v854 = vunpack.c.l.b16 %v242
    %v855 = vunpack.c.l.b16 %v243
    %v856 = vunpack.c.l.b16 %v244
    %v857 = vunpack.c.l.b16 %v245
    %v858 = vunpack.c.l.b16 %v246
    %v859 = vunpack.c.l.b16 %v247
    %v860 = vunpack.c.l.b16 %v248
    %v861 = vunpack.c.l.b16 %v249
    %v862 = vunpack.c.l.b16 %v250
    %v863 = vunpack.c.l.b16 %v251
    %v864 = vunpack.c.l.b16 %v252
    %v865 = vunpack.c.l.b16 %v253
    %v866 = vunpack.c.l.b16 %v254
    %v867 = vunpack.c.l.b16 %v255
    %v868 = vunpack.c.l.b16 %v256
    %v869 = vunpack.c.l.b16 %v257
    %v870 = vunpack.c.l.b16 %v258
    %v871 = vunpack.c.l.b16 %v259
    %v872 = vunpack.c.l.b16 %v260
    %v873 = vunpack.c.l.b16 %v261
    %v874 = vunpack.c.l.b16 %v262
    %v875 = vunpack.c.l.b16 %v263
    %v876 = vunpack.c.l.b16 %v264
    %v877 = vunpack.c.l.b16 %v265
    %v878 = vunpack.c.l.b16 %v266
    %v879 = vunpack.c.l.b16 %v267
    %v880 = vunpack.c.l.b16 %v268
    %v881 = vunpack.c.l.b16 %v269
    %v882 = vunpack.c.l.b16 %v270
    %v883 = vunpack.c.l.b16 %v271
    %v884 = vunpack.c.l.b16 %v272
    %v885 = vunpack.c.l.b16 %v273
    %v886 = vunpack.c.l.b16 %v274
    %v887 = vunpack.c.l.b16 %v275
    %v888 = vunpack.c.l.b16 %v276
    %v889 = vunpack.c.l.b16 %v277
    %v890 = vunpack.c.l.b16 %v278
    %v891 = vunpack.c.l.b16 %v279
    %v892 = vunpack.c.l.b16 %v280
    %v893 = vunpack.c.l.b16 %v281
    %v894 = vunpack.c.l.b16 %v282
    %v895 = vunpack.c.l.b16 %v283
    %v896 = vunpack.c.l.b16 %v284
    %v897 = vunpack.c.l.b16 %v285
    %v898 = vunpack.c.l.b16 %v286
    %v899 = vunpack.c.l.b16 %v287
    %v900 = vunpack.c.l.b16 %v288
    %v901 = vunpack.c.l.b16 %v289
    %v902 = vunpack.c.l.b16 %v290
    %v903 = vunpack.c.l.b16 %v291
    %v904 = vunpack.c.l.b16 %v292
    %v905 = vunpack.c.l.b16 %v293
    %v906 = vunpack.c.l.b16 %v294
    %v907 = vunpack.c.l.b16 %v295
    %v908 = vunpack.c.l.b16 %v296
    %v909 = vunpack.c.l.b16 %v297
    %v910 = vunpack.c.l.b16 %v298
    %v911 = vunpack.c.l.b16 %v299
    %v912 = vunpack.c.l.b16 %v300
    %v913 = vunpack.c.l.b16 %v301
    %v914 = vunpack.c.l.b16 %v302
    %v915 = vunpack.c.l.b16 %v303
    %v916 = vunpack.c.l.b16 %v304
    %v917 = vunpack.c.l.b16 %v305
    %v918 = vunpack.c.l.b16 %v306
    %v919 = vunpack.c.l.b16 %v307
    %v920 = vunpack.c.l.b16 %v308
    %v921 = vunpack.c.l.b16 %v309
    %v922 = vunpack.c.l.b16 %v310
    %v923 = vunpack.c.l.b16 %v311
    %v924 = vunpack.c.l.b16 %v312
    %v925 = vunpack.c.l.b16 %v313
    %v926 = vunpack.c.l.b16 %v314
    %v927 = vunpack.c.l.b16 %v315
    %v928 = vunpack.c.l.b16 %v316
    %v929 = vunpack.c.l.b16 %v317
    %v930 = vunpack.c.l.b16 %v318
    %v931 = vunpack.c.l.b16 %v319
    %v932 = vunpack.c.l.b16 %v320
    %v933 = vunpack.c.l.b16 %v321
    %v934 = vunpack.c.l.b16 %v322
    %v935 = vunpack.c.l.b16 %v323
    %v936 = vunpack.c.l.b16 %v324
    %v937 = vunpack.c.l.b16 %v325
    %v938 = vunpack.c.l.b16 %v326
    %v939 = vunpack.c.l.b16 %v327
    %v940 = vunpack.c.l.b16 %v328
    %v941 = vunpack.c.l.b16 %v329
    %v942 = vunpack.c.l.b16 %v330
    %v943 = vunpack.c.l.b16 %v331
    %v944 = vunpack.c.l.b16 %v332
    %v945 = vunpack.c.l.b16 %v333
    %v946 = vunpack.c.l.b16 %v334
    %v947 = vunpack.c.l.b16 %v335
    %v948 = vunpack.c.l.b16 %v336
    %v949 = vunpack.c.l.b16 %v337
    %v950 = vunpack.c.l.b16 %v338
    %v951 = vunpack.c.l.b16 %v339
    %v952 = vunpack.c.l.b16 %v340
    %v953 = vunpack.c.l.b16 %v341
    %v954 = vunpack.c.l.b16 %v342
    %v955 = vunpack.c.l.b16 %v343
    %v956 = vunpack.c.l.b16 %v344
    %v957 = vunpack.c.l.b16 %v345
    %v958 = vunpack.c.l.b16 %v346
    %v959 = vunpack.c.l.b16 %v347
    %v960 = vunpack.c.l.b16 %v348
    %v961 = vunpack.c.l.b16 %v349
    %v962 = vunpack.c.l.b16 %v350
    %v963 = vunpack.c.l.b16 %v351
    %v964 = vunpack.c.l.b16 %v352
    %v965 = vunpack.c.l.b16 %v353
    %v966 = vunpack.c.l.b16 %v354
    %v967 = vunpack.c.l.b16 %v355
    %v968 = vunpack.c.l.b16 %v356
    %v969 = vunpack.c.l.b16 %v357
    %v970 = vunpack.c.l.b16 %v358
    %v971 = vunpack.c.l.b16 %v359
    %v972 = vunpack.c.l.b16 %v360
    %v973 = vunpack.c.l.b16 %v361
    %v974 = vunpack.c.l.b16 %v362
    %v975 = vunpack.c.l.b16 %v363
    %v976 = vunpack.c.l.b16 %v364
    %v977 = vunpack.c.l.b16 %v365
    %v978 = vunpack.c.l.b16 %v366
    %v979 = vunpack.c.l.b16 %v367
    %v980 = vunpack.c.l.b16 %v368
    %v981 = vunpack.c.l.b16 %v369
    %v982 = vunpack.c.l.b16 %v370
    %v983 = vunpack.c.l.b16 %v371
    %v984 = vunpack.c.l.b16 %v372
    %v985 = vunpack.c.l.b16 %v373
    %v986 = vunpack.c.l.b16 %v374
    %v987 = vunpack.c.l.b16 %v375
    %v988 = vunpack.c.l.b16 %v376
    %v989 = vunpack.c.l.b16 %v377
    %v990 = vunpack.c.l.b16 %v378
    %v991 = vunpack.c.l.b16 %v379
    %v992 = vunpack.c.l.b16 %v380
    %v993 = vunpack.c.l.b16 %v381
    %v994 = vunpack.c.l.b16 %v382
    %v995 = vunpack.c.l.b16 %v383
    %v996 = vunpack.c.l.b16 %v384
    %v997 = vunpack.c.l.b16 %v385
    %v998 = vunpack.c.l.b16 %v386
    %v999 = vunpack.c.l.b16 %v387
    %v1000 = vunpack.c.l.b16 %v388
    %v1001 = vunpack.c.l.b16 %v389
    %v1002 = vunpack.c.l.b16 %v390
    %v1003 = vunpack.c.l.b16 %v391
    %v1004 = vunpack.c.l.b16 %v392
    %v1005 = vunpack.c.l.b16 %v393
    %v1006 = vunpack.c.l.b16 %v394
    %v1007 = vunpack.c.l.b16 %v395
    %v1008 = vunpack.c.l.b16 %v396
    %v1009 = vunpack.c.l.b16 %v397
    %v1010 = vunpack.c.l.b16 %v398
    %v1011 = vunpack.c.l.b16 %v399
    %v1012 = vunpack.c.l.b16 %v400
    %v1013 = vunpack.c.l.b16 %v401
    %v1014 = vunpack.c.l.b16 %v402
    %v1015 = vunpack.c.l.b16 %v403
    %v1016 = vunpack.c.l.b16 %v404
    %v1017 = vunpack.c.l.b16 %v405
    %v1018 = vunpack.c.l.b16 %v406
    %v1019 = vunpack.c.l.b16 %v407
    %v1020 = vunpack.c.l.b16 %v408
    %v1021 = vunpack.c.l.b16 %v409
    %v1022 = vunpack.c.l.b16 %v410
    %v1023 = vunpack.c.l.b16 %v411
    %v1024 = vunpack.c.l.b16 %v412
    %v1025 = vunpack.c.l.b16 %v413
    %v1026 = vunpack.c.l.b16 %v414
    %v1027 = vunpack.c.l.b16 %v415
    %v1028 = vunpack.c.l.b16 %v416
    %v1029 = vunpack.c.l.b16 %v417
    %v1030 = vunpack.c.l.b16 %v418
    %v1031 = vunpack.c.l.b16 %v419
    %v1032 = vunpack.c.l.b16 %v420
    %v1033 = vunpack.c.l.b16 %v421
    %v1034 = vunpack.c.l.b16 %v422
    %v1035 = vunpack.c.l.b16 %v423
    %v1036 = vunpack.c.l.b16 %v424
    %v1037 = vunpack.c.l.b16 %v425
    %v1038 = vunpack.c.l.b16 %v426
    %v1039 = vunpack.c.l.b16 %v427
    %v1040 = vunpack.c.l.b16 %v428
    %v1041 = vunpack.c.l.b16 %v429
    %v1042 = vunpack.c.l.b16 %v430
    %v1043 = vunpack.c.l.b16 %v431
    %v1044 = vunpack.c.l.b16 %v432
    %v1045 = vunpack.c.l.b16 %v433
    %v1046 = vunpack.c.l.b16 %v434
    %v1047 = vunpack.c.l.b16 %v435
    %v1048 = vunpack.c.l.b16 %v436
    %v1049 = vunpack.c.l.b16 %v437
    %v1050 = vunpack.c.l.b16 %v438
    %v1051 = vunpack.c.l.b16 %v439
    %v1052 = vunpack.c.l.b16 %v440
    %v1053 = vunpack.c.l.b16 %v441
    %v1054 = vunpack.c.l.b16 %v442
    %v1055 = vunpack.c.l.b16 %v443
    %v1056 = vunpack.c.l.b16 %v444
    %v1057 = vunpack.c.l.b16 %v445
    %v1058 = vunpack.c.l.b16 %v446
    %v1059 = vunpack.c.l.b16 %v447
    %v1060 = vunpack.c.l.b16 %v448
    %v1061 = vunpack.c.l.b16 %v449
    %v1062 = vunpack.c.l.b16 %v450
    %v1063 = vpack.c.b16 %v760, %v759
    %v1064 = vpack.c.b16 %v762, %v761
    %v1065 = vpack.c.b16 %v764, %v763
    %v1066 = vpack.c.b16 %v766, %v765
    %v1067 = vpack.c.b16 %v768, %v767
    %v1068 = vpack.c.b16 %v770, %v769
    %v1069 = vpack.c.b16 %v772, %v771
    %v1070 = vpack.c.b16 %v774, %v773
    %v1071 = vpack.c.b16 %v776, %v775
    %v1072 = vpack.c.b16 %v778, %v777
    %v1073 = vpack.c.b16 %v780, %v779
    %v1074 = vpack.c.b16 %v782, %v781
    %v1075 = vpack.c.b16 %v784, %v783
    %v1076 = vpack.c.b16 %v786, %v785
    %v1077 = vpack.c.b16 %v788, %v787
    %v1078 = vpack.c.b16 %v790, %v789
    %v1079 = vpack.c.b16 %v792, %v791
    %v1080 = vpack.c.b16 %v794, %v793
    %v1081 = vpack.c.b16 %v796, %v795
    %v1082 = vpack.c.b16 %v798, %v797
    %v1083 = vpack.c.b16 %v800, %v799
    %v1084 = vpack.c.b16 %v802, %v801
    %v1085 = vpack.c.b16 %v804, %v803
    %v1086 = vpack.c.b16 %v806, %v805
    %v1087 = vpack.c.b16 %v808, %v807
    %v1088 = vpack.c.b16 %v810, %v809
    %v1089 = vpack.c.b16 %v812, %v811
    %v1090 = vpack.c.b16 %v814, %v813
    %v1091 = vpack.c.b16 %v816, %v815
    %v1092 = vpack.c.b16 %v818, %v817
    %v1093 = vpack.c.b16 %v820, %v819
    %v1094 = vpack.c.b16 %v822, %v821
    %v1095 = vpack.c.b16 %v824, %v823
    %v1096 = vpack.c.b16 %v826, %v825
    %v1097 = vpack.c.b16 %v828, %v827
    %v1098 = vpack.c.b16 %v830, %v829
    %v1099 = vpack.c.b16 %v832, %v831
    %v1100 = vpack.c.b16 %v834, %v833
    %v1101 = vpack.c.b16 %v836, %v835
    %v1102 = vpack.c.b16 %v838, %v837
    %v1103 = vpack.c.b16 %v840, %v839
    %v1104 = vpack.c.b16 %v842, %v841
    %v1105 = vpack.c.b16 %v844, %v843
    %v1106 = vpack.c.b16 %v846, %v845
    %v1107 = vpack.c.b16 %v848, %v847
    %v1108 = vpack.c.b16 %v850, %v849
    %v1109 = vpack.c.b16 %v852, %v851
    %v1110 = vpack.c.b16 %v854, %v853
    %v1111 = vpack.c.b16 %v856, %v855
    %v1112 = vpack.c.b16 %v858, %v857
    %v1113 = vpack.c.b16 %v860, %v859
    %v1114 = vpack.c.b16 %v862, %v861
    %v1115 = vpack.c.b16 %v864, %v863
    %v1116 = vpack.c.b16 %v866, %v865
    %v1117 = vpack.c.b16 %v868, %v867
    %v1118 = vpack.c.b16 %v870, %v869
    %v1119 = vpack.c.b16 %v872, %v871
    %v1120 = vpack.c.b16 %v874, %v873
    %v1121 = vpack.c.b16 %v876, %v875
    %v1122 = vpack.c.b16 %v878, %v877
    %v1123 = vpack.c.b16 %v880, %v879
    %v1124 = vpack.c.b16 %v882, %v881
    %v1125 = vpack.c.b16 %v884, %v883
    %v1126 = vpack.c.b16 %v886, %v885
    %v1127 = vpack.c.b16 %v888, %v887
    %v1128 = vpack.c.b16 %v890, %v889
    %v1129 = vpack.c.b16 %v892, %v891
    %v1130 = vpack.c.b16 %v894, %v893
    %v1131 = vpack.c.b16 %v896, %v895
    %v1132 = vpack.c.b16 %v898, %v897
    %v1133 = vpack.c.b16 %v900, %v899
    %v1134 = vpack.c.b16 %v902, %v901
    %v1135 = vpack.c.b16 %v904, %v903
    %v1136 = vpack.c.b16 %v906, %v905
    %v1137 = vpack.c.b16 %v908, %v907
    %v1138 = vpack.c.b16 %v910, %v909
    %v1139 = vpack.c.b16 %v912, %v911
    %v1140 = vpack.c.b16 %v914, %v913
    %v1141 = vpack.c.b16 %v916, %v915
    %v1142 = vpack.c.b16 %v918, %v917
    %v1143 = vpack.c.b16 %v920, %v919
    %v1144 = vpack.c.b16 %v922, %v921
    %v1145 = vpack.c.b16 %v924, %v923
    %v1146 = vpack.c.b16 %v926, %v925
    %v1147 = vpack.c.b16 %v928, %v927
    %v1148 = vpack.c.b16 %v930, %v929
    %v1149 = vpack.c.b16 %v932, %v931
    %v1150 = vpack.c.b16 %v934, %v933
    %v1151 = vpack.c.b16 %v936, %v935
    %v1152 = vpack.c.b16 %v938, %v937
    %v1153 = vpack.c.b16 %v940, %v939
    %v1154 = vpack.c.b16 %v942, %v941
    %v1155 = vpack.c.b16 %v944, %v943
    %v1156 = vpack.c.b16 %v946, %v945
    %v1157 = vpack.c.b16 %v948, %v947
    %v1158 = vpack.c.b16 %v950, %v949
    %v1159 = vpack.c.b16 %v952, %v951
    %v1160 = vpack.c.b16 %v954, %v953
    %v1161 = vpack.c.b16 %v956, %v955
    %v1162 = vpack.c.b16 %v958, %v957
    %v1163 = vpack.c.b16 %v960, %v959
    %v1164 = vpack.c.b16 %v962, %v961
    %v1165 = vpack.c.b16 %v964, %v963
    %v1166 = vpack.c.b16 %v966, %v965
    %v1167 = vpack.c.b16 %v968, %v967
    %v1168 = vpack.c.b16 %v970, %v969
    %v1169 = vpack.c.b16 %v972, %v971
    %v1170 = vpack.c.b16 %v974, %v973
    %v1171 = vpack.c.b16 %v976, %v975
    %v1172 = vpack.c.b16 %v978, %v977
    %v1173 = vpack.c.b16 %v980, %v979
    %v1174 = vpack.c.b16 %v982, %v981
    %v1175 = vpack.c.b16 %v984, %v983
    %v1176 = vpack.c.b16 %v986, %v985
    %v1177 = vpack.c.b16 %v988, %v987
    %v1178 = vpack.c.b16 %v990, %v989
    %v1179 = vpack.c.b16 %v992, %v991
    %v1180 = vpack.c.b16 %v994, %v993
    %v1181 = vpack.c.b16 %v996, %v995
    %v1182 = vpack.c.b16 %v998, %v997
    %v1183 = vpack.c.b16 %v1000, %v999
    %v1184 = vpack.c.b16 %v1002, %v1001
    %v1185 = vpack.c.b16 %v1004, %v1003
    %v1186 = vpack.c.b16 %v1006, %v1005
    %v1187 = vpack.c.b16 %v1008, %v1007
    %v1188 = vpack.c.b16 %v1010, %v1009
    %v1189 = vpack.c.b16 %v1012, %v1011
    %v1190 = vpack.c.b16 %v1014, %v1013
    %v1191 = vpack.c.b16 %v1016, %v1015
    %v1192 = vpack.c.b16 %v1018, %v1017
    %v1193 = vpack.c.b16 %v1020, %v1019
    %v1194 = vpack.c.b16 %v1022, %v1021
    %v1195 = vpack.c.b16 %v1024, %v1023
    %v1196 = vpack.c.b16 %v1026, %v1025
    %v1197 = vpack.c.b16 %v1028, %v1027
    %v1198 = vpack.c.b16 %v1030, %v1029
    %v1199 = vpack.c.b16 %v1032, %v1031
    %v1200 = vpack.c.b16 %v1034, %v1033
    %v1201 = vpack.c.b16 %v1036, %v1035
    %v1202 = vpack.c.b16 %v1038, %v1037
    %v1203 = vpack.c.b16 %v1040, %v1039
    %v1204 = vpack.c.b16 %v1042, %v1041
    %v1205 = vpack.c.b16 %v1044, %v1043
    %v1206 = vpack.c.b16 %v1046, %v1045
    %v1207 = vpack.c.b16 %v1048, %v1047
    %v1208 = vpack.c.b16 %v1050, %v1049
    %v1209 = vpack.c.b16 %v1052, %v1051
    %v1210 = vpack.c.b16 %v1054, %v1053
    %v1211 = vpack.c.b16 %v1056, %v1055
    %v1212 = vpack.c.b16 %v1058, %v1057
    %v1213 = vpack.c.b16 %v1060, %v1059
    %v1214 = vpack.c.b16 %v1062, %v1061
    %1367 = vmatpush.bf16.msra.mxu0 %v1070
    %1368 = vmatpush.bf16.msra.mxu0 %v1069
    %1369 = vmatpush.bf16.msra.mxu0 %v1068
    %1370 = vmatpush.bf16.msra.mxu0 %v1067
    %1371 = vmatpush.bf16.msra.mxu0 %v1066
    %1372 = vmatpush.bf16.msra.mxu0 %v1065
    %1373 = vmatpush.bf16.msra.mxu0 %v1064
    %1374 = vmatpush.bf16.msra.mxu0 %v1063
    %1375 = vmatmul.bf16.gmra.mxu0 %v128
    %v1376 = vpop.f32.mrf.mxu0
    %v1377 = vadd.f32 %v453, %v1376
    %v1378 = vpop.f32.mrf.mxu0
    %1379 = vdwg.mxu0
    %1380 = vmatpush.bf16.msra.mxu0 %v1078
    %1381 = vmatpush.bf16.msra.mxu0 %v1077
    %1382 = vmatpush.bf16.msra.mxu0 %v1076
    %1383 = vmatpush.bf16.msra.mxu0 %v1075
    %1384 = vmatpush.bf16.msra.mxu0 %v1074
    %1385 = vmatpush.bf16.msra.mxu0 %v1073
    %1386 = vmatpush.bf16.msra.mxu0 %v1072
    %1387 = vmatpush.bf16.msra.mxu0 %v1071
    %1388 = vmatmul.bf16.gmra.mxu0 %v129
    %v1389 = vpop.f32.mrf.mxu0
    %v1390 = vadd.f32 %v1377, %v1389
    %v1391 = vpop.f32.mrf.mxu0
    %1392 = vdwg.mxu0
    %1393 = vmatpush.bf16.msra.mxu0 %v1086
    %1394 = vmatpush.bf16.msra.mxu0 %v1085
    %1395 = vmatpush.bf16.msra.mxu0 %v1084
    %1396 = vmatpush.bf16.msra.mxu0 %v1083
    %1397 = vmatpush.bf16.msra.mxu0 %v1082
    %1398 = vmatpush.bf16.msra.mxu0 %v1081
    %1399 = vmatpush.bf16.msra.mxu0 %v1080
    %1400 = vmatpush.bf16.msra.mxu0 %v1079
    %1401 = vmatmul.bf16.gmra.mxu0 %v130
    %v1402 = vpop.f32.mrf.mxu0
    %v1403 = vadd.f32 %v1390, %v1402
    %v1404 = vpop.f32.mrf.mxu0
    %1405 = vdwg.mxu0
    %1406 = vmatpush.bf16.msra.mxu0 %v1094
    %1407 = vmatpush.bf16.msra.mxu0 %v1093
    %1408 = vmatpush.bf16.msra.mxu0 %v1092
    %1409 = vmatpush.bf16.msra.mxu0 %v1091
    %1410 = vmatpush.bf16.msra.mxu0 %v1090
    %1411 = vmatpush.bf16.msra.mxu0 %v1089
    %1412 = vmatpush.bf16.msra.mxu0 %v1088
    %1413 = vmatpush.bf16.msra.mxu0 %v1087
    %1414 = vmatmul.bf16.gmra.mxu0 %v131
    %v1415 = vpop.f32.mrf.mxu0
    %v1416 = vadd.f32 %v1403, %v1415
    %v1417 = vpop.f32.mrf.mxu0
    %1418 = vdwg.mxu0
    %1419 = vmatpush.bf16.msra.mxu0 %v1102
    %1420 = vmatpush.bf16.msra.mxu0 %v1101
    %1421 = vmatpush.bf16.msra.mxu0 %v1100
    %1422 = vmatpush.bf16.msra.mxu0 %v1099
    %1423 = vmatpush.bf16.msra.mxu0 %v1098
    %1424 = vmatpush.bf16.msra.mxu0 %v1097
    %1425 = vmatpush.bf16.msra.mxu0 %v1096
    %1426 = vmatpush.bf16.msra.mxu0 %v1095
    %1427 = vmatmul.bf16.gmra.mxu0 %v132
    %v1428 = vpop.f32.mrf.mxu0
    %v1429 = vadd.f32 %v1416, %v1428
    %v1430 = vpop.f32.mrf.mxu0
    %1431 = vdwg.mxu0
    %1432 = vmatpush.bf16.msra.mxu0 %v1110
    %1433 = vmatpush.bf16.msra.mxu0 %v1109
    %1434 = vmatpush.bf16.msra.mxu0 %v1108
    %1435 = vmatpush.bf16.msra.mxu0 %v1107
    %1436 = vmatpush.bf16.msra.mxu0 %v1106
    %1437 = vmatpush.bf16.msra.mxu0 %v1105
    %1438 = vmatpush.bf16.msra.mxu0 %v1104
    %1439 = vmatpush.bf16.msra.mxu0 %v1103
    %1440 = vmatmul.bf16.gmra.mxu0 %v133
    %v1441 = vpop.f32.mrf.mxu0
    %v1442 = vadd.f32 %v1429, %v1441
    %v1443 = vpop.f32.mrf.mxu0
    %1444 = vdwg.mxu0
    %1445 = vmatpush.bf16.msra.mxu0 %v1118
    %1446 = vmatpush.bf16.msra.mxu0 %v1117
    %1447 = vmatpush.bf16.msra.mxu0 %v1116
    %1448 = vmatpush.bf16.msra.mxu0 %v1115
    %1449 = vmatpush.bf16.msra.mxu0 %v1114
    %1450 = vmatpush.bf16.msra.mxu0 %v1113
    %1451 = vmatpush.bf16.msra.mxu0 %v1112
    %1452 = vmatpush.bf16.msra.mxu0 %v1111
    %1453 = vmatmul.bf16.gmra.mxu0 %v134
    %v1454 = vpop.f32.mrf.mxu0
    %v1455 = vadd.f32 %v1442, %v1454
    %v1456 = vpop.f32.mrf.mxu0
    %1457 = vdwg.mxu0
    %1458 = vmatpush.bf16.msra.mxu0 %v1126
    %1459 = vmatpush.bf16.msra.mxu0 %v1125
    %1460 = vmatpush.bf16.msra.mxu0 %v1124
    %1461 = vmatpush.bf16.msra.mxu0 %v1123
    %1462 = vmatpush.bf16.msra.mxu0 %v1122
    %1463 = vmatpush.bf16.msra.mxu0 %v1121
    %1464 = vmatpush.bf16.msra.mxu0 %v1120
    %1465 = vmatpush.bf16.msra.mxu0 %v1119
    %1466 = vmatmul.bf16.gmra.mxu0 %v135
    %v1467 = vpop.f32.mrf.mxu0
    %v1468 = vadd.f32 %v1455, %v1467
    %v1469 = vpop.f32.mrf.mxu0
    %1470 = vdwg.mxu0
    %1471 = vmatpush.bf16.msra.mxu0 %v1134
    %1472 = vmatpush.bf16.msra.mxu0 %v1133
    %1473 = vmatpush.bf16.msra.mxu0 %v1132
    %1474 = vmatpush.bf16.msra.mxu0 %v1131
    %1475 = vmatpush.bf16.msra.mxu0 %v1130
    %1476 = vmatpush.bf16.msra.mxu0 %v1129
    %1477 = vmatpush.bf16.msra.mxu0 %v1128
    %1478 = vmatpush.bf16.msra.mxu0 %v1127
    %1479 = vmatmul.bf16.gmra.mxu0 %v136
    %v1480 = vpop.f32.mrf.mxu0
    %v1481 = vadd.f32 %v1468, %v1480
    %v1482 = vpop.f32.mrf.mxu0
    %1483 = vdwg.mxu0
    %1484 = vmatpush.bf16.msra.mxu0 %v1142
    %1485 = vmatpush.bf16.msra.mxu0 %v1141
    %1486 = vmatpush.bf16.msra.mxu0 %v1140
    %1487 = vmatpush.bf16.msra.mxu0 %v1139
    %1488 = vmatpush.bf16.msra.mxu0 %v1138
    %1489 = vmatpush.bf16.msra.mxu0 %v1137
    %1490 = vmatpush.bf16.msra.mxu0 %v1136
    %1491 = vmatpush.bf16.msra.mxu0 %v1135
    %1492 = vmatmul.bf16.gmra.mxu0 %v137
    %v1493 = vpop.f32.mrf.mxu0
    %v1494 = vadd.f32 %v1481, %v1493
    %v1495 = vpop.f32.mrf.mxu0
    %1496 = vdwg.mxu0
    %1497 = vmatpush.bf16.msra.mxu0 %v1150
    %1498 = vmatpush.bf16.msra.mxu0 %v1149
    %1499 = vmatpush.bf16.msra.mxu0 %v1148
    %1500 = vmatpush.bf16.msra.mxu0 %v1147
    %1501 = vmatpush.bf16.msra.mxu0 %v1146
    %1502 = vmatpush.bf16.msra.mxu0 %v1145
    %1503 = vmatpush.bf16.msra.mxu0 %v1144
    %1504 = vmatpush.bf16.msra.mxu0 %v1143
    %1505 = vmatmul.bf16.gmra.mxu0 %v138
    %v1506 = vpop.f32.mrf.mxu0
    %v1507 = vadd.f32 %v1494, %v1506
    %v1508 = vpop.f32.mrf.mxu0
    %1509 = vdwg.mxu0
    %1510 = vmatpush.bf16.msra.mxu0 %v1158
    %1511 = vmatpush.bf16.msra.mxu0 %v1157
    %1512 = vmatpush.bf16.msra.mxu0 %v1156
    %1513 = vmatpush.bf16.msra.mxu0 %v1155
    %1514 = vmatpush.bf16.msra.mxu0 %v1154
    %1515 = vmatpush.bf16.msra.mxu0 %v1153
    %1516 = vmatpush.bf16.msra.mxu0 %v1152
    %1517 = vmatpush.bf16.msra.mxu0 %v1151
    %1518 = vmatmul.bf16.gmra.mxu0 %v139
    %v1519 = vpop.f32.mrf.mxu0
    %v1520 = vadd.f32 %v1507, %v1519
    %v1521 = vpop.f32.mrf.mxu0
    %1522 = vdwg.mxu0
    %1523 = vmatpush.bf16.msra.mxu0 %v1166
    %1524 = vmatpush.bf16.msra.mxu0 %v1165
    %1525 = vmatpush.bf16.msra.mxu0 %v1164
    %1526 = vmatpush.bf16.msra.mxu0 %v1163
    %1527 = vmatpush.bf16.msra.mxu0 %v1162
    %1528 = vmatpush.bf16.msra.mxu0 %v1161
    %1529 = vmatpush.bf16.msra.mxu0 %v1160
    %1530 = vmatpush.bf16.msra.mxu0 %v1159
    %1531 = vmatmul.bf16.gmra.mxu0 %v140
    %v1532 = vpop.f32.mrf.mxu0
    %v1533 = vadd.f32 %v1520, %v1532
    %v1534 = vpop.f32.mrf.mxu0
    %1535 = vdwg.mxu0
    %1536 = vmatpush.bf16.msra.mxu0 %v1174
    %1537 = vmatpush.bf16.msra.mxu0 %v1173
    %1538 = vmatpush.bf16.msra.mxu0 %v1172
    %1539 = vmatpush.bf16.msra.mxu0 %v1171
    %1540 = vmatpush.bf16.msra.mxu0 %v1170
    %1541 = vmatpush.bf16.msra.mxu0 %v1169
    %1542 = vmatpush.bf16.msra.mxu0 %v1168
    %1543 = vmatpush.bf16.msra.mxu0 %v1167
    %1544 = vmatmul.bf16.gmra.mxu0 %v141
    %v1545 = vpop.f32.mrf.mxu0
    %v1546 = vadd.f32 %v1533, %v1545
    %v1547 = vpop.f32.mrf.mxu0
    %1548 = vdwg.mxu0
    %1549 = vmatpush.bf16.msra.mxu0 %v1182
    %1550 = vmatpush.bf16.msra.mxu0 %v1181
    %1551 = vmatpush.bf16.msra.mxu0 %v1180
    %1552 = vmatpush.bf16.msra.mxu0 %v1179
    %1553 = vmatpush.bf16.msra.mxu0 %v1178
    %1554 = vmatpush.bf16.msra.mxu0 %v1177
    %1555 = vmatpush.bf16.msra.mxu0 %v1176
    %1556 = vmatpush.bf16.msra.mxu0 %v1175
    %1557 = vmatmul.bf16.gmra.mxu0 %v142
    %v1558 = vpop.f32.mrf.mxu0
    %v1559 = vadd.f32 %v1546, %v1558
    %v1560 = vpop.f32.mrf.mxu0
    %1561 = vdwg.mxu0
    %1562 = vmatpush.bf16.msra.mxu0 %v1190
    %1563 = vmatpush.bf16.msra.mxu0 %v1189
    %1564 = vmatpush.bf16.msra.mxu0 %v1188
    %1565 = vmatpush.bf16.msra.mxu0 %v1187
    %1566 = vmatpush.bf16.msra.mxu0 %v1186
    %1567 = vmatpush.bf16.msra.mxu0 %v1185
    %1568 = vmatpush.bf16.msra.mxu0 %v1184
    %1569 = vmatpush.bf16.msra.mxu0 %v1183
    %1570 = vmatmul.bf16.gmra.mxu0 %v143
    %v1571 = vpop.f32.mrf.mxu0
    %v1572 = vadd.f32 %v1559, %v1571
    %v1573 = vpop.f32.mrf.mxu0
    %1574 = vdwg.mxu0
    %1575 = vmatpush.bf16.msra.mxu0 %v1198
    %1576 = vmatpush.bf16.msra.mxu0 %v1197
    %1577 = vmatpush.bf16.msra.mxu0 %v1196
    %1578 = vmatpush.bf16.msra.mxu0 %v1195
    %1579 = vmatpush.bf16.msra.mxu0 %v1194
    %1580 = vmatpush.bf16.msra.mxu0 %v1193
    %1581 = vmatpush.bf16.msra.mxu0 %v1192
    %1582 = vmatpush.bf16.msra.mxu0 %v1191
    %1583 = vmatmul.bf16.gmra.mxu0 %v144
    %v1584 = vpop.f32.mrf.mxu0
    %v1585 = vadd.f32 %v1572, %v1584
    %v1586 = vpop.f32.mrf.mxu0
    %1587 = vdwg.mxu0
    %1588 = vmatpush.bf16.msra.mxu0 %v1206
    %1589 = vmatpush.bf16.msra.mxu0 %v1205
    %1590 = vmatpush.bf16.msra.mxu0 %v1204
    %1591 = vmatpush.bf16.msra.mxu0 %v1203
    %1592 = vmatpush.bf16.msra.mxu0 %v1202
    %1593 = vmatpush.bf16.msra.mxu0 %v1201
    %1594 = vmatpush.bf16.msra.mxu0 %v1200
    %1595 = vmatpush.bf16.msra.mxu0 %v1199
    %1596 = vmatmul.bf16.gmra.mxu0 %v145
    %v1597 = vpop.f32.mrf.mxu0
    %v1598 = vadd.f32 %v1585, %v1597
    %v1599 = vpop.f32.mrf.mxu0
    %1600 = vdwg.mxu0
    %1601 = vmatpush.bf16.msra.mxu0 %v1214
    %1602 = vmatpush.bf16.msra.mxu0 %v1213
    %1603 = vmatpush.bf16.msra.mxu0 %v1212
    %1604 = vmatpush.bf16.msra.mxu0 %v1211
    %1605 = vmatpush.bf16.msra.mxu0 %v1210
    %1606 = vmatpush.bf16.msra.mxu0 %v1209
    %1607 = vmatpush.bf16.msra.mxu0 %v1208
    %1608 = vmatpush.bf16.msra.mxu0 %v1207
    %1609 = vmatmul.bf16.gmra.mxu0 %v146
    %v1610 = vpop.f32.mrf.mxu0
    %v1611 = vadd.f32 %v1598, %v1610
    %v1612 = vpop.f32.mrf.mxu0
    %1613 = vdwg.mxu0
    %v1614 = vmax.f32 %v1611, 0.0
    %v1615 = vpack.c.bf16 %v1614, %v1614
    %v1616 = vld [vmem:[#allocation7] sm:$0xf]
    %v1617 = vld [vmem:[#allocation7 + $0x4] sm:$0xf]
    %v1618 = vld [vmem:[#allocation7 + $0x8] sm:$0xf]
    %v1619 = vld [vmem:[#allocation7 + $0xc] sm:$0xf]
    %v1620 = vld [vmem:[#allocation7 + $0x10] sm:$0xf]
    %v1621 = vld [vmem:[#allocation7 + $0x14] sm:$0xf]
    %v1622 = vld [vmem:[#allocation7 + $0x18] sm:$0xf]
    %v1623 = vld [vmem:[#allocation7 + $0x1c] sm:$0xf]
    %v1624 = vld [vmem:[#allocation7 + $0x20] sm:$0xf]
    %v1625 = vld [vmem:[#allocation7 + $0x24] sm:$0xf]
    %v1626 = vld [vmem:[#allocation7 + $0x28] sm:$0xf]
    %v1627 = vld [vmem:[#allocation7 + $0x2c] sm:$0xf]
    %v1628 = vld [vmem:[#allocation7 + $0x30] sm:$0xf]
    %v1629 = vld [vmem:[#allocation7 + $0x34] sm:$0xf]
    %v1630 = vld [vmem:[#allocation7 + $0x38] sm:$0xf]
    %v1631 = vld [vmem:[#allocation7 + $0x3c] sm:$0xf]
    %v1632 = vld [vmem:[%s4] sm:$0x1]
    %v1634 = vperm.slane %v1632, 0
    %v1652 = vunpack.c.l.b16 %v1616
    %v1653 = vunpack.c.l.b16 %v1617
    %v1654 = vunpack.c.l.b16 %v1618
    %v1655 = vunpack.c.l.b16 %v1619
    %v1656 = vunpack.c.l.b16 %v1620
    %v1657 = vunpack.c.l.b16 %v1621
    %v1658 = vunpack.c.l.b16 %v1622
    %v1659 = vunpack.c.l.b16 %v1623
    %v1660 = vunpack.c.l.b16 %v1624
    %v1661 = vunpack.c.l.b16 %v1625
    %v1662 = vunpack.c.l.b16 %v1626
    %v1663 = vunpack.c.l.b16 %v1627
    %v1664 = vunpack.c.l.b16 %v1628
    %v1665 = vunpack.c.l.b16 %v1629
    %v1666 = vunpack.c.l.b16 %v1630
    %v1667 = vunpack.c.l.b16 %v1631
    %v1668 = vpack.c.b16 %v1653, %v1652
    %v1669 = vpack.c.b16 %v1655, %v1654
    %v1670 = vpack.c.b16 %v1657, %v1656
    %v1671 = vpack.c.b16 %v1659, %v1658
    %v1672 = vpack.c.b16 %v1661, %v1660
    %v1673 = vpack.c.b16 %v1663, %v1662
    %v1674 = vpack.c.b16 %v1665, %v1664
    %v1675 = vpack.c.b16 %v1667, %v1666
    %1684 = vmatpush.bf16.msra.mxu0 %v1675
    %1685 = vmatpush.bf16.msra.mxu0 %v1674
    %1686 = vmatpush.bf16.msra.mxu0 %v1673
    %1687 = vmatpush.bf16.msra.mxu0 %v1672
    %1688 = vmatpush.bf16.msra.mxu0 %v1671
    %1689 = vmatpush.bf16.msra.mxu0 %v1670
    %1690 = vmatpush.bf16.msra.mxu0 %v1669
    %1691 = vmatpush.bf16.msra.mxu0 %v1668
    %1692 = vmatmul.bf16.gmra.mxu0 %v1615
    %v1693 = vpop.f32.mrf.mxu0
    %v1694 = vadd.f32 %v1634, %v1693
    %v1695 = vpop.f32.mrf.mxu0
    %1696 = vdwg.mxu0
    %v1697 = vmax.f32 %v1694, 0.0
    %v1698 = vpack.c.bf16 %v1697, %v1697
    %v1699 = vld [vmem:[#allocation8] sm:$0xf]
    %v1700 = vld [vmem:[#allocation8 + $0x4] sm:$0xf]
    %v1701 = vld [vmem:[#allocation8 + $0x8] sm:$0xf]
    %v1702 = vld [vmem:[#allocation8 + $0xc] sm:$0xf]
    %v1703 = vld [vmem:[#allocation8 + $0x10] sm:$0xf]
    %v1704 = vld [vmem:[#allocation8 + $0x14] sm:$0xf]
    %v1705 = vld [vmem:[#allocation8 + $0x18] sm:$0xf]
    %v1706 = vld [vmem:[#allocation8 + $0x1c] sm:$0xf]
    %v1707 = vld [vmem:[#allocation8 + $0x20] sm:$0xf]
    %v1708 = vld [vmem:[#allocation8 + $0x24] sm:$0xf]
    %v1709 = vld [vmem:[#allocation8 + $0x28] sm:$0xf]
    %v1710 = vld [vmem:[#allocation8 + $0x2c] sm:$0xf]
    %v1711 = vld [vmem:[#allocation8 + $0x30] sm:$0xf]
    %v1712 = vld [vmem:[#allocation8 + $0x34] sm:$0xf]
    %v1713 = vld [vmem:[#allocation8 + $0x38] sm:$0xf]
    %v1714 = vld [vmem:[#allocation8 + $0x3c] sm:$0xf]
    %v1715 = vld [vmem:[%s6] sm:$0x1]
    %v1717 = vperm.slane %v1715, 0
    %v1735 = vunpack.c.l.b16 %v1699
    %v1736 = vunpack.c.l.b16 %v1700
    %v1737 = vunpack.c.l.b16 %v1701
    %v1738 = vunpack.c.l.b16 %v1702
    %v1739 = vunpack.c.l.b16 %v1703
    %v1740 = vunpack.c.l.b16 %v1704
    %v1741 = vunpack.c.l.b16 %v1705
    %v1742 = vunpack.c.l.b16 %v1706
    %v1743 = vunpack.c.l.b16 %v1707
    %v1744 = vunpack.c.l.b16 %v1708
    %v1745 = vunpack.c.l.b16 %v1709
    %v1746 = vunpack.c.l.b16 %v1710
    %v1747 = vunpack.c.l.b16 %v1711
    %v1748 = vunpack.c.l.b16 %v1712
    %v1749 = vunpack.c.l.b16 %v1713
    %v1750 = vunpack.c.l.b16 %v1714
    %v1751 = vpack.c.b16 %v1736, %v1735
    %v1752 = vpack.c.b16 %v1738, %v1737
    %v1753 = vpack.c.b16 %v1740, %v1739
    %v1754 = vpack.c.b16 %v1742, %v1741
    %v1755 = vpack.c.b16 %v1744, %v1743
    %v1756 = vpack.c.b16 %v1746, %v1745
    %v1757 = vpack.c.b16 %v1748, %v1747
    %v1758 = vpack.c.b16 %v1750, %v1749
    %1767 = vmatpush.bf16.msra.mxu0 %v1758
    %1768 = vmatpush.bf16.msra.mxu0 %v1757
    %1769 = vmatpush.bf16.msra.mxu0 %v1756
    %1770 = vmatpush.bf16.msra.mxu0 %v1755
    %1771 = vmatpush.bf16.msra.mxu0 %v1754
    %1772 = vmatpush.bf16.msra.mxu0 %v1753
    %1773 = vmatpush.bf16.msra.mxu0 %v1752
    %1774 = vmatpush.bf16.msra.mxu0 %v1751
    %1775 = vmatmul.bf16.gmra.mxu0 %v1698
    %v1776 = vpop.f32.mrf.mxu0
    %v1777 = vadd.f32 %v1717, %v1776
    %v1778 = vpop.f32.mrf.mxu0
    %1779 = vdwg.mxu0
    %v1780 = vmax.f32 %v1777, 0.0
    %v1781 = vpack.c.bf16 %v1780, %v1780
    %v1782 = vld [vmem:[#allocation10] sm:$0xf]
    %v1783 = vld [vmem:[#allocation10 + $0x4] sm:$0xf]
    %v1784 = vld [vmem:[#allocation10 + $0x8] sm:$0xf]
    %v1785 = vld [vmem:[#allocation10 + $0xc] sm:$0xf]
    %v1786 = vld [vmem:[#allocation10 + $0x10] sm:$0xf]
    %v1787 = vld [vmem:[#allocation10 + $0x14] sm:$0xf]
    %v1788 = vld [vmem:[#allocation10 + $0x18] sm:$0xf]
    %v1789 = vld [vmem:[#allocation10 + $0x1c] sm:$0xf]
    %v1790 = vld [vmem:[#allocation10 + $0x20] sm:$0xf]
    %v1791 = vld [vmem:[#allocation10 + $0x24] sm:$0xf]
    %v1792 = vld [vmem:[#allocation10 + $0x28] sm:$0xf]
    %v1793 = vld [vmem:[#allocation10 + $0x2c] sm:$0xf]
    %v1794 = vld [vmem:[#allocation10 + $0x30] sm:$0xf]
    %v1795 = vld [vmem:[#allocation10 + $0x34] sm:$0xf]
    %v1796 = vld [vmem:[#allocation10 + $0x38] sm:$0xf]
    %v1797 = vld [vmem:[#allocation10 + $0x3c] sm:$0xf]
    %v1798 = vld [vmem:[%s8] sm:$0x1]
    %v1800 = vperm.slane %v1798, 0
    %v1818 = vunpack.c.l.b16 %v1782
    %v1819 = vunpack.c.l.b16 %v1783
    %v1820 = vunpack.c.l.b16 %v1784
    %v1821 = vunpack.c.l.b16 %v1785
    %v1822 = vunpack.c.l.b16 %v1786
    %v1823 = vunpack.c.l.b16 %v1787
    %v1824 = vunpack.c.l.b16 %v1788
    %v1825 = vunpack.c.l.b16 %v1789
    %v1826 = vunpack.c.l.b16 %v1790
    %v1827 = vunpack.c.l.b16 %v1791
    %v1828 = vunpack.c.l.b16 %v1792
    %v1829 = vunpack.c.l.b16 %v1793
    %v1830 = vunpack.c.l.b16 %v1794
    %v1831 = vunpack.c.l.b16 %v1795
    %v1832 = vunpack.c.l.b16 %v1796
    %v1833 = vunpack.c.l.b16 %v1797
    %v1834 = vpack.c.b16 %v1819, %v1818
    %v1835 = vpack.c.b16 %v1821, %v1820
    %v1836 = vpack.c.b16 %v1823, %v1822
    %v1837 = vpack.c.b16 %v1825, %v1824
    %v1838 = vpack.c.b16 %v1827, %v1826
    %v1839 = vpack.c.b16 %v1829, %v1828
    %v1840 = vpack.c.b16 %v1831, %v1830
    %v1841 = vpack.c.b16 %v1833, %v1832
    %1850 = vmatpush.bf16.msra.mxu0 %v1841
    %1851 = vmatpush.bf16.msra.mxu0 %v1840
    %1852 = vmatpush.bf16.msra.mxu0 %v1839
    %1853 = vmatpush.bf16.msra.mxu0 %v1838
    %1854 = vmatpush.bf16.msra.mxu0 %v1837
    %1855 = vmatpush.bf16.msra.mxu0 %v1836
    %1856 = vmatpush.bf16.msra.mxu0 %v1835
    %1857 = vmatpush.bf16.msra.mxu0 %v1834
    %1858 = vmatmul.bf16.gmra.mxu0 %v1781
    %v1859 = vpop.f32.mrf.mxu0
    %v1860 = vadd.f32 %v1800, %v1859
    %v1861 = vpop.f32.mrf.mxu0
    %1862 = vdwg.mxu0
    %1863 = vst [vmem:[#allocation11] sm:$0xff] %v1860
    // Predicated region
    $region58: #{tpu_custom_call.1} parent=1 // pred_check
      _
    $region59: #{tpu_custom_call.1} parent=1 // pred_check_branch
      %1865 = sbr.rel (0) target = $region61
    $region60: #{tpu_custom_call.1} parent=1 // pred_region
      %1867 = vsyncadd [#allocation4], 0
      %s1869 = sshll.u32 [#allocation11], 4
      %s1870 = int_to_ptr.vmem [resolvable:$true] %s1869
      %s1871 = sshll.u32 %s9, 4
      %s1872 = int_to_ptr.hbm [resolvable:$true] %s1871
      %1874 = dma.vmem_to_hbm [thread:$0]  %s1870, 128, %s1872, [#allocation4]
    $region61: #{tpu_custom_call.1} parent=1 // pred_fallthru
      _
    // Predicated region
    $region62: #{tpu_custom_call.1} parent=1 // pred_check
      _
    $region63: #{tpu_custom_call.1} parent=1 // pred_check_branch
      %1876 = sbr.rel (0) target = $region65
    $region64: #{tpu_custom_call.1} parent=1 // pred_region
      %1878 = dma.done [#allocation4], 128
    $region65: #{tpu_custom_call.1} parent=1 // pred_fallthru
      _
    %1879 = vsyncpa [#allocation3], 1
    %1880 = vsyncpa [#allocation6], 1
    %1881 = vsyncpa [#allocation9], 1
    %1882 = vsyncpa [#allocation4], 1

</llo_original>
